<compile_context>
chip_gen: v5e
topology: v5e:2x2
jax: 0.10.0
libtpu: 0.0.40
codegen_flags: <defaults>
</compile_context>

<pallas_src>
import functools

import jax
import jax.numpy as jnp
from jax.experimental import pallas as pl
from jax.experimental.pallas import tpu as pltpu


def _fused_head_kernel(*refs, n_tail):
    """Fused classifier head.

    refs = (x_ref, w1_ref, b1_ref, [w_i_ref, b_i_ref]*n_tail, o_ref, acc_ref)

      x_ref : (B, tk)      current K-chunk of the flattened input (pipelined)
      w1_ref: (tk, N1)     current K-tile of the first (big) weight (pipelined)
      b1_ref: (1, N1)      resident bias of layer 1
      tail  : resident small weights/biases of layers 2..N
      o_ref : (B, n_out)   output (written once, at the last K step)
      acc_ref: (B, N1) f32 accumulator scratch
    """
    x_ref, w1_ref, b1_ref = refs[0], refs[1], refs[2]
    tail_refs = refs[3:3 + 2 * n_tail]
    o_ref = refs[3 + 2 * n_tail]
    acc_ref = refs[4 + 2 * n_tail]

    k = pl.program_id(0)

    # Initialize the accumulator with the broadcast layer-1 bias.
    @pl.when(k == 0)
    def _():
        acc_ref[...] = jnp.broadcast_to(b1_ref[...], acc_ref.shape)

    # Accumulate one K-chunk of layer 1: acc += x[:, k*tk:(k+1)*tk] @ W1_tile.
    # x is cast to W1's streaming dtype (bf16) -> single-pass MXU; f32 accum.
    acc_ref[...] += jnp.dot(
        x_ref[...].astype(w1_ref.dtype), w1_ref[...],
        preferred_element_type=jnp.float32,
    )

    # Finalize: ReLU + all tail layers, entirely on-chip.
    @pl.when(k == pl.num_programs(0) - 1)
    def _():
        h = acc_ref[...]
        if n_tail > 0:
            h = jnp.maximum(h, 0.0)  # ReLU after layer 1 (not after the last layer)
        for t in range(n_tail):
            w_ref = tail_refs[2 * t]
            b_ref = tail_refs[2 * t + 1]
            h = jnp.dot(h, w_ref[...], preferred_element_type=jnp.float32) + b_ref[...]
            if t != n_tail - 1:
                h = jnp.maximum(h, 0.0)
        o_ref[...] = h.astype(o_ref.dtype)


def _pick_k_tile(K, n1, itemsize, *, vmem_budget_bytes=8 << 20):
    """Largest 128-aligned divisor of K whose double-buffered, lane-padded
    (tk, n1) W1 tile fits `vmem_budget_bytes`, capped at K//2 so the grid keeps
    >= 2 steps (DMA/compute overlap).  For K=20480, n1=64, bf16 -> tk=10240."""
    n1_padded = -(-n1 // 128) * 128  # last dim pads to 128 lanes in VMEM
    if K % 128 != 0:
        # Odd in_features: single resident tile (no K pipelining).  Guard the
        # footprint instead of silently blowing VMEM (v7x has only 64 MiB).
        assert K * n1_padded * itemsize <= 24 << 20, (
            "in_features is not 128-aligned and a resident W1 would exceed the "
            "VMEM budget; pad in_features to a multiple of 128.")
        return K
    tk_budget = vmem_budget_bytes // (2 * n1_padded * itemsize)
    tk_budget = max(128, (tk_budget // 128) * 128)
    tk_cap = min(tk_budget, max(128, (K // 2 // 128) * 128))
    for tk in range(tk_cap, 0, -128):
        if K % tk == 0:
            return tk
    return K


def fused_classifier_head(x_flat, weights):
    """x_flat: (B, K).  weights: [(W_t (in,out), b (out,)), ...]; the first W_t
    may be pre-cast to bf16 (streaming dtype), everything else stays f32.

    Computes Linear -> ReLU -> ... -> Linear (no ReLU after the last layer) in
    a single pallas_call, tiling only the first layer's contraction dim.
    """
    B, K = x_flat.shape
    w1_t, b1 = weights[0]
    assert w1_t.shape[0] == K
    n1 = w1_t.shape[1]
    n_tail = len(weights) - 1
    n_out = weights[-1][0].shape[1]

    tk = _pick_k_tile(K, n1, w1_t.dtype.itemsize)
    nk = K // tk

    in_specs = [
        pl.BlockSpec((B, tk), lambda k: (0, k)),    # x: K-chunk, pipelined
        pl.BlockSpec((tk, n1), lambda k: (k, 0)),   # W1: contiguous K-tile, pipelined
        pl.BlockSpec((1, n1), lambda k: (0, 0)),    # b1: resident
    ]
    args = [x_flat, w1_t, b1.reshape(1, n1)]
    for w_t, b in weights[1:]:
        fi, fo = w_t.shape
        in_specs.append(pl.BlockSpec((fi, fo), lambda k: (0, 0)))  # resident
        in_specs.append(pl.BlockSpec((1, fo), lambda k: (0, 0)))   # resident
        args.append(w_t)
        args.append(b.reshape(1, fo))

    # Advisory cost (dominated by the W1 stream) so XLA can overlap neighbors.
    flops = 2 * B * K * n1 + sum(
        2 * B * w.shape[0] * w.shape[1] for w, _ in weights[1:])
    bytes_accessed = sum(int(a.size) * a.dtype.itemsize for a in args)
    bytes_accessed += B * n_out * x_flat.dtype.itemsize

    kernel = functools.partial(_fused_head_kernel, n_tail=n_tail)

    return pl.pallas_call(
        kernel,
        out_shape=jax.ShapeDtypeStruct((B, n_out), x_flat.dtype),
        grid_spec=pltpu.PrefetchScalarGridSpec(
            num_scalar_prefetch=0,
            grid=(nk,),
            in_specs=in_specs,
            out_specs=pl.BlockSpec((B, n_out), lambda k: (0, 0)),
            scratch_shapes=[pltpu.VMEM((B, n1), jnp.float32)],
        ),
        compiler_params=pltpu.CompilerParams(
            dimension_semantics=("arbitrary",),  # K is a reduction axis
        ),
        cost_estimate=pl.CostEstimate(
            flops=flops, transcendentals=0, bytes_accessed=bytes_accessed),
    )(*args)


class ClassifierHeadPallas:
    """Mirrors ClassifierHead: Linear stack with ReLU between layers,
    Dropout2d = identity (eval mode), final Linear has no activation."""

    def __init__(self, params, key, in_features=20480, stream_dtype=jnp.bfloat16):
        assert "neurons" in params and "dropouts" in params
        assert len(params["neurons"]) == len(params["dropouts"])
        n_targets = params.get("n_targets", 1)
        neurons = [in_features] + list(params["neurons"]) + [n_targets]
        self.neurons = neurons
        self.weights = []  # f32 master copies: list of (W_t (in,out), b (out,))
        for layer in range(len(neurons) - 1):
            fan_in, fan_out = neurons[layer], neurons[layer + 1]
            key, kw, kb = jax.random.split(key, 3)
            bound = 1.0 / jnp.sqrt(jnp.float32(fan_in))
            w_t = jax.random.uniform(
                kw, (fan_in, fan_out), jnp.float32, -bound, bound)
            b = jax.random.uniform(kb, (fan_out,), jnp.float32, -bound, bound)
            self.weights.append((w_t, b))
        # Cast ONLY the big first-layer weight to the streaming dtype, once, at
        # construction (not per call): halves the HBM-bound W1 stream.
        w1, b1 = self.weights[0]
        self.kernel_weights = [(w1.astype(stream_dtype), b1)] + self.weights[1:]

    def __call__(self, x):
        B = x.shape[0]
        out = x.reshape(B, -1)  # x.view(x.size(0), -1): a free view, no copy
        # Dropout2d: identity at inference.
        return fused_classifier_head(out, self.kernel_weights)


def reference_forward(model, x):
    """Plain-JAX f32 reference for correctness check."""
    out = x.reshape(x.shape[0], -1)
    n_layers = len(model.weights)
    for i, (w_t, b) in enumerate(model.weights):
        out = out @ w_t + b
        if i != n_layers - 1:
            out = jnp.maximum(out, 0.0)
    return out


if __name__ == "__main__":
    key = jax.random.PRNGKey(0)
    k_x, k_p = jax.random.split(key)

    # (B, C, H, W) with C*H*W == 20480, matching the module's hardcoded input dim.
    B, C, H, W = 2, 80, 16, 16
    x = jax.random.normal(k_x, (B, C, H, W), dtype=jnp.float32)

    params = {"neurons": [64, 32], "dropouts": [0.2, 0.2], "n_targets": 1}
    model = ClassifierHeadPallas(params, k_p, in_features=C * H * W)

    out = model(x)
    out = jax.block_until_ready(out)

    ref = reference_forward(model, x)
    assert out.shape == (B, params["n_targets"])
    # bf16 W1 stream (f32 accumulation) -> loosened tolerance vs f32 reference.
    assert jnp.allclose(out, ref, atol=2e-2, rtol=2e-2), "mismatch vs reference"

    print("KERNEL_OK")
</pallas_src>

<mosaic_0001>
module attributes {stable_mosaic.version = 11 : i64} {
  func.func @_fused_head_kernel(%arg0: i32, %arg1: memref<2x10240xf32, #tpu.memory_space<vmem>>, %arg2: memref<10240x64xbf16, #tpu.memory_space<vmem>>, %arg3: memref<1x64xf32, #tpu.memory_space<vmem>>, %arg4: memref<64x32xf32, #tpu.memory_space<vmem>>, %arg5: memref<1x32xf32, #tpu.memory_space<vmem>>, %arg6: memref<32x1xf32, #tpu.memory_space<vmem>>, %arg7: memref<1x1xf32, #tpu.memory_space<vmem>>, %arg8: memref<2x1xf32, #tpu.memory_space<vmem>>, %arg9: memref<2x64xf32, #tpu.memory_space<vmem>>) attributes {dimension_semantics = [#tpu.dimension_semantics<arbitrary>], iteration_bounds = array<i64: 2>, scalar_prefetch = 0 : i64, scratch_operands = 1 : i64, tpu.core_type = #tpu.core_type<tc>, window_params = [{transform_indices = @transform_0, window_bounds = array<i64: 2, 10240>}, {transform_indices = @transform_1, window_bounds = array<i64: 10240, 64>}, {pipeline_mode = #tpu.pipeline_mode<synchronous>, transform_indices = @transform_2, window_bounds = array<i64: 1, 64>}, {pipeline_mode = #tpu.pipeline_mode<synchronous>, transform_indices = @transform_3, window_bounds = array<i64: 64, 32>}, {pipeline_mode = #tpu.pipeline_mode<synchronous>, transform_indices = @transform_4, window_bounds = array<i64: 1, 32>}, {pipeline_mode = #tpu.pipeline_mode<synchronous>, transform_indices = @transform_5, window_bounds = array<i64: 32, 1>}, {pipeline_mode = #tpu.pipeline_mode<synchronous>, transform_indices = @transform_6, window_bounds = array<i64: 1, 1>}, {pipeline_mode = #tpu.pipeline_mode<synchronous>, transform_indices = @transform_7, window_bounds = array<i64: 2, 1>}]} {
    %c0_i32 = arith.constant 0 : i32
    %0 = arith.cmpi eq, %arg0, %c0_i32 : i32
    %1 = arith.extui %0 : i1 to i32
    %c0_i32_0 = arith.constant 0 : i32
    %2 = arith.cmpi ne, %1, %c0_i32_0 : i32
    scf.if %2 {
      %c0_9 = arith.constant 0 : index
      %c0_10 = arith.constant 0 : index
      %13 = vector.load %arg3[%c0_9, %c0_10] : memref<1x64xf32, #tpu.memory_space<vmem>>, vector<1x64xf32>
      %14 = vector.shape_cast %13 : vector<1x64xf32> to vector<1x64xf32>
      %15 = vector.broadcast %14 : vector<1x64xf32> to vector<2x64xf32>
      %c0_11 = arith.constant 0 : index
      %c0_12 = arith.constant 0 : index
      %16 = vector.load %arg9[%c0_11, %c0_12] : memref<2x64xf32, #tpu.memory_space<vmem>>, vector<2x64xf32>
      tpu.vector_store %arg9[%c0_11, %c0_12], %15 {strides = array<i32>} : memref<2x64xf32, #tpu.memory_space<vmem>>, vector<2x64xf32>,
    } else {
    }
    %c0 = arith.constant 0 : index
    %c0_1 = arith.constant 0 : index
    %3 = vector.load %arg9[%c0, %c0_1] : memref<2x64xf32, #tpu.memory_space<vmem>>, vector<2x64xf32>
    %c0_2 = arith.constant 0 : index
    %c0_3 = arith.constant 0 : index
    %4 = vector.load %arg1[%c0_2, %c0_3] : memref<2x10240xf32, #tpu.memory_space<vmem>>, vector<2x10240xf32>
    %5 = arith.truncf %4 : vector<2x10240xf32> to vector<2x10240xbf16>
    %c0_4 = arith.constant 0 : index
    %c0_5 = arith.constant 0 : index
    %6 = vector.load %arg2[%c0_4, %c0_5] : memref<10240x64xbf16, #tpu.memory_space<vmem>>, vector<10240x64xbf16>
    %cst = arith.constant dense<0.000000e+00> : vector<2x64xf32>
    %7 = tpu.matmul %5, %6, %cst {dimension_numbers = #tpu.dot_dimension_numbers<[1], [0], [0], [1], [0, 0, 1, 1], [], []>} : vector<2x10240xbf16>, vector<10240x64xbf16>, vector<2x64xf32> -> vector<2x64xf32>
    %8 = arith.addf %3, %7 : vector<2x64xf32>
    %c0_6 = arith.constant 0 : index
    %c0_7 = arith.constant 0 : index
    %9 = vector.load %arg9[%c0_6, %c0_7] : memref<2x64xf32, #tpu.memory_space<vmem>>, vector<2x64xf32>
    tpu.vector_store %arg9[%c0_6, %c0_7], %8 {strides = array<i32>} : memref<2x64xf32, #tpu.memory_space<vmem>>, vector<2x64xf32>,
    %c1_i32 = arith.constant 1 : i32
    %10 = arith.cmpi eq, %arg0, %c1_i32 : i32
    %11 = arith.extui %10 : i1 to i32
    %c0_i32_8 = arith.constant 0 : i32
    %12 = arith.cmpi ne, %11, %c0_i32_8 : i32
    scf.if %12 {
      %c0_9 = arith.constant 0 : index
      %c0_10 = arith.constant 0 : index
      %13 = vector.load %arg9[%c0_9, %c0_10] : memref<2x64xf32, #tpu.memory_space<vmem>>, vector<2x64xf32>
      %cst_11 = arith.constant 0.000000e+00 : f32
      %14 = vector.broadcast %cst_11 : f32 to vector<2x64xf32>
      %15 = arith.maximumf %13, %14 : vector<2x64xf32>
      %c0_12 = arith.constant 0 : index
      %c0_13 = arith.constant 0 : index
      %16 = vector.load %arg4[%c0_12, %c0_13] : memref<64x32xf32, #tpu.memory_space<vmem>>, vector<64x32xf32>
      %cst_14 = arith.constant dense<0.000000e+00> : vector<2x32xf32>
      %17 = tpu.matmul %15, %16, %cst_14 {dimension_numbers = #tpu.dot_dimension_numbers<[1], [0], [0], [1], [0, 0, 1, 1], [], []>} : vector<2x64xf32>, vector<64x32xf32>, vector<2x32xf32> -> vector<2x32xf32>
      %c0_15 = arith.constant 0 : index
      %c0_16 = arith.constant 0 : index
      %18 = vector.load %arg5[%c0_15, %c0_16] : memref<1x32xf32, #tpu.memory_space<vmem>>, vector<1x32xf32>
      %19 = vector.broadcast %18 : vector<1x32xf32> to vector<2x32xf32>
      %20 = arith.addf %17, %19 : vector<2x32xf32>
      %cst_17 = arith.constant 0.000000e+00 : f32
      %21 = vector.broadcast %cst_17 : f32 to vector<2x32xf32>
      %22 = arith.maximumf %20, %21 : vector<2x32xf32>
      %c0_18 = arith.constant 0 : index
      %c0_19 = arith.constant 0 : index
      %23 = vector.load %arg6[%c0_18, %c0_19] : memref<32x1xf32, #tpu.memory_space<vmem>>, vector<32x1xf32>
      %cst_20 = arith.constant dense<0.000000e+00> : vector<2x1xf32>
      %24 = tpu.matmul %22, %23, %cst_20 {dimension_numbers = #tpu.dot_dimension_numbers<[1], [0], [0], [1], [0, 0, 1, 1], [], []>} : vector<2x32xf32>, vector<32x1xf32>, vector<2x1xf32> -> vector<2x1xf32>
      %c0_21 = arith.constant 0 : index
      %c0_22 = arith.constant 0 : index
      %25 = vector.load %arg7[%c0_21, %c0_22] : memref<1x1xf32, #tpu.memory_space<vmem>>, vector<1x1xf32>
      %26 = vector.broadcast %25 : vector<1x1xf32> to vector<2x1xf32>
      %27 = arith.addf %24, %26 : vector<2x1xf32>
      %c0_23 = arith.constant 0 : index
      %c0_24 = arith.constant 0 : index
      %28 = vector.load %arg8[%c0_23, %c0_24] : memref<2x1xf32, #tpu.memory_space<vmem>>, vector<2x1xf32>
      tpu.vector_store %arg8[%c0_23, %c0_24], %27 {strides = array<i32>} : memref<2x1xf32, #tpu.memory_space<vmem>>, vector<2x1xf32>,
    } else {
    }
    return
  }
  func.func @transform_0(%arg0: i32) -> (i32, i32) {
    %c0_i32 = arith.constant 0 : i32
    %c0_i32_0 = arith.constant 0 : i32
    return %c0_i32, %arg0 : i32, i32
  }
  func.func @transform_1(%arg0: i32) -> (i32, i32) {
    %c0_i32 = arith.constant 0 : i32
    %c0_i32_0 = arith.constant 0 : i32
    return %arg0, %c0_i32 : i32, i32
  }
  func.func @transform_2(%arg0: i32) -> (i32, i32) {
    %c0_i32 = arith.constant 0 : i32
    %c0_i32_0 = arith.constant 0 : i32
    %c0_i32_1 = arith.constant 0 : i32
    return %c0_i32, %c0_i32_0 : i32, i32
  }
  func.func @transform_3(%arg0: i32) -> (i32, i32) {
    %c0_i32 = arith.constant 0 : i32
    %c0_i32_0 = arith.constant 0 : i32
    %c0_i32_1 = arith.constant 0 : i32
    return %c0_i32, %c0_i32_0 : i32, i32
  }
  func.func @transform_4(%arg0: i32) -> (i32, i32) {
    %c0_i32 = arith.constant 0 : i32
    %c0_i32_0 = arith.constant 0 : i32
    %c0_i32_1 = arith.constant 0 : i32
    return %c0_i32, %c0_i32_0 : i32, i32
  }
  func.func @transform_5(%arg0: i32) -> (i32, i32) {
    %c0_i32 = arith.constant 0 : i32
    %c0_i32_0 = arith.constant 0 : i32
    %c0_i32_1 = arith.constant 0 : i32
    return %c0_i32, %c0_i32_0 : i32, i32
  }
  func.func @transform_6(%arg0: i32) -> (i32, i32) {
    %c0_i32 = arith.constant 0 : i32
    %c0_i32_0 = arith.constant 0 : i32
    %c0_i32_1 = arith.constant 0 : i32
    return %c0_i32, %c0_i32_0 : i32, i32
  }
  func.func @transform_7(%arg0: i32) -> (i32, i32) {
    %c0_i32 = arith.constant 0 : i32
    %c0_i32_0 = arith.constant 0 : i32
    %c0_i32_1 = arith.constant 0 : i32
    return %c0_i32, %c0_i32_0 : i32, i32
  }
}

</mosaic_0001>

<llo_original>
// kernel: tpu_custom_call.1
$region0: #{tpu_custom_call.1}
  #allocation0 [shape = 'u32[]', space=smem, size = 0x4, offset = 0x4, fixed_abs, tag = 'smem constant byte address 0x4 - core index']
  #allocation1 [shape = 'u32[72,128]{1,0:T(1,128)}', space=vmem, size = 0x9000, scoped, tag = 'internal scratch']
  #allocation2 [shape = 'f32[2,64]{1,0:T(2,128)}', space=vmem, size = 0x400, scoped, tag = 'scratch operand']
  #allocation3 [shape = 'f32[1,1]{1,0:T(1,128)S(1)}', space=vmem, size = 0x200, scoped, tag = 'scoped memory for tpu_custom_call.1']
  %s0 = inlined_call_operand.vmem [shape: f32[2,20480], index: 0, kind: input, shape index: {}]
  %s1 = inlined_call_operand.vmem [shape: bf16[20480,64], index: 1, kind: input, shape index: {}]
  %s2 = inlined_call_operand.vmem [shape: f32[1,64], index: 2, kind: input, shape index: {}]
  %s3 = inlined_call_operand.vmem [shape: f32[64,32], index: 3, kind: input, shape index: {}]
  %s4 = inlined_call_operand.vmem [shape: f32[1,32], index: 4, kind: input, shape index: {}]
  %s5 = inlined_call_operand.vmem [shape: f32[32,1], index: 5, kind: input, shape index: {}]
  %s6 = inlined_call_operand.<no memory space> [shape: f32[1,1], index: 6, kind: input, shape index: {}]
  %s7 = inlined_call_operand.vmem [shape: f32[2,1], index: 7, kind: output, shape index: {}]
  %s8 = sld [smem:[#allocation0]]
  $region69: #{tpu_custom_call.1} parent=0
    _
  %s10 = ssub.s32 1, %s8
  %s11 = scalar_select 0, %s10, %s8
  %v12 = vstv %s6
  %13 = vst [vmem:[#allocation3] sm:$0x1] %v12
  loop: start=0, step=1, limit=4
  $region2: #{tpu_custom_call.1} parent=0 // loop_pre_header
    _
  $region3: #{tpu_custom_call.1} parent=0 // loop_header
    %s15 = sphi 0, %s19
    %p16 = scmp.ge.s32.totalorder %s15, 4
    %s25 = sphi 0, %s27
    %s28 = sphi 0, %s25
    %s29 = sphi 0, %s28
    %s45 = sphi 0, %s29
    %s51 = sphi 0, %s53
    %s54 = sphi 0, %s51
    %s55 = sphi 0, %s54
    %s71 = sphi 0, %s55
    %s75 = sphi 0, %s75
    %s77 = sphi 0, %s75
    %s78 = sphi 0, %s77
    %s92 = sphi 0, %s78
    %s96 = sphi 0, %s96
    %s98 = sphi 0, %s96
    %s99 = sphi 0, %s98
    %s113 = sphi 0, %s99
    %s117 = sphi 0, %s117
    %s119 = sphi 0, %s117
    %s120 = sphi 0, %s119
    %s134 = sphi 0, %s120
    %s138 = sphi 0, %s138
    %s140 = sphi 0, %s138
    %s141 = sphi 0, %s140
    %s155 = sphi 0, %s141
    %s159 = sphi 0, %s159
    %s161 = sphi 0, %s159
    %s162 = sphi 0, %s161
    %s176 = sphi 0, %s162
    %s180 = sphi 0, %s180
    %s182 = sphi 0, %s180
    %s183 = sphi 0, %s182
    %s197 = sphi 0, %s183
  $region4: #{tpu_custom_call.1} parent=0 // loop_header_branch
    %18 = sbr.rel (%p16) target = $region8
  $region5: #{tpu_custom_call.1} parent=0 // loop_body
    %s20 = ssub.s32 %s15, 1
    %s21 = ssub.s32 %s15, 2
    %s22 = sadd.s32 %s15, 1
    %s23 = ssub.s32 %s15, %s22
    %p24 = scmp.eq.s32.totalorder %s23, 0
    %s26 = sadd.s32 %s25, 1
    %s27 = scalar_select %p24, %s25, %s26
    %p30 = pneg %p24
    %p31 = scmp.eq.s32.totalorder %s15, 1
    %p32 = por %p30, %p31
    %p33 = scmp.ne.s32.totalorder %s25, %s28
    %p34 = scmp.eq.s32.totalorder %s15, 0
    %p35 = por %p33, %p34
    %p36 = scmp.ne.s32.totalorder %s25, %s28
    %p37 = scmp.eq.s32.totalorder %s20, 1
    %p38 = por %p36, %p37
    %p39 = scmp.ne.s32.totalorder %s28, %s29
    %p40 = scmp.eq.s32.totalorder %s20, 0
    %p41 = por %p39, %p40
    %p42 = scmp.ne.s32.totalorder %s28, %s29
    %p43 = scmp.eq.s32.totalorder %s21, 1
    %p44 = por %p42, %p43
    %p46 = scmp.ne.s32.totalorder %s29, %s45
    %p47 = scmp.eq.s32.totalorder %s21, 0
    %p48 = por %p46, %p47
    %s49 = ssub.s32 %s15, %s22
    %p50 = scmp.eq.s32.totalorder %s49, 0
    %s52 = sadd.s32 %s51, 1
    %s53 = scalar_select %p50, %s51, %s52
    %p56 = pneg %p50
    %p57 = scmp.eq.s32.totalorder %s15, 1
    %p58 = por %p56, %p57
    %p59 = scmp.ne.s32.totalorder %s51, %s54
    %p60 = scmp.eq.s32.totalorder %s15, 0
    %p61 = por %p59, %p60
    %p62 = scmp.ne.s32.totalorder %s51, %s54
    %p63 = scmp.eq.s32.totalorder %s20, 1
    %p64 = por %p62, %p63
    %p65 = scmp.ne.s32.totalorder %s54, %s55
    %p66 = scmp.eq.s32.totalorder %s20, 0
    %p67 = por %p65, %p66
    %p68 = scmp.ne.s32.totalorder %s54, %s55
    %p69 = scmp.eq.s32.totalorder %s21, 1
    %p70 = por %p68, %p69
    %p72 = scmp.ne.s32.totalorder %s55, %s71
    %p73 = scmp.eq.s32.totalorder %s21, 0
    %p74 = por %p72, %p73
    %s76 = sadd.s32 %s75, 1
    %p79 = scmp.eq.s32.totalorder %s15, 1
    %p80 = scmp.ne.s32.totalorder %s75, %s77
    %p81 = scmp.eq.s32.totalorder %s15, 0
    %p82 = por %p80, %p81
    %p83 = scmp.ne.s32.totalorder %s75, %s77
    %p84 = scmp.eq.s32.totalorder %s20, 1
    %p85 = por %p83, %p84
    %p86 = scmp.ne.s32.totalorder %s77, %s78
    %p87 = scmp.eq.s32.totalorder %s20, 0
    %p88 = por %p86, %p87
    %p89 = scmp.ne.s32.totalorder %s77, %s78
    %p90 = scmp.eq.s32.totalorder %s21, 1
    %p91 = por %p89, %p90
    %p93 = scmp.ne.s32.totalorder %s78, %s92
    %p94 = scmp.eq.s32.totalorder %s21, 0
    %p95 = por %p93, %p94
    %s97 = sadd.s32 %s96, 1
    %p100 = scmp.eq.s32.totalorder %s15, 1
    %p101 = scmp.ne.s32.totalorder %s96, %s98
    %p102 = scmp.eq.s32.totalorder %s15, 0
    %p103 = por %p101, %p102
    %p104 = scmp.ne.s32.totalorder %s96, %s98
    %p105 = scmp.eq.s32.totalorder %s20, 1
    %p106 = por %p104, %p105
    %p107 = scmp.ne.s32.totalorder %s98, %s99
    %p108 = scmp.eq.s32.totalorder %s20, 0
    %p109 = por %p107, %p108
    %p110 = scmp.ne.s32.totalorder %s98, %s99
    %p111 = scmp.eq.s32.totalorder %s21, 1
    %p112 = por %p110, %p111
    %p114 = scmp.ne.s32.totalorder %s99, %s113
    %p115 = scmp.eq.s32.totalorder %s21, 0
    %p116 = por %p114, %p115
    %s118 = sadd.s32 %s117, 1
    %p121 = scmp.eq.s32.totalorder %s15, 1
    %p122 = scmp.ne.s32.totalorder %s117, %s119
    %p123 = scmp.eq.s32.totalorder %s15, 0
    %p124 = por %p122, %p123
    %p125 = scmp.ne.s32.totalorder %s117, %s119
    %p126 = scmp.eq.s32.totalorder %s20, 1
    %p127 = por %p125, %p126
    %p128 = scmp.ne.s32.totalorder %s119, %s120
    %p129 = scmp.eq.s32.totalorder %s20, 0
    %p130 = por %p128, %p129
    %p131 = scmp.ne.s32.totalorder %s119, %s120
    %p132 = scmp.eq.s32.totalorder %s21, 1
    %p133 = por %p131, %p132
    %p135 = scmp.ne.s32.totalorder %s120, %s134
    %p136 = scmp.eq.s32.totalorder %s21, 0
    %p137 = por %p135, %p136
    %s139 = sadd.s32 %s138, 1
    %p142 = scmp.eq.s32.totalorder %s15, 1
    %p143 = scmp.ne.s32.totalorder %s138, %s140
    %p144 = scmp.eq.s32.totalorder %s15, 0
    %p145 = por %p143, %p144
    %p146 = scmp.ne.s32.totalorder %s138, %s140
    %p147 = scmp.eq.s32.totalorder %s20, 1
    %p148 = por %p146, %p147
    %p149 = scmp.ne.s32.totalorder %s140, %s141
    %p150 = scmp.eq.s32.totalorder %s20, 0
    %p151 = por %p149, %p150
    %p152 = scmp.ne.s32.totalorder %s140, %s141
    %p153 = scmp.eq.s32.totalorder %s21, 1
    %p154 = por %p152, %p153
    %p156 = scmp.ne.s32.totalorder %s141, %s155
    %p157 = scmp.eq.s32.totalorder %s21, 0
    %p158 = por %p156, %p157
    %s160 = sadd.s32 %s159, 1
    %p163 = scmp.eq.s32.totalorder %s15, 1
    %p164 = scmp.ne.s32.totalorder %s159, %s161
    %p165 = scmp.eq.s32.totalorder %s15, 0
    %p166 = por %p164, %p165
    %p167 = scmp.ne.s32.totalorder %s159, %s161
    %p168 = scmp.eq.s32.totalorder %s20, 1
    %p169 = por %p167, %p168
    %p170 = scmp.ne.s32.totalorder %s161, %s162
    %p171 = scmp.eq.s32.totalorder %s20, 0
    %p172 = por %p170, %p171
    %p173 = scmp.ne.s32.totalorder %s161, %s162
    %p174 = scmp.eq.s32.totalorder %s21, 1
    %p175 = por %p173, %p174
    %p177 = scmp.ne.s32.totalorder %s162, %s176
    %p178 = scmp.eq.s32.totalorder %s21, 0
    %p179 = por %p177, %p178
    %s181 = sadd.s32 %s180, 1
    %p184 = scmp.eq.s32.totalorder %s15, 1
    %p185 = scmp.ne.s32.totalorder %s180, %s182
    %p186 = scmp.eq.s32.totalorder %s15, 0
    %p187 = por %p185, %p186
    %p188 = scmp.ne.s32.totalorder %s180, %s182
    %p189 = scmp.eq.s32.totalorder %s20, 1
    %p190 = por %p188, %p189
    %p191 = scmp.ne.s32.totalorder %s182, %s183
    %p192 = scmp.eq.s32.totalorder %s20, 0
    %p193 = por %p191, %p192
    %p194 = scmp.ne.s32.totalorder %s182, %s183
    %p195 = scmp.eq.s32.totalorder %s21, 1
    %p196 = por %p194, %p195
    %p198 = scmp.ne.s32.totalorder %s183, %s197
    %p199 = scmp.eq.s32.totalorder %s21, 0
    %p200 = por %p198, %p199
    %p201 = scmp.le.s32.totalorder 1, %s15
    %p202 = scmp.lt.s32.totalorder %s15, 3
    %p203 = pnand %p201, %p202
    %p204 = pneg %p203
    // Predicated region
    $region9: #{tpu_custom_call.1} parent=5 // pred_check
      _
    $region10: #{tpu_custom_call.1} parent=5 // pred_check_branch
      %206 = sbr.rel (%p203) target = $region12
    $region11: #{tpu_custom_call.1} parent=5 // pred_region
      %s207 = ssub.s32 %s15, 1
      // Predicated region
      $region13: #{tpu_custom_call.1} parent=11 // pred_check
        %p208 = pneg %p88
      $region14: #{tpu_custom_call.1} parent=11 // pred_check_branch
        %210 = sbr.rel (%p208) target = $region16
      $region15: #{tpu_custom_call.1} parent=11 // pred_region
        _
      $region16: #{tpu_custom_call.1} parent=11 // pred_fallthru
        _
      // Predicated region
      $region17: #{tpu_custom_call.1} parent=11 // pred_check
        %p211 = pneg %p109
      $region18: #{tpu_custom_call.1} parent=11 // pred_check_branch
        %213 = sbr.rel (%p211) target = $region20
      $region19: #{tpu_custom_call.1} parent=11 // pred_region
        _
      $region20: #{tpu_custom_call.1} parent=11 // pred_fallthru
        _
      // Predicated region
      $region21: #{tpu_custom_call.1} parent=11 // pred_check
        %p214 = pneg %p130
      $region22: #{tpu_custom_call.1} parent=11 // pred_check_branch
        %216 = sbr.rel (%p214) target = $region24
      $region23: #{tpu_custom_call.1} parent=11 // pred_region
        _
      $region24: #{tpu_custom_call.1} parent=11 // pred_fallthru
        _
      // Predicated region
      $region25: #{tpu_custom_call.1} parent=11 // pred_check
        %p217 = pneg %p151
      $region26: #{tpu_custom_call.1} parent=11 // pred_check_branch
        %219 = sbr.rel (%p217) target = $region28
      $region27: #{tpu_custom_call.1} parent=11 // pred_region
        _
      $region28: #{tpu_custom_call.1} parent=11 // pred_fallthru
        _
      // Predicated region
      $region29: #{tpu_custom_call.1} parent=11 // pred_check
        %p220 = pneg %p172
      $region30: #{tpu_custom_call.1} parent=11 // pred_check_branch
        %222 = sbr.rel (%p220) target = $region32
      $region31: #{tpu_custom_call.1} parent=11 // pred_region
        _
      $region32: #{tpu_custom_call.1} parent=11 // pred_fallthru
        _
    $region12: #{tpu_custom_call.1} parent=5 // pred_fallthru
      _
    %p223 = scmp.lt.s32.totalorder %s15, 2
    // Predicated region
    $region33: #{tpu_custom_call.1} parent=5 // pred_check
      %p224 = pneg %p223
    $region34: #{tpu_custom_call.1} parent=5 // pred_check_branch
      %226 = sbr.rel (%p224) target = $region36
    $region35: #{tpu_custom_call.1} parent=5 // pred_region
      // Predicated region
      $region37: #{tpu_custom_call.1} parent=35 // pred_check
        %p227 = pneg %p35
      $region38: #{tpu_custom_call.1} parent=35 // pred_check_branch
        %229 = sbr.rel (%p227) target = $region40
      $region39: #{tpu_custom_call.1} parent=35 // pred_region
        %s230 = smul.u32 80, %s15
        %p231 = scmp.lt.s32.totalorder %s230, 159
        %s232 = scalar_select %p231, %s230, 159
        %s233 = smul.addr %s232, 2
        %s234 = scalar_lea.vmem %s0, %s233
        %s235 = smul.u32 80, %s15
      $region40: #{tpu_custom_call.1} parent=35 // pred_fallthru
        _
      // Predicated region
      $region41: #{tpu_custom_call.1} parent=35 // pred_check
        %p236 = pneg %p61
      $region42: #{tpu_custom_call.1} parent=35 // pred_check_branch
        %238 = sbr.rel (%p236) target = $region44
      $region43: #{tpu_custom_call.1} parent=35 // pred_region
        %s239 = smul.u32 1280, %s15
        %p240 = scmp.lt.s32.totalorder %s239, 2559
        %s241 = scalar_select %p240, %s239, 2559
        %s242 = smul.addr %s241, 4
        %s243 = scalar_lea.vmem %s1, %s242
        %s244 = smul.u32 1280, %s15
      $region44: #{tpu_custom_call.1} parent=35 // pred_fallthru
        _
    $region36: #{tpu_custom_call.1} parent=5 // pred_fallthru
      _
    %p245 = scmp.le.s32.totalorder 1, %s15
    %p246 = scmp.lt.s32.totalorder %s15, 3
    %p247 = pnand %p245, %p246
    %p248 = pneg %p247
    // Predicated region
    $region45: #{tpu_custom_call.1} parent=5 // pred_check
      _
    $region46: #{tpu_custom_call.1} parent=5 // pred_check_branch
      %250 = sbr.rel (%p247) target = $region48
    $region47: #{tpu_custom_call.1} parent=5 // pred_region
      %s251 = ssub.s32 %s15, 1
      %s252 = smul.u32 80, %s20
      %p253 = scmp.lt.s32.totalorder %s252, 159
      %s254 = scalar_select %p253, %s252, 159
      %s255 = smul.addr %s254, 2
      %s256 = scalar_lea.vmem %s0, %s255
      %p257 = pneg %p41
      %p258 = pneg %p38
      %s259 = smul.u32 1280, %s20
      %p260 = scmp.lt.s32.totalorder %s259, 2559
      %s261 = scalar_select %p260, %s259, 2559
      %s262 = smul.addr %s261, 4
      %s263 = scalar_lea.vmem %s1, %s262
      %p264 = pneg %p67
      %p265 = pneg %p64
      %p266 = pneg %p88
      %p267 = pneg %p85
      %p268 = pneg %p109
      %p269 = pneg %p106
      %p270 = pneg %p130
      %p271 = pneg %p127
      %p272 = pneg %p151
      %p273 = pneg %p148
      %p274 = pneg %p172
      %p275 = pneg %p169
      %p276 = pneg %p193
      %p277 = pneg %p190
      %s278 = smul.u32 80, %s20
      %p279 = scmp.lt.s32.totalorder %s278, 159
      %s280 = scalar_select %p279, %s278, 159
      %s281 = smul.addr %s280, 2
      %s282 = scalar_lea.vmem %s0, %s281
      %s283 = smul.u32 80, %s20
      %s284 = smul.u32 1280, %s20
      %p285 = scmp.lt.s32.totalorder %s284, 2559
      %s286 = scalar_select %p285, %s284, 2559
      %s287 = smul.addr %s286, 4
      %s288 = scalar_lea.vmem %s1, %s287
      %s289 = smul.u32 1280, %s20
      %p290 = scmp.eq.s32.totalorder %s20, 0
      // Predicated region
      $region49: #{tpu_custom_call.1} parent=47 // pred_check
        %p291 = pneg %p290
      $region50: #{tpu_custom_call.1} parent=47 // pred_check_branch
        %293 = sbr.rel (%p291) target = $region52
      $region51: #{tpu_custom_call.1} parent=47 // pred_region
        %v294 = vld [vmem:[%s2] sm:$0x1]
        %v296 = vperm.slane %v294, 0
        %vm298 = vcmask 517120
        %299 = vst.msk [vmem:[#allocation2] sm:$0x3] %vm298, %v296
      $region52: #{tpu_custom_call.1} parent=47 // pred_fallthru
        _
      %v300 = vld [vmem:[#allocation2] sm:$0x3]
      %v301 = vld [vmem:[%s282] sm:$0xff]
      %v302 = vld [vmem:[%s282 + $0x8] sm:$0xff]
      %v303 = vld [vmem:[%s282 + $0x10] sm:$0xff]
      %v304 = vld [vmem:[%s282 + $0x18] sm:$0xff]
      %v305 = vld [vmem:[%s282 + $0x20] sm:$0xff]
      %v306 = vld [vmem:[%s282 + $0x28] sm:$0xff]
      %v307 = vld [vmem:[%s282 + $0x30] sm:$0xff]
      %v308 = vld [vmem:[%s282 + $0x38] sm:$0xff]
      %v309 = vld [vmem:[%s282 + $0x40] sm:$0xff]
      %v310 = vld [vmem:[%s282 + $0x48] sm:$0xff]
      %v311 = vld [vmem:[%s282 + $0x50] sm:$0xff]
      %v312 = vld [vmem:[%s282 + $0x58] sm:$0xff]
      %v313 = vld [vmem:[%s282 + $0x60] sm:$0xff]
      %v314 = vld [vmem:[%s282 + $0x68] sm:$0xff]
      %v315 = vld [vmem:[%s282 + $0x70] sm:$0xff]
      %v316 = vld [vmem:[%s282 + $0x78] sm:$0xff]
      %v317 = vld [vmem:[%s282 + $0x80] sm:$0xff]
      %v318 = vld [vmem:[%s282 + $0x88] sm:$0xff]
      %v319 = vld [vmem:[%s282 + $0x90] sm:$0xff]
      %v320 = vld [vmem:[%s282 + $0x98] sm:$0xff]
      %341 = vst [vmem:[#allocation1] ss:$4 sm:$0xff] %v301
      %s342 = scalar_lea.vmem [#allocation1], 32
      %343 = vst [vmem:[%s342] ss:$4 sm:$0xff] %v302
      %v344 = vld.sshfl [vmem:[#allocation1] sm:$0xff pattern:$0x73625140]
      %v345 = vld.sshfl [vmem:[#allocation1 + $0x8] sm:$0xff pattern:$0x73625140]
      %v346 = vld.sshfl [vmem:[#allocation1 + $0x10] sm:$0xff pattern:$0x73625140]
      %v347 = vld.sshfl [vmem:[#allocation1 + $0x18] sm:$0xff pattern:$0x73625140]
      %v348 = vld.sshfl [vmem:[#allocation1 + $0x20] sm:$0xff pattern:$0x73625140]
      %v349 = vld.sshfl [vmem:[#allocation1 + $0x28] sm:$0xff pattern:$0x73625140]
      %v350 = vld.sshfl [vmem:[#allocation1 + $0x30] sm:$0xff pattern:$0x73625140]
      %v351 = vld.sshfl [vmem:[#allocation1 + $0x38] sm:$0xff pattern:$0x73625140]
      %352 = vst [vmem:[#allocation1] ss:$4 sm:$0xff] %v303
      %353 = vst [vmem:[%s342] ss:$4 sm:$0xff] %v304
      %v354 = vld.sshfl [vmem:[#allocation1] sm:$0xff pattern:$0x73625140]
      %v355 = vld.sshfl [vmem:[#allocation1 + $0x8] sm:$0xff pattern:$0x73625140]
      %v356 = vld.sshfl [vmem:[#allocation1 + $0x10] sm:$0xff pattern:$0x73625140]
      %v357 = vld.sshfl [vmem:[#allocation1 + $0x18] sm:$0xff pattern:$0x73625140]
      %v358 = vld.sshfl [vmem:[#allocation1 + $0x20] sm:$0xff pattern:$0x73625140]
      %v359 = vld.sshfl [vmem:[#allocation1 + $0x28] sm:$0xff pattern:$0x73625140]
      %v360 = vld.sshfl [vmem:[#allocation1 + $0x30] sm:$0xff pattern:$0x73625140]
      %v361 = vld.sshfl [vmem:[#allocation1 + $0x38] sm:$0xff pattern:$0x73625140]
      %362 = vst [vmem:[#allocation1] ss:$4 sm:$0xff] %v305
      %363 = vst [vmem:[%s342] ss:$4 sm:$0xff] %v306
      %v364 = vld.sshfl [vmem:[#allocation1] sm:$0xff pattern:$0x73625140]
      %v365 = vld.sshfl [vmem:[#allocation1 + $0x8] sm:$0xff pattern:$0x73625140]
      %v366 = vld.sshfl [vmem:[#allocation1 + $0x10] sm:$0xff pattern:$0x73625140]
      %v367 = vld.sshfl [vmem:[#allocation1 + $0x18] sm:$0xff pattern:$0x73625140]
      %v368 = vld.sshfl [vmem:[#allocation1 + $0x20] sm:$0xff pattern:$0x73625140]
      %v369 = vld.sshfl [vmem:[#allocation1 + $0x28] sm:$0xff pattern:$0x73625140]
      %v370 = vld.sshfl [vmem:[#allocation1 + $0x30] sm:$0xff pattern:$0x73625140]
      %v371 = vld.sshfl [vmem:[#allocation1 + $0x38] sm:$0xff pattern:$0x73625140]
      %372 = vst [vmem:[#allocation1] ss:$4 sm:$0xff] %v307
      %373 = vst [vmem:[%s342] ss:$4 sm:$0xff] %v308
      %v374 = vld.sshfl [vmem:[#allocation1] sm:$0xff pattern:$0x73625140]
      %v375 = vld.sshfl [vmem:[#allocation1 + $0x8] sm:$0xff pattern:$0x73625140]
      %v376 = vld.sshfl [vmem:[#allocation1 + $0x10] sm:$0xff pattern:$0x73625140]
      %v377 = vld.sshfl [vmem:[#allocation1 + $0x18] sm:$0xff pattern:$0x73625140]
      %v378 = vld.sshfl [vmem:[#allocation1 + $0x20] sm:$0xff pattern:$0x73625140]
      %v379 = vld.sshfl [vmem:[#allocation1 + $0x28] sm:$0xff pattern:$0x73625140]
      %v380 = vld.sshfl [vmem:[#allocation1 + $0x30] sm:$0xff pattern:$0x73625140]
      %v381 = vld.sshfl [vmem:[#allocation1 + $0x38] sm:$0xff pattern:$0x73625140]
      %382 = vst [vmem:[#allocation1] ss:$4 sm:$0xff] %v309
      %383 = vst [vmem:[%s342] ss:$4 sm:$0xff] %v310
      %v384 = vld.sshfl [vmem:[#allocation1] sm:$0xff pattern:$0x73625140]
      %v385 = vld.sshfl [vmem:[#allocation1 + $0x8] sm:$0xff pattern:$0x73625140]
      %v386 = vld.sshfl [vmem:[#allocation1 + $0x10] sm:$0xff pattern:$0x73625140]
      %v387 = vld.sshfl [vmem:[#allocation1 + $0x18] sm:$0xff pattern:$0x73625140]
      %v388 = vld.sshfl [vmem:[#allocation1 + $0x20] sm:$0xff pattern:$0x73625140]
      %v389 = vld.sshfl [vmem:[#allocation1 + $0x28] sm:$0xff pattern:$0x73625140]
      %v390 = vld.sshfl [vmem:[#allocation1 + $0x30] sm:$0xff pattern:$0x73625140]
      %v391 = vld.sshfl [vmem:[#allocation1 + $0x38] sm:$0xff pattern:$0x73625140]
      %392 = vst [vmem:[#allocation1] ss:$4 sm:$0xff] %v311
      %393 = vst [vmem:[%s342] ss:$4 sm:$0xff] %v312
      %v394 = vld.sshfl [vmem:[#allocation1] sm:$0xff pattern:$0x73625140]
      %v395 = vld.sshfl [vmem:[#allocation1 + $0x8] sm:$0xff pattern:$0x73625140]
      %v396 = vld.sshfl [vmem:[#allocation1 + $0x10] sm:$0xff pattern:$0x73625140]
      %v397 = vld.sshfl [vmem:[#allocation1 + $0x18] sm:$0xff pattern:$0x73625140]
      %v398 = vld.sshfl [vmem:[#allocation1 + $0x20] sm:$0xff pattern:$0x73625140]
      %v399 = vld.sshfl [vmem:[#allocation1 + $0x28] sm:$0xff pattern:$0x73625140]
      %v400 = vld.sshfl [vmem:[#allocation1 + $0x30] sm:$0xff pattern:$0x73625140]
      %v401 = vld.sshfl [vmem:[#allocation1 + $0x38] sm:$0xff pattern:$0x73625140]
      %402 = vst [vmem:[#allocation1] ss:$4 sm:$0xff] %v313
      %403 = vst [vmem:[%s342] ss:$4 sm:$0xff] %v314
      %v404 = vld.sshfl [vmem:[#allocation1] sm:$0xff pattern:$0x73625140]
      %v405 = vld.sshfl [vmem:[#allocation1 + $0x8] sm:$0xff pattern:$0x73625140]
      %v406 = vld.sshfl [vmem:[#allocation1 + $0x10] sm:$0xff pattern:$0x73625140]
      %v407 = vld.sshfl [vmem:[#allocation1 + $0x18] sm:$0xff pattern:$0x73625140]
      %v408 = vld.sshfl [vmem:[#allocation1 + $0x20] sm:$0xff pattern:$0x73625140]
      %v409 = vld.sshfl [vmem:[#allocation1 + $0x28] sm:$0xff pattern:$0x73625140]
      %v410 = vld.sshfl [vmem:[#allocation1 + $0x30] sm:$0xff pattern:$0x73625140]
      %v411 = vld.sshfl [vmem:[#allocation1 + $0x38] sm:$0xff pattern:$0x73625140]
      %412 = vst [vmem:[#allocation1] ss:$4 sm:$0xff] %v315
      %413 = vst [vmem:[%s342] ss:$4 sm:$0xff] %v316
      %v414 = vld.sshfl [vmem:[#allocation1] sm:$0xff pattern:$0x73625140]
      %v415 = vld.sshfl [vmem:[#allocation1 + $0x8] sm:$0xff pattern:$0x73625140]
      %v416 = vld.sshfl [vmem:[#allocation1 + $0x10] sm:$0xff pattern:$0x73625140]
      %v417 = vld.sshfl [vmem:[#allocation1 + $0x18] sm:$0xff pattern:$0x73625140]
      %v418 = vld.sshfl [vmem:[#allocation1 + $0x20] sm:$0xff pattern:$0x73625140]
      %v419 = vld.sshfl [vmem:[#allocation1 + $0x28] sm:$0xff pattern:$0x73625140]
      %v420 = vld.sshfl [vmem:[#allocation1 + $0x30] sm:$0xff pattern:$0x73625140]
      %v421 = vld.sshfl [vmem:[#allocation1 + $0x38] sm:$0xff pattern:$0x73625140]
      %422 = vst [vmem:[#allocation1] ss:$4 sm:$0xff] %v317
      %423 = vst [vmem:[%s342] ss:$4 sm:$0xff] %v318
      %v424 = vld.sshfl [vmem:[#allocation1] sm:$0xff pattern:$0x73625140]
      %v425 = vld.sshfl [vmem:[#allocation1 + $0x8] sm:$0xff pattern:$0x73625140]
      %v426 = vld.sshfl [vmem:[#allocation1 + $0x10] sm:$0xff pattern:$0x73625140]
      %v427 = vld.sshfl [vmem:[#allocation1 + $0x18] sm:$0xff pattern:$0x73625140]
      %v428 = vld.sshfl [vmem:[#allocation1 + $0x20] sm:$0xff pattern:$0x73625140]
      %v429 = vld.sshfl [vmem:[#allocation1 + $0x28] sm:$0xff pattern:$0x73625140]
      %v430 = vld.sshfl [vmem:[#allocation1 + $0x30] sm:$0xff pattern:$0x73625140]
      %v431 = vld.sshfl [vmem:[#allocation1 + $0x38] sm:$0xff pattern:$0x73625140]
      %432 = vst [vmem:[#allocation1] ss:$4 sm:$0xff] %v319
      %433 = vst [vmem:[%s342] ss:$4 sm:$0xff] %v320
      %v434 = vld.sshfl [vmem:[#allocation1] sm:$0xff pattern:$0x73625140]
      %v435 = vld.sshfl [vmem:[#allocation1 + $0x8] sm:$0xff pattern:$0x73625140]
      %v436 = vld.sshfl [vmem:[#allocation1 + $0x10] sm:$0xff pattern:$0x73625140]
      %v437 = vld.sshfl [vmem:[#allocation1 + $0x18] sm:$0xff pattern:$0x73625140]
      %v438 = vld.sshfl [vmem:[#allocation1 + $0x20] sm:$0xff pattern:$0x73625140]
      %v439 = vld.sshfl [vmem:[#allocation1 + $0x28] sm:$0xff pattern:$0x73625140]
      %v440 = vld.sshfl [vmem:[#allocation1 + $0x30] sm:$0xff pattern:$0x73625140]
      %v441 = vld.sshfl [vmem:[#allocation1 + $0x38] sm:$0xff pattern:$0x73625140]
      %v522 = vpack.c.bf16 %v344, %v344
      %v523 = vpack.c.bf16 %v345, %v345
      %v524 = vpack.c.bf16 %v346, %v346
      %v525 = vpack.c.bf16 %v347, %v347
      %v526 = vpack.c.bf16 %v348, %v348
      %v527 = vpack.c.bf16 %v349, %v349
      %v528 = vpack.c.bf16 %v350, %v350
      %v529 = vpack.c.bf16 %v351, %v351
      %v530 = vpack.c.bf16 %v354, %v354
      %v531 = vpack.c.bf16 %v355, %v355
      %v532 = vpack.c.bf16 %v356, %v356
      %v533 = vpack.c.bf16 %v357, %v357
      %v534 = vpack.c.bf16 %v358, %v358
      %v535 = vpack.c.bf16 %v359, %v359
      %v536 = vpack.c.bf16 %v360, %v360
      %v537 = vpack.c.bf16 %v361, %v361
      %v538 = vpack.c.bf16 %v364, %v364
      %v539 = vpack.c.bf16 %v365, %v365
      %v540 = vpack.c.bf16 %v366, %v366
      %v541 = vpack.c.bf16 %v367, %v367
      %v542 = vpack.c.bf16 %v368, %v368
      %v543 = vpack.c.bf16 %v369, %v369
      %v544 = vpack.c.bf16 %v370, %v370
      %v545 = vpack.c.bf16 %v371, %v371
      %v546 = vpack.c.bf16 %v374, %v374
      %v547 = vpack.c.bf16 %v375, %v375
      %v548 = vpack.c.bf16 %v376, %v376
      %v549 = vpack.c.bf16 %v377, %v377
      %v550 = vpack.c.bf16 %v378, %v378
      %v551 = vpack.c.bf16 %v379, %v379
      %v552 = vpack.c.bf16 %v380, %v380
      %v553 = vpack.c.bf16 %v381, %v381
      %v554 = vpack.c.bf16 %v384, %v384
      %v555 = vpack.c.bf16 %v385, %v385
      %v556 = vpack.c.bf16 %v386, %v386
      %v557 = vpack.c.bf16 %v387, %v387
      %v558 = vpack.c.bf16 %v388, %v388
      %v559 = vpack.c.bf16 %v389, %v389
      %v560 = vpack.c.bf16 %v390, %v390
      %v561 = vpack.c.bf16 %v391, %v391
      %v562 = vpack.c.bf16 %v394, %v394
      %v563 = vpack.c.bf16 %v395, %v395
      %v564 = vpack.c.bf16 %v396, %v396
      %v565 = vpack.c.bf16 %v397, %v397
      %v566 = vpack.c.bf16 %v398, %v398
      %v567 = vpack.c.bf16 %v399, %v399
      %v568 = vpack.c.bf16 %v400, %v400
      %v569 = vpack.c.bf16 %v401, %v401
      %v570 = vpack.c.bf16 %v404, %v404
      %v571 = vpack.c.bf16 %v405, %v405
      %v572 = vpack.c.bf16 %v406, %v406
      %v573 = vpack.c.bf16 %v407, %v407
      %v574 = vpack.c.bf16 %v408, %v408
      %v575 = vpack.c.bf16 %v409, %v409
      %v576 = vpack.c.bf16 %v410, %v410
      %v577 = vpack.c.bf16 %v411, %v411
      %v578 = vpack.c.bf16 %v414, %v414
      %v579 = vpack.c.bf16 %v415, %v415
      %v580 = vpack.c.bf16 %v416, %v416
      %v581 = vpack.c.bf16 %v417, %v417
      %v582 = vpack.c.bf16 %v418, %v418
      %v583 = vpack.c.bf16 %v419, %v419
      %v584 = vpack.c.bf16 %v420, %v420
      %v585 = vpack.c.bf16 %v421, %v421
      %v586 = vpack.c.bf16 %v424, %v424
      %v587 = vpack.c.bf16 %v425, %v425
      %v588 = vpack.c.bf16 %v426, %v426
      %v589 = vpack.c.bf16 %v427, %v427
      %v590 = vpack.c.bf16 %v428, %v428
      %v591 = vpack.c.bf16 %v429, %v429
      %v592 = vpack.c.bf16 %v430, %v430
      %v593 = vpack.c.bf16 %v431, %v431
      %v594 = vpack.c.bf16 %v434, %v434
      %v595 = vpack.c.bf16 %v435, %v435
      %v596 = vpack.c.bf16 %v436, %v436
      %v597 = vpack.c.bf16 %v437, %v437
      %v598 = vpack.c.bf16 %v438, %v438
      %v599 = vpack.c.bf16 %v439, %v439
      %v600 = vpack.c.bf16 %v440, %v440
      %v601 = vpack.c.bf16 %v441, %v441
      %v602 = vld [vmem:[%s288] sm:$0xf]
      %v603 = vld [vmem:[%s288 + $0x4] sm:$0xf]
      %v604 = vld [vmem:[%s288 + $0x8] sm:$0xf]
      %v605 = vld [vmem:[%s288 + $0xc] sm:$0xf]
      %v606 = vld [vmem:[%s288 + $0x10] sm:$0xf]
      %v607 = vld [vmem:[%s288 + $0x14] sm:$0xf]
      %v608 = vld [vmem:[%s288 + $0x18] sm:$0xf]
      %v609 = vld [vmem:[%s288 + $0x1c] sm:$0xf]
      %v610 = vld [vmem:[%s288 + $0x20] sm:$0xf]
      %v611 = vld [vmem:[%s288 + $0x24] sm:$0xf]
      %v612 = vld [vmem:[%s288 + $0x28] sm:$0xf]
      %v613 = vld [vmem:[%s288 + $0x2c] sm:$0xf]
      %v614 = vld [vmem:[%s288 + $0x30] sm:$0xf]
      %v615 = vld [vmem:[%s288 + $0x34] sm:$0xf]
      %v616 = vld [vmem:[%s288 + $0x38] sm:$0xf]
      %v617 = vld [vmem:[%s288 + $0x3c] sm:$0xf]
      %v618 = vld [vmem:[%s288 + $0x40] sm:$0xf]
      %v619 = vld [vmem:[%s288 + $0x44] sm:$0xf]
      %v620 = vld [vmem:[%s288 + $0x48] sm:$0xf]
      %v621 = vld [vmem:[%s288 + $0x4c] sm:$0xf]
      %v622 = vld [vmem:[%s288 + $0x50] sm:$0xf]
      %v623 = vld [vmem:[%s288 + $0x54] sm:$0xf]
      %v624 = vld [vmem:[%s288 + $0x58] sm:$0xf]
      %v625 = vld [vmem:[%s288 + $0x5c] sm:$0xf]
      %v626 = vld [vmem:[%s288 + $0x60] sm:$0xf]
      %v627 = vld [vmem:[%s288 + $0x64] sm:$0xf]
      %v628 = vld [vmem:[%s288 + $0x68] sm:$0xf]
      %v629 = vld [vmem:[%s288 + $0x6c] sm:$0xf]
      %v630 = vld [vmem:[%s288 + $0x70] sm:$0xf]
      %v631 = vld [vmem:[%s288 + $0x74] sm:$0xf]
      %v632 = vld [vmem:[%s288 + $0x78] sm:$0xf]
      %v633 = vld [vmem:[%s288 + $0x7c] sm:$0xf]
      %v634 = vld [vmem:[%s288 + $0x80] sm:$0xf]
      %v635 = vld [vmem:[%s288 + $0x84] sm:$0xf]
      %v636 = vld [vmem:[%s288 + $0x88] sm:$0xf]
      %v637 = vld [vmem:[%s288 + $0x8c] sm:$0xf]
      %v638 = vld [vmem:[%s288 + $0x90] sm:$0xf]
      %v639 = vld [vmem:[%s288 + $0x94] sm:$0xf]
      %v640 = vld [vmem:[%s288 + $0x98] sm:$0xf]
      %v641 = vld [vmem:[%s288 + $0x9c] sm:$0xf]
      %v642 = vld [vmem:[%s288 + $0xa0] sm:$0xf]
      %v643 = vld [vmem:[%s288 + $0xa4] sm:$0xf]
      %v644 = vld [vmem:[%s288 + $0xa8] sm:$0xf]
      %v645 = vld [vmem:[%s288 + $0xac] sm:$0xf]
      %v646 = vld [vmem:[%s288 + $0xb0] sm:$0xf]
      %v647 = vld [vmem:[%s288 + $0xb4] sm:$0xf]
      %v648 = vld [vmem:[%s288 + $0xb8] sm:$0xf]
      %v649 = vld [vmem:[%s288 + $0xbc] sm:$0xf]
      %v650 = vld [vmem:[%s288 + $0xc0] sm:$0xf]
      %v651 = vld [vmem:[%s288 + $0xc4] sm:$0xf]
      %v652 = vld [vmem:[%s288 + $0xc8] sm:$0xf]
      %v653 = vld [vmem:[%s288 + $0xcc] sm:$0xf]
      %v654 = vld [vmem:[%s288 + $0xd0] sm:$0xf]
      %v655 = vld [vmem:[%s288 + $0xd4] sm:$0xf]
      %v656 = vld [vmem:[%s288 + $0xd8] sm:$0xf]
      %v657 = vld [vmem:[%s288 + $0xdc] sm:$0xf]
      %v658 = vld [vmem:[%s288 + $0xe0] sm:$0xf]
      %v659 = vld [vmem:[%s288 + $0xe4] sm:$0xf]
      %v660 = vld [vmem:[%s288 + $0xe8] sm:$0xf]
      %v661 = vld [vmem:[%s288 + $0xec] sm:$0xf]
      %v662 = vld [vmem:[%s288 + $0xf0] sm:$0xf]
      %v663 = vld [vmem:[%s288 + $0xf4] sm:$0xf]
      %v664 = vld [vmem:[%s288 + $0xf8] sm:$0xf]
      %v665 = vld [vmem:[%s288 + $0xfc] sm:$0xf]
      %v666 = vld [vmem:[%s288 + $0x100] sm:$0xf]
      %v667 = vld [vmem:[%s288 + $0x104] sm:$0xf]
      %v668 = vld [vmem:[%s288 + $0x108] sm:$0xf]
      %v669 = vld [vmem:[%s288 + $0x10c] sm:$0xf]
      %v670 = vld [vmem:[%s288 + $0x110] sm:$0xf]
      %v671 = vld [vmem:[%s288 + $0x114] sm:$0xf]
      %v672 = vld [vmem:[%s288 + $0x118] sm:$0xf]
      %v673 = vld [vmem:[%s288 + $0x11c] sm:$0xf]
      %v674 = vld [vmem:[%s288 + $0x120] sm:$0xf]
      %v675 = vld [vmem:[%s288 + $0x124] sm:$0xf]
      %v676 = vld [vmem:[%s288 + $0x128] sm:$0xf]
      %v677 = vld [vmem:[%s288 + $0x12c] sm:$0xf]
      %v678 = vld [vmem:[%s288 + $0x130] sm:$0xf]
      %v679 = vld [vmem:[%s288 + $0x134] sm:$0xf]
      %v680 = vld [vmem:[%s288 + $0x138] sm:$0xf]
      %v681 = vld [vmem:[%s288 + $0x13c] sm:$0xf]
      %v682 = vld [vmem:[%s288 + $0x140] sm:$0xf]
      %v683 = vld [vmem:[%s288 + $0x144] sm:$0xf]
      %v684 = vld [vmem:[%s288 + $0x148] sm:$0xf]
      %v685 = vld [vmem:[%s288 + $0x14c] sm:$0xf]
      %v686 = vld [vmem:[%s288 + $0x150] sm:$0xf]
      %v687 = vld [vmem:[%s288 + $0x154] sm:$0xf]
      %v688 = vld [vmem:[%s288 + $0x158] sm:$0xf]
      %v689 = vld [vmem:[%s288 + $0x15c] sm:$0xf]
      %v690 = vld [vmem:[%s288 + $0x160] sm:$0xf]
      %v691 = vld [vmem:[%s288 + $0x164] sm:$0xf]
      %v692 = vld [vmem:[%s288 + $0x168] sm:$0xf]
      %v693 = vld [vmem:[%s288 + $0x16c] sm:$0xf]
      %v694 = vld [vmem:[%s288 + $0x170] sm:$0xf]
      %v695 = vld [vmem:[%s288 + $0x174] sm:$0xf]
      %v696 = vld [vmem:[%s288 + $0x178] sm:$0xf]
      %v697 = vld [vmem:[%s288 + $0x17c] sm:$0xf]
      %v698 = vld [vmem:[%s288 + $0x180] sm:$0xf]
      %v699 = vld [vmem:[%s288 + $0x184] sm:$0xf]
      %v700 = vld [vmem:[%s288 + $0x188] sm:$0xf]
      %v701 = vld [vmem:[%s288 + $0x18c] sm:$0xf]
      %v702 = vld [vmem:[%s288 + $0x190] sm:$0xf]
      %v703 = vld [vmem:[%s288 + $0x194] sm:$0xf]
      %v704 = vld [vmem:[%s288 + $0x198] sm:$0xf]
      %v705 = vld [vmem:[%s288 + $0x19c] sm:$0xf]
      %v706 = vld [vmem:[%s288 + $0x1a0] sm:$0xf]
      %v707 = vld [vmem:[%s288 + $0x1a4] sm:$0xf]
      %v708 = vld [vmem:[%s288 + $0x1a8] sm:$0xf]
      %v709 = vld [vmem:[%s288 + $0x1ac] sm:$0xf]
      %v710 = vld [vmem:[%s288 + $0x1b0] sm:$0xf]
      %v711 = vld [vmem:[%s288 + $0x1b4] sm:$0xf]
      %v712 = vld [vmem:[%s288 + $0x1b8] sm:$0xf]
      %v713 = vld [vmem:[%s288 + $0x1bc] sm:$0xf]
      %v714 = vld [vmem:[%s288 + $0x1c0] sm:$0xf]
      %v715 = vld [vmem:[%s288 + $0x1c4] sm:$0xf]
      %v716 = vld [vmem:[%s288 + $0x1c8] sm:$0xf]
      %v717 = vld [vmem:[%s288 + $0x1cc] sm:$0xf]
      %v718 = vld [vmem:[%s288 + $0x1d0] sm:$0xf]
      %v719 = vld [vmem:[%s288 + $0x1d4] sm:$0xf]
      %v720 = vld [vmem:[%s288 + $0x1d8] sm:$0xf]
      %v721 = vld [vmem:[%s288 + $0x1dc] sm:$0xf]
      %v722 = vld [vmem:[%s288 + $0x1e0] sm:$0xf]
      %v723 = vld [vmem:[%s288 + $0x1e4] sm:$0xf]
      %v724 = vld [vmem:[%s288 + $0x1e8] sm:$0xf]
      %v725 = vld [vmem:[%s288 + $0x1ec] sm:$0xf]
      %v726 = vld [vmem:[%s288 + $0x1f0] sm:$0xf]
      %v727 = vld [vmem:[%s288 + $0x1f4] sm:$0xf]
      %v728 = vld [vmem:[%s288 + $0x1f8] sm:$0xf]
      %v729 = vld [vmem:[%s288 + $0x1fc] sm:$0xf]
      %v730 = vld [vmem:[%s288 + $0x200] sm:$0xf]
      %v731 = vld [vmem:[%s288 + $0x204] sm:$0xf]
      %v732 = vld [vmem:[%s288 + $0x208] sm:$0xf]
      %v733 = vld [vmem:[%s288 + $0x20c] sm:$0xf]
      %v734 = vld [vmem:[%s288 + $0x210] sm:$0xf]
      %v735 = vld [vmem:[%s288 + $0x214] sm:$0xf]
      %v736 = vld [vmem:[%s288 + $0x218] sm:$0xf]
      %v737 = vld [vmem:[%s288 + $0x21c] sm:$0xf]
      %v738 = vld [vmem:[%s288 + $0x220] sm:$0xf]
      %v739 = vld [vmem:[%s288 + $0x224] sm:$0xf]
      %v740 = vld [vmem:[%s288 + $0x228] sm:$0xf]
      %v741 = vld [vmem:[%s288 + $0x22c] sm:$0xf]
      %v742 = vld [vmem:[%s288 + $0x230] sm:$0xf]
      %v743 = vld [vmem:[%s288 + $0x234] sm:$0xf]
      %v744 = vld [vmem:[%s288 + $0x238] sm:$0xf]
      %v745 = vld [vmem:[%s288 + $0x23c] sm:$0xf]
      %v746 = vld [vmem:[%s288 + $0x240] sm:$0xf]
      %v747 = vld [vmem:[%s288 + $0x244] sm:$0xf]
      %v748 = vld [vmem:[%s288 + $0x248] sm:$0xf]
      %v749 = vld [vmem:[%s288 + $0x24c] sm:$0xf]
      %v750 = vld [vmem:[%s288 + $0x250] sm:$0xf]
      %v751 = vld [vmem:[%s288 + $0x254] sm:$0xf]
      %v752 = vld [vmem:[%s288 + $0x258] sm:$0xf]
      %v753 = vld [vmem:[%s288 + $0x25c] sm:$0xf]
      %v754 = vld [vmem:[%s288 + $0x260] sm:$0xf]
      %v755 = vld [vmem:[%s288 + $0x264] sm:$0xf]
      %v756 = vld [vmem:[%s288 + $0x268] sm:$0xf]
      %v757 = vld [vmem:[%s288 + $0x26c] sm:$0xf]
      %v758 = vld [vmem:[%s288 + $0x270] sm:$0xf]
      %v759 = vld [vmem:[%s288 + $0x274] sm:$0xf]
      %v760 = vld [vmem:[%s288 + $0x278] sm:$0xf]
      %v761 = vld [vmem:[%s288 + $0x27c] sm:$0xf]
      %v762 = vld [vmem:[%s288 + $0x280] sm:$0xf]
      %v763 = vld [vmem:[%s288 + $0x284] sm:$0xf]
      %v764 = vld [vmem:[%s288 + $0x288] sm:$0xf]
      %v765 = vld [vmem:[%s288 + $0x28c] sm:$0xf]
      %v766 = vld [vmem:[%s288 + $0x290] sm:$0xf]
      %v767 = vld [vmem:[%s288 + $0x294] sm:$0xf]
      %v768 = vld [vmem:[%s288 + $0x298] sm:$0xf]
      %v769 = vld [vmem:[%s288 + $0x29c] sm:$0xf]
      %v770 = vld [vmem:[%s288 + $0x2a0] sm:$0xf]
      %v771 = vld [vmem:[%s288 + $0x2a4] sm:$0xf]
      %v772 = vld [vmem:[%s288 + $0x2a8] sm:$0xf]
      %v773 = vld [vmem:[%s288 + $0x2ac] sm:$0xf]
      %v774 = vld [vmem:[%s288 + $0x2b0] sm:$0xf]
      %v775 = vld [vmem:[%s288 + $0x2b4] sm:$0xf]
      %v776 = vld [vmem:[%s288 + $0x2b8] sm:$0xf]
      %v777 = vld [vmem:[%s288 + $0x2bc] sm:$0xf]
      %v778 = vld [vmem:[%s288 + $0x2c0] sm:$0xf]
      %v779 = vld [vmem:[%s288 + $0x2c4] sm:$0xf]
      %v780 = vld [vmem:[%s288 + $0x2c8] sm:$0xf]
      %v781 = vld [vmem:[%s288 + $0x2cc] sm:$0xf]
      %v782 = vld [vmem:[%s288 + $0x2d0] sm:$0xf]
      %v783 = vld [vmem:[%s288 + $0x2d4] sm:$0xf]
      %v784 = vld [vmem:[%s288 + $0x2d8] sm:$0xf]
      %v785 = vld [vmem:[%s288 + $0x2dc] sm:$0xf]
      %v786 = vld [vmem:[%s288 + $0x2e0] sm:$0xf]
      %v787 = vld [vmem:[%s288 + $0x2e4] sm:$0xf]
      %v788 = vld [vmem:[%s288 + $0x2e8] sm:$0xf]
      %v789 = vld [vmem:[%s288 + $0x2ec] sm:$0xf]
      %v790 = vld [vmem:[%s288 + $0x2f0] sm:$0xf]
      %v791 = vld [vmem:[%s288 + $0x2f4] sm:$0xf]
      %v792 = vld [vmem:[%s288 + $0x2f8] sm:$0xf]
      %v793 = vld [vmem:[%s288 + $0x2fc] sm:$0xf]
      %v794 = vld [vmem:[%s288 + $0x300] sm:$0xf]
      %v795 = vld [vmem:[%s288 + $0x304] sm:$0xf]
      %v796 = vld [vmem:[%s288 + $0x308] sm:$0xf]
      %v797 = vld [vmem:[%s288 + $0x30c] sm:$0xf]
      %v798 = vld [vmem:[%s288 + $0x310] sm:$0xf]
      %v799 = vld [vmem:[%s288 + $0x314] sm:$0xf]
      %v800 = vld [vmem:[%s288 + $0x318] sm:$0xf]
      %v801 = vld [vmem:[%s288 + $0x31c] sm:$0xf]
      %v802 = vld [vmem:[%s288 + $0x320] sm:$0xf]
      %v803 = vld [vmem:[%s288 + $0x324] sm:$0xf]
      %v804 = vld [vmem:[%s288 + $0x328] sm:$0xf]
      %v805 = vld [vmem:[%s288 + $0x32c] sm:$0xf]
      %v806 = vld [vmem:[%s288 + $0x330] sm:$0xf]
      %v807 = vld [vmem:[%s288 + $0x334] sm:$0xf]
      %v808 = vld [vmem:[%s288 + $0x338] sm:$0xf]
      %v809 = vld [vmem:[%s288 + $0x33c] sm:$0xf]
      %v810 = vld [vmem:[%s288 + $0x340] sm:$0xf]
      %v811 = vld [vmem:[%s288 + $0x344] sm:$0xf]
      %v812 = vld [vmem:[%s288 + $0x348] sm:$0xf]
      %v813 = vld [vmem:[%s288 + $0x34c] sm:$0xf]
      %v814 = vld [vmem:[%s288 + $0x350] sm:$0xf]
      %v815 = vld [vmem:[%s288 + $0x354] sm:$0xf]
      %v816 = vld [vmem:[%s288 + $0x358] sm:$0xf]
      %v817 = vld [vmem:[%s288 + $0x35c] sm:$0xf]
      %v818 = vld [vmem:[%s288 + $0x360] sm:$0xf]
      %v819 = vld [vmem:[%s288 + $0x364] sm:$0xf]
      %v820 = vld [vmem:[%s288 + $0x368] sm:$0xf]
      %v821 = vld [vmem:[%s288 + $0x36c] sm:$0xf]
      %v822 = vld [vmem:[%s288 + $0x370] sm:$0xf]
      %v823 = vld [vmem:[%s288 + $0x374] sm:$0xf]
      %v824 = vld [vmem:[%s288 + $0x378] sm:$0xf]
      %v825 = vld [vmem:[%s288 + $0x37c] sm:$0xf]
      %v826 = vld [vmem:[%s288 + $0x380] sm:$0xf]
      %v827 = vld [vmem:[%s288 + $0x384] sm:$0xf]
      %v828 = vld [vmem:[%s288 + $0x388] sm:$0xf]
      %v829 = vld [vmem:[%s288 + $0x38c] sm:$0xf]
      %v830 = vld [vmem:[%s288 + $0x390] sm:$0xf]
      %v831 = vld [vmem:[%s288 + $0x394] sm:$0xf]
      %v832 = vld [vmem:[%s288 + $0x398] sm:$0xf]
      %v833 = vld [vmem:[%s288 + $0x39c] sm:$0xf]
      %v834 = vld [vmem:[%s288 + $0x3a0] sm:$0xf]
      %v835 = vld [vmem:[%s288 + $0x3a4] sm:$0xf]
      %v836 = vld [vmem:[%s288 + $0x3a8] sm:$0xf]
      %v837 = vld [vmem:[%s288 + $0x3ac] sm:$0xf]
      %v838 = vld [vmem:[%s288 + $0x3b0] sm:$0xf]
      %v839 = vld [vmem:[%s288 + $0x3b4] sm:$0xf]
      %v840 = vld [vmem:[%s288 + $0x3b8] sm:$0xf]
      %v841 = vld [vmem:[%s288 + $0x3bc] sm:$0xf]
      %v842 = vld [vmem:[%s288 + $0x3c0] sm:$0xf]
      %v843 = vld [vmem:[%s288 + $0x3c4] sm:$0xf]
      %v844 = vld [vmem:[%s288 + $0x3c8] sm:$0xf]
      %v845 = vld [vmem:[%s288 + $0x3cc] sm:$0xf]
      %v846 = vld [vmem:[%s288 + $0x3d0] sm:$0xf]
      %v847 = vld [vmem:[%s288 + $0x3d4] sm:$0xf]
      %v848 = vld [vmem:[%s288 + $0x3d8] sm:$0xf]
      %v849 = vld [vmem:[%s288 + $0x3dc] sm:$0xf]
      %v850 = vld [vmem:[%s288 + $0x3e0] sm:$0xf]
      %v851 = vld [vmem:[%s288 + $0x3e4] sm:$0xf]
      %v852 = vld [vmem:[%s288 + $0x3e8] sm:$0xf]
      %v853 = vld [vmem:[%s288 + $0x3ec] sm:$0xf]
      %v854 = vld [vmem:[%s288 + $0x3f0] sm:$0xf]
      %v855 = vld [vmem:[%s288 + $0x3f4] sm:$0xf]
      %v856 = vld [vmem:[%s288 + $0x3f8] sm:$0xf]
      %v857 = vld [vmem:[%s288 + $0x3fc] sm:$0xf]
      %v858 = vld [vmem:[%s288 + $0x400] sm:$0xf]
      %v859 = vld [vmem:[%s288 + $0x404] sm:$0xf]
      %v860 = vld [vmem:[%s288 + $0x408] sm:$0xf]
      %v861 = vld [vmem:[%s288 + $0x40c] sm:$0xf]
      %v862 = vld [vmem:[%s288 + $0x410] sm:$0xf]
      %v863 = vld [vmem:[%s288 + $0x414] sm:$0xf]
      %v864 = vld [vmem:[%s288 + $0x418] sm:$0xf]
      %v865 = vld [vmem:[%s288 + $0x41c] sm:$0xf]
      %v866 = vld [vmem:[%s288 + $0x420] sm:$0xf]
      %v867 = vld [vmem:[%s288 + $0x424] sm:$0xf]
      %v868 = vld [vmem:[%s288 + $0x428] sm:$0xf]
      %v869 = vld [vmem:[%s288 + $0x42c] sm:$0xf]
      %v870 = vld [vmem:[%s288 + $0x430] sm:$0xf]
      %v871 = vld [vmem:[%s288 + $0x434] sm:$0xf]
      %v872 = vld [vmem:[%s288 + $0x438] sm:$0xf]
      %v873 = vld [vmem:[%s288 + $0x43c] sm:$0xf]
      %v874 = vld [vmem:[%s288 + $0x440] sm:$0xf]
      %v875 = vld [vmem:[%s288 + $0x444] sm:$0xf]
      %v876 = vld [vmem:[%s288 + $0x448] sm:$0xf]
      %v877 = vld [vmem:[%s288 + $0x44c] sm:$0xf]
      %v878 = vld [vmem:[%s288 + $0x450] sm:$0xf]
      %v879 = vld [vmem:[%s288 + $0x454] sm:$0xf]
      %v880 = vld [vmem:[%s288 + $0x458] sm:$0xf]
      %v881 = vld [vmem:[%s288 + $0x45c] sm:$0xf]
      %v882 = vld [vmem:[%s288 + $0x460] sm:$0xf]
      %v883 = vld [vmem:[%s288 + $0x464] sm:$0xf]
      %v884 = vld [vmem:[%s288 + $0x468] sm:$0xf]
      %v885 = vld [vmem:[%s288 + $0x46c] sm:$0xf]
      %v886 = vld [vmem:[%s288 + $0x470] sm:$0xf]
      %v887 = vld [vmem:[%s288 + $0x474] sm:$0xf]
      %v888 = vld [vmem:[%s288 + $0x478] sm:$0xf]
      %v889 = vld [vmem:[%s288 + $0x47c] sm:$0xf]
      %v890 = vld [vmem:[%s288 + $0x480] sm:$0xf]
      %v891 = vld [vmem:[%s288 + $0x484] sm:$0xf]
      %v892 = vld [vmem:[%s288 + $0x488] sm:$0xf]
      %v893 = vld [vmem:[%s288 + $0x48c] sm:$0xf]
      %v894 = vld [vmem:[%s288 + $0x490] sm:$0xf]
      %v895 = vld [vmem:[%s288 + $0x494] sm:$0xf]
      %v896 = vld [vmem:[%s288 + $0x498] sm:$0xf]
      %v897 = vld [vmem:[%s288 + $0x49c] sm:$0xf]
      %v898 = vld [vmem:[%s288 + $0x4a0] sm:$0xf]
      %v899 = vld [vmem:[%s288 + $0x4a4] sm:$0xf]
      %v900 = vld [vmem:[%s288 + $0x4a8] sm:$0xf]
      %v901 = vld [vmem:[%s288 + $0x4ac] sm:$0xf]
      %v902 = vld [vmem:[%s288 + $0x4b0] sm:$0xf]
      %v903 = vld [vmem:[%s288 + $0x4b4] sm:$0xf]
      %v904 = vld [vmem:[%s288 + $0x4b8] sm:$0xf]
      %v905 = vld [vmem:[%s288 + $0x4bc] sm:$0xf]
      %v906 = vld [vmem:[%s288 + $0x4c0] sm:$0xf]
      %v907 = vld [vmem:[%s288 + $0x4c4] sm:$0xf]
      %v908 = vld [vmem:[%s288 + $0x4c8] sm:$0xf]
      %v909 = vld [vmem:[%s288 + $0x4cc] sm:$0xf]
      %v910 = vld [vmem:[%s288 + $0x4d0] sm:$0xf]
      %v911 = vld [vmem:[%s288 + $0x4d4] sm:$0xf]
      %v912 = vld [vmem:[%s288 + $0x4d8] sm:$0xf]
      %v913 = vld [vmem:[%s288 + $0x4dc] sm:$0xf]
      %v914 = vld [vmem:[%s288 + $0x4e0] sm:$0xf]
      %v915 = vld [vmem:[%s288 + $0x4e4] sm:$0xf]
      %v916 = vld [vmem:[%s288 + $0x4e8] sm:$0xf]
      %v917 = vld [vmem:[%s288 + $0x4ec] sm:$0xf]
      %v918 = vld [vmem:[%s288 + $0x4f0] sm:$0xf]
      %v919 = vld [vmem:[%s288 + $0x4f4] sm:$0xf]
      %v920 = vld [vmem:[%s288 + $0x4f8] sm:$0xf]
      %v921 = vld [vmem:[%s288 + $0x4fc] sm:$0xf]
      %v922 = vld [vmem:[%s288 + $0x500] sm:$0xf]
      %v923 = vld [vmem:[%s288 + $0x504] sm:$0xf]
      %v924 = vld [vmem:[%s288 + $0x508] sm:$0xf]
      %v925 = vld [vmem:[%s288 + $0x50c] sm:$0xf]
      %v926 = vld [vmem:[%s288 + $0x510] sm:$0xf]
      %v927 = vld [vmem:[%s288 + $0x514] sm:$0xf]
      %v928 = vld [vmem:[%s288 + $0x518] sm:$0xf]
      %v929 = vld [vmem:[%s288 + $0x51c] sm:$0xf]
      %v930 = vld [vmem:[%s288 + $0x520] sm:$0xf]
      %v931 = vld [vmem:[%s288 + $0x524] sm:$0xf]
      %v932 = vld [vmem:[%s288 + $0x528] sm:$0xf]
      %v933 = vld [vmem:[%s288 + $0x52c] sm:$0xf]
      %v934 = vld [vmem:[%s288 + $0x530] sm:$0xf]
      %v935 = vld [vmem:[%s288 + $0x534] sm:$0xf]
      %v936 = vld [vmem:[%s288 + $0x538] sm:$0xf]
      %v937 = vld [vmem:[%s288 + $0x53c] sm:$0xf]
      %v938 = vld [vmem:[%s288 + $0x540] sm:$0xf]
      %v939 = vld [vmem:[%s288 + $0x544] sm:$0xf]
      %v940 = vld [vmem:[%s288 + $0x548] sm:$0xf]
      %v941 = vld [vmem:[%s288 + $0x54c] sm:$0xf]
      %v942 = vld [vmem:[%s288 + $0x550] sm:$0xf]
      %v943 = vld [vmem:[%s288 + $0x554] sm:$0xf]
      %v944 = vld [vmem:[%s288 + $0x558] sm:$0xf]
      %v945 = vld [vmem:[%s288 + $0x55c] sm:$0xf]
      %v946 = vld [vmem:[%s288 + $0x560] sm:$0xf]
      %v947 = vld [vmem:[%s288 + $0x564] sm:$0xf]
      %v948 = vld [vmem:[%s288 + $0x568] sm:$0xf]
      %v949 = vld [vmem:[%s288 + $0x56c] sm:$0xf]
      %v950 = vld [vmem:[%s288 + $0x570] sm:$0xf]
      %v951 = vld [vmem:[%s288 + $0x574] sm:$0xf]
      %v952 = vld [vmem:[%s288 + $0x578] sm:$0xf]
      %v953 = vld [vmem:[%s288 + $0x57c] sm:$0xf]
      %v954 = vld [vmem:[%s288 + $0x580] sm:$0xf]
      %v955 = vld [vmem:[%s288 + $0x584] sm:$0xf]
      %v956 = vld [vmem:[%s288 + $0x588] sm:$0xf]
      %v957 = vld [vmem:[%s288 + $0x58c] sm:$0xf]
      %v958 = vld [vmem:[%s288 + $0x590] sm:$0xf]
      %v959 = vld [vmem:[%s288 + $0x594] sm:$0xf]
      %v960 = vld [vmem:[%s288 + $0x598] sm:$0xf]
      %v961 = vld [vmem:[%s288 + $0x59c] sm:$0xf]
      %v962 = vld [vmem:[%s288 + $0x5a0] sm:$0xf]
      %v963 = vld [vmem:[%s288 + $0x5a4] sm:$0xf]
      %v964 = vld [vmem:[%s288 + $0x5a8] sm:$0xf]
      %v965 = vld [vmem:[%s288 + $0x5ac] sm:$0xf]
      %v966 = vld [vmem:[%s288 + $0x5b0] sm:$0xf]
      %v967 = vld [vmem:[%s288 + $0x5b4] sm:$0xf]
      %v968 = vld [vmem:[%s288 + $0x5b8] sm:$0xf]
      %v969 = vld [vmem:[%s288 + $0x5bc] sm:$0xf]
      %v970 = vld [vmem:[%s288 + $0x5c0] sm:$0xf]
      %v971 = vld [vmem:[%s288 + $0x5c4] sm:$0xf]
      %v972 = vld [vmem:[%s288 + $0x5c8] sm:$0xf]
      %v973 = vld [vmem:[%s288 + $0x5cc] sm:$0xf]
      %v974 = vld [vmem:[%s288 + $0x5d0] sm:$0xf]
      %v975 = vld [vmem:[%s288 + $0x5d4] sm:$0xf]
      %v976 = vld [vmem:[%s288 + $0x5d8] sm:$0xf]
      %v977 = vld [vmem:[%s288 + $0x5dc] sm:$0xf]
      %v978 = vld [vmem:[%s288 + $0x5e0] sm:$0xf]
      %v979 = vld [vmem:[%s288 + $0x5e4] sm:$0xf]
      %v980 = vld [vmem:[%s288 + $0x5e8] sm:$0xf]
      %v981 = vld [vmem:[%s288 + $0x5ec] sm:$0xf]
      %v982 = vld [vmem:[%s288 + $0x5f0] sm:$0xf]
      %v983 = vld [vmem:[%s288 + $0x5f4] sm:$0xf]
      %v984 = vld [vmem:[%s288 + $0x5f8] sm:$0xf]
      %v985 = vld [vmem:[%s288 + $0x5fc] sm:$0xf]
      %v986 = vld [vmem:[%s288 + $0x600] sm:$0xf]
      %v987 = vld [vmem:[%s288 + $0x604] sm:$0xf]
      %v988 = vld [vmem:[%s288 + $0x608] sm:$0xf]
      %v989 = vld [vmem:[%s288 + $0x60c] sm:$0xf]
      %v990 = vld [vmem:[%s288 + $0x610] sm:$0xf]
      %v991 = vld [vmem:[%s288 + $0x614] sm:$0xf]
      %v992 = vld [vmem:[%s288 + $0x618] sm:$0xf]
      %v993 = vld [vmem:[%s288 + $0x61c] sm:$0xf]
      %v994 = vld [vmem:[%s288 + $0x620] sm:$0xf]
      %v995 = vld [vmem:[%s288 + $0x624] sm:$0xf]
      %v996 = vld [vmem:[%s288 + $0x628] sm:$0xf]
      %v997 = vld [vmem:[%s288 + $0x62c] sm:$0xf]
      %v998 = vld [vmem:[%s288 + $0x630] sm:$0xf]
      %v999 = vld [vmem:[%s288 + $0x634] sm:$0xf]
      %v1000 = vld [vmem:[%s288 + $0x638] sm:$0xf]
      %v1001 = vld [vmem:[%s288 + $0x63c] sm:$0xf]
      %v1002 = vld [vmem:[%s288 + $0x640] sm:$0xf]
      %v1003 = vld [vmem:[%s288 + $0x644] sm:$0xf]
      %v1004 = vld [vmem:[%s288 + $0x648] sm:$0xf]
      %v1005 = vld [vmem:[%s288 + $0x64c] sm:$0xf]
      %v1006 = vld [vmem:[%s288 + $0x650] sm:$0xf]
      %v1007 = vld [vmem:[%s288 + $0x654] sm:$0xf]
      %v1008 = vld [vmem:[%s288 + $0x658] sm:$0xf]
      %v1009 = vld [vmem:[%s288 + $0x65c] sm:$0xf]
      %v1010 = vld [vmem:[%s288 + $0x660] sm:$0xf]
      %v1011 = vld [vmem:[%s288 + $0x664] sm:$0xf]
      %v1012 = vld [vmem:[%s288 + $0x668] sm:$0xf]
      %v1013 = vld [vmem:[%s288 + $0x66c] sm:$0xf]
      %v1014 = vld [vmem:[%s288 + $0x670] sm:$0xf]
      %v1015 = vld [vmem:[%s288 + $0x674] sm:$0xf]
      %v1016 = vld [vmem:[%s288 + $0x678] sm:$0xf]
      %v1017 = vld [vmem:[%s288 + $0x67c] sm:$0xf]
      %v1018 = vld [vmem:[%s288 + $0x680] sm:$0xf]
      %v1019 = vld [vmem:[%s288 + $0x684] sm:$0xf]
      %v1020 = vld [vmem:[%s288 + $0x688] sm:$0xf]
      %v1021 = vld [vmem:[%s288 + $0x68c] sm:$0xf]
      %v1022 = vld [vmem:[%s288 + $0x690] sm:$0xf]
      %v1023 = vld [vmem:[%s288 + $0x694] sm:$0xf]
      %v1024 = vld [vmem:[%s288 + $0x698] sm:$0xf]
      %v1025 = vld [vmem:[%s288 + $0x69c] sm:$0xf]
      %v1026 = vld [vmem:[%s288 + $0x6a0] sm:$0xf]
      %v1027 = vld [vmem:[%s288 + $0x6a4] sm:$0xf]
      %v1028 = vld [vmem:[%s288 + $0x6a8] sm:$0xf]
      %v1029 = vld [vmem:[%s288 + $0x6ac] sm:$0xf]
      %v1030 = vld [vmem:[%s288 + $0x6b0] sm:$0xf]
      %v1031 = vld [vmem:[%s288 + $0x6b4] sm:$0xf]
      %v1032 = vld [vmem:[%s288 + $0x6b8] sm:$0xf]
      %v1033 = vld [vmem:[%s288 + $0x6bc] sm:$0xf]
      %v1034 = vld [vmem:[%s288 + $0x6c0] sm:$0xf]
      %v1035 = vld [vmem:[%s288 + $0x6c4] sm:$0xf]
      %v1036 = vld [vmem:[%s288 + $0x6c8] sm:$0xf]
      %v1037 = vld [vmem:[%s288 + $0x6cc] sm:$0xf]
      %v1038 = vld [vmem:[%s288 + $0x6d0] sm:$0xf]
      %v1039 = vld [vmem:[%s288 + $0x6d4] sm:$0xf]
      %v1040 = vld [vmem:[%s288 + $0x6d8] sm:$0xf]
      %v1041 = vld [vmem:[%s288 + $0x6dc] sm:$0xf]
      %v1042 = vld [vmem:[%s288 + $0x6e0] sm:$0xf]
      %v1043 = vld [vmem:[%s288 + $0x6e4] sm:$0xf]
      %v1044 = vld [vmem:[%s288 + $0x6e8] sm:$0xf]
      %v1045 = vld [vmem:[%s288 + $0x6ec] sm:$0xf]
      %v1046 = vld [vmem:[%s288 + $0x6f0] sm:$0xf]
      %v1047 = vld [vmem:[%s288 + $0x6f4] sm:$0xf]
      %v1048 = vld [vmem:[%s288 + $0x6f8] sm:$0xf]
      %v1049 = vld [vmem:[%s288 + $0x6fc] sm:$0xf]
      %v1050 = vld [vmem:[%s288 + $0x700] sm:$0xf]
      %v1051 = vld [vmem:[%s288 + $0x704] sm:$0xf]
      %v1052 = vld [vmem:[%s288 + $0x708] sm:$0xf]
      %v1053 = vld [vmem:[%s288 + $0x70c] sm:$0xf]
      %v1054 = vld [vmem:[%s288 + $0x710] sm:$0xf]
      %v1055 = vld [vmem:[%s288 + $0x714] sm:$0xf]
      %v1056 = vld [vmem:[%s288 + $0x718] sm:$0xf]
      %v1057 = vld [vmem:[%s288 + $0x71c] sm:$0xf]
      %v1058 = vld [vmem:[%s288 + $0x720] sm:$0xf]
      %v1059 = vld [vmem:[%s288 + $0x724] sm:$0xf]
      %v1060 = vld [vmem:[%s288 + $0x728] sm:$0xf]
      %v1061 = vld [vmem:[%s288 + $0x72c] sm:$0xf]
      %v1062 = vld [vmem:[%s288 + $0x730] sm:$0xf]
      %v1063 = vld [vmem:[%s288 + $0x734] sm:$0xf]
      %v1064 = vld [vmem:[%s288 + $0x738] sm:$0xf]
      %v1065 = vld [vmem:[%s288 + $0x73c] sm:$0xf]
      %v1066 = vld [vmem:[%s288 + $0x740] sm:$0xf]
      %v1067 = vld [vmem:[%s288 + $0x744] sm:$0xf]
      %v1068 = vld [vmem:[%s288 + $0x748] sm:$0xf]
      %v1069 = vld [vmem:[%s288 + $0x74c] sm:$0xf]
      %v1070 = vld [vmem:[%s288 + $0x750] sm:$0xf]
      %v1071 = vld [vmem:[%s288 + $0x754] sm:$0xf]
      %v1072 = vld [vmem:[%s288 + $0x758] sm:$0xf]
      %v1073 = vld [vmem:[%s288 + $0x75c] sm:$0xf]
      %v1074 = vld [vmem:[%s288 + $0x760] sm:$0xf]
      %v1075 = vld [vmem:[%s288 + $0x764] sm:$0xf]
      %v1076 = vld [vmem:[%s288 + $0x768] sm:$0xf]
      %v1077 = vld [vmem:[%s288 + $0x76c] sm:$0xf]
      %v1078 = vld [vmem:[%s288 + $0x770] sm:$0xf]
      %v1079 = vld [vmem:[%s288 + $0x774] sm:$0xf]
      %v1080 = vld [vmem:[%s288 + $0x778] sm:$0xf]
      %v1081 = vld [vmem:[%s288 + $0x77c] sm:$0xf]
      %v1082 = vld [vmem:[%s288 + $0x780] sm:$0xf]
      %v1083 = vld [vmem:[%s288 + $0x784] sm:$0xf]
      %v1084 = vld [vmem:[%s288 + $0x788] sm:$0xf]
      %v1085 = vld [vmem:[%s288 + $0x78c] sm:$0xf]
      %v1086 = vld [vmem:[%s288 + $0x790] sm:$0xf]
      %v1087 = vld [vmem:[%s288 + $0x794] sm:$0xf]
      %v1088 = vld [vmem:[%s288 + $0x798] sm:$0xf]
      %v1089 = vld [vmem:[%s288 + $0x79c] sm:$0xf]
      %v1090 = vld [vmem:[%s288 + $0x7a0] sm:$0xf]
      %v1091 = vld [vmem:[%s288 + $0x7a4] sm:$0xf]
      %v1092 = vld [vmem:[%s288 + $0x7a8] sm:$0xf]
      %v1093 = vld [vmem:[%s288 + $0x7ac] sm:$0xf]
      %v1094 = vld [vmem:[%s288 + $0x7b0] sm:$0xf]
      %v1095 = vld [vmem:[%s288 + $0x7b4] sm:$0xf]
      %v1096 = vld [vmem:[%s288 + $0x7b8] sm:$0xf]
      %v1097 = vld [vmem:[%s288 + $0x7bc] sm:$0xf]
      %v1098 = vld [vmem:[%s288 + $0x7c0] sm:$0xf]
      %v1099 = vld [vmem:[%s288 + $0x7c4] sm:$0xf]
      %v1100 = vld [vmem:[%s288 + $0x7c8] sm:$0xf]
      %v1101 = vld [vmem:[%s288 + $0x7cc] sm:$0xf]
      %v1102 = vld [vmem:[%s288 + $0x7d0] sm:$0xf]
      %v1103 = vld [vmem:[%s288 + $0x7d4] sm:$0xf]
      %v1104 = vld [vmem:[%s288 + $0x7d8] sm:$0xf]
      %v1105 = vld [vmem:[%s288 + $0x7dc] sm:$0xf]
      %v1106 = vld [vmem:[%s288 + $0x7e0] sm:$0xf]
      %v1107 = vld [vmem:[%s288 + $0x7e4] sm:$0xf]
      %v1108 = vld [vmem:[%s288 + $0x7e8] sm:$0xf]
      %v1109 = vld [vmem:[%s288 + $0x7ec] sm:$0xf]
      %v1110 = vld [vmem:[%s288 + $0x7f0] sm:$0xf]
      %v1111 = vld [vmem:[%s288 + $0x7f4] sm:$0xf]
      %v1112 = vld [vmem:[%s288 + $0x7f8] sm:$0xf]
      %v1113 = vld [vmem:[%s288 + $0x7fc] sm:$0xf]
      %v1114 = vld [vmem:[%s288 + $0x800] sm:$0xf]
      %v1115 = vld [vmem:[%s288 + $0x804] sm:$0xf]
      %v1116 = vld [vmem:[%s288 + $0x808] sm:$0xf]
      %v1117 = vld [vmem:[%s288 + $0x80c] sm:$0xf]
      %v1118 = vld [vmem:[%s288 + $0x810] sm:$0xf]
      %v1119 = vld [vmem:[%s288 + $0x814] sm:$0xf]
      %v1120 = vld [vmem:[%s288 + $0x818] sm:$0xf]
      %v1121 = vld [vmem:[%s288 + $0x81c] sm:$0xf]
      %v1122 = vld [vmem:[%s288 + $0x820] sm:$0xf]
      %v1123 = vld [vmem:[%s288 + $0x824] sm:$0xf]
      %v1124 = vld [vmem:[%s288 + $0x828] sm:$0xf]
      %v1125 = vld [vmem:[%s288 + $0x82c] sm:$0xf]
      %v1126 = vld [vmem:[%s288 + $0x830] sm:$0xf]
      %v1127 = vld [vmem:[%s288 + $0x834] sm:$0xf]
      %v1128 = vld [vmem:[%s288 + $0x838] sm:$0xf]
      %v1129 = vld [vmem:[%s288 + $0x83c] sm:$0xf]
      %v1130 = vld [vmem:[%s288 + $0x840] sm:$0xf]
      %v1131 = vld [vmem:[%s288 + $0x844] sm:$0xf]
      %v1132 = vld [vmem:[%s288 + $0x848] sm:$0xf]
      %v1133 = vld [vmem:[%s288 + $0x84c] sm:$0xf]
      %v1134 = vld [vmem:[%s288 + $0x850] sm:$0xf]
      %v1135 = vld [vmem:[%s288 + $0x854] sm:$0xf]
      %v1136 = vld [vmem:[%s288 + $0x858] sm:$0xf]
      %v1137 = vld [vmem:[%s288 + $0x85c] sm:$0xf]
      %v1138 = vld [vmem:[%s288 + $0x860] sm:$0xf]
      %v1139 = vld [vmem:[%s288 + $0x864] sm:$0xf]
      %v1140 = vld [vmem:[%s288 + $0x868] sm:$0xf]
      %v1141 = vld [vmem:[%s288 + $0x86c] sm:$0xf]
      %v1142 = vld [vmem:[%s288 + $0x870] sm:$0xf]
      %v1143 = vld [vmem:[%s288 + $0x874] sm:$0xf]
      %v1144 = vld [vmem:[%s288 + $0x878] sm:$0xf]
      %v1145 = vld [vmem:[%s288 + $0x87c] sm:$0xf]
      %v1146 = vld [vmem:[%s288 + $0x880] sm:$0xf]
      %v1147 = vld [vmem:[%s288 + $0x884] sm:$0xf]
      %v1148 = vld [vmem:[%s288 + $0x888] sm:$0xf]
      %v1149 = vld [vmem:[%s288 + $0x88c] sm:$0xf]
      %v1150 = vld [vmem:[%s288 + $0x890] sm:$0xf]
      %v1151 = vld [vmem:[%s288 + $0x894] sm:$0xf]
      %v1152 = vld [vmem:[%s288 + $0x898] sm:$0xf]
      %v1153 = vld [vmem:[%s288 + $0x89c] sm:$0xf]
      %v1154 = vld [vmem:[%s288 + $0x8a0] sm:$0xf]
      %v1155 = vld [vmem:[%s288 + $0x8a4] sm:$0xf]
      %v1156 = vld [vmem:[%s288 + $0x8a8] sm:$0xf]
      %v1157 = vld [vmem:[%s288 + $0x8ac] sm:$0xf]
      %v1158 = vld [vmem:[%s288 + $0x8b0] sm:$0xf]
      %v1159 = vld [vmem:[%s288 + $0x8b4] sm:$0xf]
      %v1160 = vld [vmem:[%s288 + $0x8b8] sm:$0xf]
      %v1161 = vld [vmem:[%s288 + $0x8bc] sm:$0xf]
      %v1162 = vld [vmem:[%s288 + $0x8c0] sm:$0xf]
      %v1163 = vld [vmem:[%s288 + $0x8c4] sm:$0xf]
      %v1164 = vld [vmem:[%s288 + $0x8c8] sm:$0xf]
      %v1165 = vld [vmem:[%s288 + $0x8cc] sm:$0xf]
      %v1166 = vld [vmem:[%s288 + $0x8d0] sm:$0xf]
      %v1167 = vld [vmem:[%s288 + $0x8d4] sm:$0xf]
      %v1168 = vld [vmem:[%s288 + $0x8d8] sm:$0xf]
      %v1169 = vld [vmem:[%s288 + $0x8dc] sm:$0xf]
      %v1170 = vld [vmem:[%s288 + $0x8e0] sm:$0xf]
      %v1171 = vld [vmem:[%s288 + $0x8e4] sm:$0xf]
      %v1172 = vld [vmem:[%s288 + $0x8e8] sm:$0xf]
      %v1173 = vld [vmem:[%s288 + $0x8ec] sm:$0xf]
      %v1174 = vld [vmem:[%s288 + $0x8f0] sm:$0xf]
      %v1175 = vld [vmem:[%s288 + $0x8f4] sm:$0xf]
      %v1176 = vld [vmem:[%s288 + $0x8f8] sm:$0xf]
      %v1177 = vld [vmem:[%s288 + $0x8fc] sm:$0xf]
      %v1178 = vld [vmem:[%s288 + $0x900] sm:$0xf]
      %v1179 = vld [vmem:[%s288 + $0x904] sm:$0xf]
      %v1180 = vld [vmem:[%s288 + $0x908] sm:$0xf]
      %v1181 = vld [vmem:[%s288 + $0x90c] sm:$0xf]
      %v1182 = vld [vmem:[%s288 + $0x910] sm:$0xf]
      %v1183 = vld [vmem:[%s288 + $0x914] sm:$0xf]
      %v1184 = vld [vmem:[%s288 + $0x918] sm:$0xf]
      %v1185 = vld [vmem:[%s288 + $0x91c] sm:$0xf]
      %v1186 = vld [vmem:[%s288 + $0x920] sm:$0xf]
      %v1187 = vld [vmem:[%s288 + $0x924] sm:$0xf]
      %v1188 = vld [vmem:[%s288 + $0x928] sm:$0xf]
      %v1189 = vld [vmem:[%s288 + $0x92c] sm:$0xf]
      %v1190 = vld [vmem:[%s288 + $0x930] sm:$0xf]
      %v1191 = vld [vmem:[%s288 + $0x934] sm:$0xf]
      %v1192 = vld [vmem:[%s288 + $0x938] sm:$0xf]
      %v1193 = vld [vmem:[%s288 + $0x93c] sm:$0xf]
      %v1194 = vld [vmem:[%s288 + $0x940] sm:$0xf]
      %v1195 = vld [vmem:[%s288 + $0x944] sm:$0xf]
      %v1196 = vld [vmem:[%s288 + $0x948] sm:$0xf]
      %v1197 = vld [vmem:[%s288 + $0x94c] sm:$0xf]
      %v1198 = vld [vmem:[%s288 + $0x950] sm:$0xf]
      %v1199 = vld [vmem:[%s288 + $0x954] sm:$0xf]
      %v1200 = vld [vmem:[%s288 + $0x958] sm:$0xf]
      %v1201 = vld [vmem:[%s288 + $0x95c] sm:$0xf]
      %v1202 = vld [vmem:[%s288 + $0x960] sm:$0xf]
      %v1203 = vld [vmem:[%s288 + $0x964] sm:$0xf]
      %v1204 = vld [vmem:[%s288 + $0x968] sm:$0xf]
      %v1205 = vld [vmem:[%s288 + $0x96c] sm:$0xf]
      %v1206 = vld [vmem:[%s288 + $0x970] sm:$0xf]
      %v1207 = vld [vmem:[%s288 + $0x974] sm:$0xf]
      %v1208 = vld [vmem:[%s288 + $0x978] sm:$0xf]
      %v1209 = vld [vmem:[%s288 + $0x97c] sm:$0xf]
      %v1210 = vld [vmem:[%s288 + $0x980] sm:$0xf]
      %v1211 = vld [vmem:[%s288 + $0x984] sm:$0xf]
      %v1212 = vld [vmem:[%s288 + $0x988] sm:$0xf]
      %v1213 = vld [vmem:[%s288 + $0x98c] sm:$0xf]
      %v1214 = vld [vmem:[%s288 + $0x990] sm:$0xf]
      %v1215 = vld [vmem:[%s288 + $0x994] sm:$0xf]
      %v1216 = vld [vmem:[%s288 + $0x998] sm:$0xf]
      %v1217 = vld [vmem:[%s288 + $0x99c] sm:$0xf]
      %v1218 = vld [vmem:[%s288 + $0x9a0] sm:$0xf]
      %v1219 = vld [vmem:[%s288 + $0x9a4] sm:$0xf]
      %v1220 = vld [vmem:[%s288 + $0x9a8] sm:$0xf]
      %v1221 = vld [vmem:[%s288 + $0x9ac] sm:$0xf]
      %v1222 = vld [vmem:[%s288 + $0x9b0] sm:$0xf]
      %v1223 = vld [vmem:[%s288 + $0x9b4] sm:$0xf]
      %v1224 = vld [vmem:[%s288 + $0x9b8] sm:$0xf]
      %v1225 = vld [vmem:[%s288 + $0x9bc] sm:$0xf]
      %v1226 = vld [vmem:[%s288 + $0x9c0] sm:$0xf]
      %v1227 = vld [vmem:[%s288 + $0x9c4] sm:$0xf]
      %v1228 = vld [vmem:[%s288 + $0x9c8] sm:$0xf]
      %v1229 = vld [vmem:[%s288 + $0x9cc] sm:$0xf]
      %v1230 = vld [vmem:[%s288 + $0x9d0] sm:$0xf]
      %v1231 = vld [vmem:[%s288 + $0x9d4] sm:$0xf]
      %v1232 = vld [vmem:[%s288 + $0x9d8] sm:$0xf]
      %v1233 = vld [vmem:[%s288 + $0x9dc] sm:$0xf]
      %v1234 = vld [vmem:[%s288 + $0x9e0] sm:$0xf]
      %v1235 = vld [vmem:[%s288 + $0x9e4] sm:$0xf]
      %v1236 = vld [vmem:[%s288 + $0x9e8] sm:$0xf]
      %v1237 = vld [vmem:[%s288 + $0x9ec] sm:$0xf]
      %v1238 = vld [vmem:[%s288 + $0x9f0] sm:$0xf]
      %v1239 = vld [vmem:[%s288 + $0x9f4] sm:$0xf]
      %v1240 = vld [vmem:[%s288 + $0x9f8] sm:$0xf]
      %v1241 = vld [vmem:[%s288 + $0x9fc] sm:$0xf]
      %v1242 = vld [vmem:[%s288 + $0xa00] sm:$0xf]
      %v1243 = vld [vmem:[%s288 + $0xa04] sm:$0xf]
      %v1244 = vld [vmem:[%s288 + $0xa08] sm:$0xf]
      %v1245 = vld [vmem:[%s288 + $0xa0c] sm:$0xf]
      %v1246 = vld [vmem:[%s288 + $0xa10] sm:$0xf]
      %v1247 = vld [vmem:[%s288 + $0xa14] sm:$0xf]
      %v1248 = vld [vmem:[%s288 + $0xa18] sm:$0xf]
      %v1249 = vld [vmem:[%s288 + $0xa1c] sm:$0xf]
      %v1250 = vld [vmem:[%s288 + $0xa20] sm:$0xf]
      %v1251 = vld [vmem:[%s288 + $0xa24] sm:$0xf]
      %v1252 = vld [vmem:[%s288 + $0xa28] sm:$0xf]
      %v1253 = vld [vmem:[%s288 + $0xa2c] sm:$0xf]
      %v1254 = vld [vmem:[%s288 + $0xa30] sm:$0xf]
      %v1255 = vld [vmem:[%s288 + $0xa34] sm:$0xf]
      %v1256 = vld [vmem:[%s288 + $0xa38] sm:$0xf]
      %v1257 = vld [vmem:[%s288 + $0xa3c] sm:$0xf]
      %v1258 = vld [vmem:[%s288 + $0xa40] sm:$0xf]
      %v1259 = vld [vmem:[%s288 + $0xa44] sm:$0xf]
      %v1260 = vld [vmem:[%s288 + $0xa48] sm:$0xf]
      %v1261 = vld [vmem:[%s288 + $0xa4c] sm:$0xf]
      %v1262 = vld [vmem:[%s288 + $0xa50] sm:$0xf]
      %v1263 = vld [vmem:[%s288 + $0xa54] sm:$0xf]
      %v1264 = vld [vmem:[%s288 + $0xa58] sm:$0xf]
      %v1265 = vld [vmem:[%s288 + $0xa5c] sm:$0xf]
      %v1266 = vld [vmem:[%s288 + $0xa60] sm:$0xf]
      %v1267 = vld [vmem:[%s288 + $0xa64] sm:$0xf]
      %v1268 = vld [vmem:[%s288 + $0xa68] sm:$0xf]
      %v1269 = vld [vmem:[%s288 + $0xa6c] sm:$0xf]
      %v1270 = vld [vmem:[%s288 + $0xa70] sm:$0xf]
      %v1271 = vld [vmem:[%s288 + $0xa74] sm:$0xf]
      %v1272 = vld [vmem:[%s288 + $0xa78] sm:$0xf]
      %v1273 = vld [vmem:[%s288 + $0xa7c] sm:$0xf]
      %v1274 = vld [vmem:[%s288 + $0xa80] sm:$0xf]
      %v1275 = vld [vmem:[%s288 + $0xa84] sm:$0xf]
      %v1276 = vld [vmem:[%s288 + $0xa88] sm:$0xf]
      %v1277 = vld [vmem:[%s288 + $0xa8c] sm:$0xf]
      %v1278 = vld [vmem:[%s288 + $0xa90] sm:$0xf]
      %v1279 = vld [vmem:[%s288 + $0xa94] sm:$0xf]
      %v1280 = vld [vmem:[%s288 + $0xa98] sm:$0xf]
      %v1281 = vld [vmem:[%s288 + $0xa9c] sm:$0xf]
      %v1282 = vld [vmem:[%s288 + $0xaa0] sm:$0xf]
      %v1283 = vld [vmem:[%s288 + $0xaa4] sm:$0xf]
      %v1284 = vld [vmem:[%s288 + $0xaa8] sm:$0xf]
      %v1285 = vld [vmem:[%s288 + $0xaac] sm:$0xf]
      %v1286 = vld [vmem:[%s288 + $0xab0] sm:$0xf]
      %v1287 = vld [vmem:[%s288 + $0xab4] sm:$0xf]
      %v1288 = vld [vmem:[%s288 + $0xab8] sm:$0xf]
      %v1289 = vld [vmem:[%s288 + $0xabc] sm:$0xf]
      %v1290 = vld [vmem:[%s288 + $0xac0] sm:$0xf]
      %v1291 = vld [vmem:[%s288 + $0xac4] sm:$0xf]
      %v1292 = vld [vmem:[%s288 + $0xac8] sm:$0xf]
      %v1293 = vld [vmem:[%s288 + $0xacc] sm:$0xf]
      %v1294 = vld [vmem:[%s288 + $0xad0] sm:$0xf]
      %v1295 = vld [vmem:[%s288 + $0xad4] sm:$0xf]
      %v1296 = vld [vmem:[%s288 + $0xad8] sm:$0xf]
      %v1297 = vld [vmem:[%s288 + $0xadc] sm:$0xf]
      %v1298 = vld [vmem:[%s288 + $0xae0] sm:$0xf]
      %v1299 = vld [vmem:[%s288 + $0xae4] sm:$0xf]
      %v1300 = vld [vmem:[%s288 + $0xae8] sm:$0xf]
      %v1301 = vld [vmem:[%s288 + $0xaec] sm:$0xf]
      %v1302 = vld [vmem:[%s288 + $0xaf0] sm:$0xf]
      %v1303 = vld [vmem:[%s288 + $0xaf4] sm:$0xf]
      %v1304 = vld [vmem:[%s288 + $0xaf8] sm:$0xf]
      %v1305 = vld [vmem:[%s288 + $0xafc] sm:$0xf]
      %v1306 = vld [vmem:[%s288 + $0xb00] sm:$0xf]
      %v1307 = vld [vmem:[%s288 + $0xb04] sm:$0xf]
      %v1308 = vld [vmem:[%s288 + $0xb08] sm:$0xf]
      %v1309 = vld [vmem:[%s288 + $0xb0c] sm:$0xf]
      %v1310 = vld [vmem:[%s288 + $0xb10] sm:$0xf]
      %v1311 = vld [vmem:[%s288 + $0xb14] sm:$0xf]
      %v1312 = vld [vmem:[%s288 + $0xb18] sm:$0xf]
      %v1313 = vld [vmem:[%s288 + $0xb1c] sm:$0xf]
      %v1314 = vld [vmem:[%s288 + $0xb20] sm:$0xf]
      %v1315 = vld [vmem:[%s288 + $0xb24] sm:$0xf]
      %v1316 = vld [vmem:[%s288 + $0xb28] sm:$0xf]
      %v1317 = vld [vmem:[%s288 + $0xb2c] sm:$0xf]
      %v1318 = vld [vmem:[%s288 + $0xb30] sm:$0xf]
      %v1319 = vld [vmem:[%s288 + $0xb34] sm:$0xf]
      %v1320 = vld [vmem:[%s288 + $0xb38] sm:$0xf]
      %v1321 = vld [vmem:[%s288 + $0xb3c] sm:$0xf]
      %v1322 = vld [vmem:[%s288 + $0xb40] sm:$0xf]
      %v1323 = vld [vmem:[%s288 + $0xb44] sm:$0xf]
      %v1324 = vld [vmem:[%s288 + $0xb48] sm:$0xf]
      %v1325 = vld [vmem:[%s288 + $0xb4c] sm:$0xf]
      %v1326 = vld [vmem:[%s288 + $0xb50] sm:$0xf]
      %v1327 = vld [vmem:[%s288 + $0xb54] sm:$0xf]
      %v1328 = vld [vmem:[%s288 + $0xb58] sm:$0xf]
      %v1329 = vld [vmem:[%s288 + $0xb5c] sm:$0xf]
      %v1330 = vld [vmem:[%s288 + $0xb60] sm:$0xf]
      %v1331 = vld [vmem:[%s288 + $0xb64] sm:$0xf]
      %v1332 = vld [vmem:[%s288 + $0xb68] sm:$0xf]
      %v1333 = vld [vmem:[%s288 + $0xb6c] sm:$0xf]
      %v1334 = vld [vmem:[%s288 + $0xb70] sm:$0xf]
      %v1335 = vld [vmem:[%s288 + $0xb74] sm:$0xf]
      %v1336 = vld [vmem:[%s288 + $0xb78] sm:$0xf]
      %v1337 = vld [vmem:[%s288 + $0xb7c] sm:$0xf]
      %v1338 = vld [vmem:[%s288 + $0xb80] sm:$0xf]
      %v1339 = vld [vmem:[%s288 + $0xb84] sm:$0xf]
      %v1340 = vld [vmem:[%s288 + $0xb88] sm:$0xf]
      %v1341 = vld [vmem:[%s288 + $0xb8c] sm:$0xf]
      %v1342 = vld [vmem:[%s288 + $0xb90] sm:$0xf]
      %v1343 = vld [vmem:[%s288 + $0xb94] sm:$0xf]
      %v1344 = vld [vmem:[%s288 + $0xb98] sm:$0xf]
      %v1345 = vld [vmem:[%s288 + $0xb9c] sm:$0xf]
      %v1346 = vld [vmem:[%s288 + $0xba0] sm:$0xf]
      %v1347 = vld [vmem:[%s288 + $0xba4] sm:$0xf]
      %v1348 = vld [vmem:[%s288 + $0xba8] sm:$0xf]
      %v1349 = vld [vmem:[%s288 + $0xbac] sm:$0xf]
      %v1350 = vld [vmem:[%s288 + $0xbb0] sm:$0xf]
      %v1351 = vld [vmem:[%s288 + $0xbb4] sm:$0xf]
      %v1352 = vld [vmem:[%s288 + $0xbb8] sm:$0xf]
      %v1353 = vld [vmem:[%s288 + $0xbbc] sm:$0xf]
      %v1354 = vld [vmem:[%s288 + $0xbc0] sm:$0xf]
      %v1355 = vld [vmem:[%s288 + $0xbc4] sm:$0xf]
      %v1356 = vld [vmem:[%s288 + $0xbc8] sm:$0xf]
      %v1357 = vld [vmem:[%s288 + $0xbcc] sm:$0xf]
      %v1358 = vld [vmem:[%s288 + $0xbd0] sm:$0xf]
      %v1359 = vld [vmem:[%s288 + $0xbd4] sm:$0xf]
      %v1360 = vld [vmem:[%s288 + $0xbd8] sm:$0xf]
      %v1361 = vld [vmem:[%s288 + $0xbdc] sm:$0xf]
      %v1362 = vld [vmem:[%s288 + $0xbe0] sm:$0xf]
      %v1363 = vld [vmem:[%s288 + $0xbe4] sm:$0xf]
      %v1364 = vld [vmem:[%s288 + $0xbe8] sm:$0xf]
      %v1365 = vld [vmem:[%s288 + $0xbec] sm:$0xf]
      %v1366 = vld [vmem:[%s288 + $0xbf0] sm:$0xf]
      %v1367 = vld [vmem:[%s288 + $0xbf4] sm:$0xf]
      %v1368 = vld [vmem:[%s288 + $0xbf8] sm:$0xf]
      %v1369 = vld [vmem:[%s288 + $0xbfc] sm:$0xf]
      %v1370 = vld [vmem:[%s288 + $0xc00] sm:$0xf]
      %v1371 = vld [vmem:[%s288 + $0xc04] sm:$0xf]
      %v1372 = vld [vmem:[%s288 + $0xc08] sm:$0xf]
      %v1373 = vld [vmem:[%s288 + $0xc0c] sm:$0xf]
      %v1374 = vld [vmem:[%s288 + $0xc10] sm:$0xf]
      %v1375 = vld [vmem:[%s288 + $0xc14] sm:$0xf]
      %v1376 = vld [vmem:[%s288 + $0xc18] sm:$0xf]
      %v1377 = vld [vmem:[%s288 + $0xc1c] sm:$0xf]
      %v1378 = vld [vmem:[%s288 + $0xc20] sm:$0xf]
      %v1379 = vld [vmem:[%s288 + $0xc24] sm:$0xf]
      %v1380 = vld [vmem:[%s288 + $0xc28] sm:$0xf]
      %v1381 = vld [vmem:[%s288 + $0xc2c] sm:$0xf]
      %v1382 = vld [vmem:[%s288 + $0xc30] sm:$0xf]
      %v1383 = vld [vmem:[%s288 + $0xc34] sm:$0xf]
      %v1384 = vld [vmem:[%s288 + $0xc38] sm:$0xf]
      %v1385 = vld [vmem:[%s288 + $0xc3c] sm:$0xf]
      %v1386 = vld [vmem:[%s288 + $0xc40] sm:$0xf]
      %v1387 = vld [vmem:[%s288 + $0xc44] sm:$0xf]
      %v1388 = vld [vmem:[%s288 + $0xc48] sm:$0xf]
      %v1389 = vld [vmem:[%s288 + $0xc4c] sm:$0xf]
      %v1390 = vld [vmem:[%s288 + $0xc50] sm:$0xf]
      %v1391 = vld [vmem:[%s288 + $0xc54] sm:$0xf]
      %v1392 = vld [vmem:[%s288 + $0xc58] sm:$0xf]
      %v1393 = vld [vmem:[%s288 + $0xc5c] sm:$0xf]
      %v1394 = vld [vmem:[%s288 + $0xc60] sm:$0xf]
      %v1395 = vld [vmem:[%s288 + $0xc64] sm:$0xf]
      %v1396 = vld [vmem:[%s288 + $0xc68] sm:$0xf]
      %v1397 = vld [vmem:[%s288 + $0xc6c] sm:$0xf]
      %v1398 = vld [vmem:[%s288 + $0xc70] sm:$0xf]
      %v1399 = vld [vmem:[%s288 + $0xc74] sm:$0xf]
      %v1400 = vld [vmem:[%s288 + $0xc78] sm:$0xf]
      %v1401 = vld [vmem:[%s288 + $0xc7c] sm:$0xf]
      %v1402 = vld [vmem:[%s288 + $0xc80] sm:$0xf]
      %v1403 = vld [vmem:[%s288 + $0xc84] sm:$0xf]
      %v1404 = vld [vmem:[%s288 + $0xc88] sm:$0xf]
      %v1405 = vld [vmem:[%s288 + $0xc8c] sm:$0xf]
      %v1406 = vld [vmem:[%s288 + $0xc90] sm:$0xf]
      %v1407 = vld [vmem:[%s288 + $0xc94] sm:$0xf]
      %v1408 = vld [vmem:[%s288 + $0xc98] sm:$0xf]
      %v1409 = vld [vmem:[%s288 + $0xc9c] sm:$0xf]
      %v1410 = vld [vmem:[%s288 + $0xca0] sm:$0xf]
      %v1411 = vld [vmem:[%s288 + $0xca4] sm:$0xf]
      %v1412 = vld [vmem:[%s288 + $0xca8] sm:$0xf]
      %v1413 = vld [vmem:[%s288 + $0xcac] sm:$0xf]
      %v1414 = vld [vmem:[%s288 + $0xcb0] sm:$0xf]
      %v1415 = vld [vmem:[%s288 + $0xcb4] sm:$0xf]
      %v1416 = vld [vmem:[%s288 + $0xcb8] sm:$0xf]
      %v1417 = vld [vmem:[%s288 + $0xcbc] sm:$0xf]
      %v1418 = vld [vmem:[%s288 + $0xcc0] sm:$0xf]
      %v1419 = vld [vmem:[%s288 + $0xcc4] sm:$0xf]
      %v1420 = vld [vmem:[%s288 + $0xcc8] sm:$0xf]
      %v1421 = vld [vmem:[%s288 + $0xccc] sm:$0xf]
      %v1422 = vld [vmem:[%s288 + $0xcd0] sm:$0xf]
      %v1423 = vld [vmem:[%s288 + $0xcd4] sm:$0xf]
      %v1424 = vld [vmem:[%s288 + $0xcd8] sm:$0xf]
      %v1425 = vld [vmem:[%s288 + $0xcdc] sm:$0xf]
      %v1426 = vld [vmem:[%s288 + $0xce0] sm:$0xf]
      %v1427 = vld [vmem:[%s288 + $0xce4] sm:$0xf]
      %v1428 = vld [vmem:[%s288 + $0xce8] sm:$0xf]
      %v1429 = vld [vmem:[%s288 + $0xcec] sm:$0xf]
      %v1430 = vld [vmem:[%s288 + $0xcf0] sm:$0xf]
      %v1431 = vld [vmem:[%s288 + $0xcf4] sm:$0xf]
      %v1432 = vld [vmem:[%s288 + $0xcf8] sm:$0xf]
      %v1433 = vld [vmem:[%s288 + $0xcfc] sm:$0xf]
      %v1434 = vld [vmem:[%s288 + $0xd00] sm:$0xf]
      %v1435 = vld [vmem:[%s288 + $0xd04] sm:$0xf]
      %v1436 = vld [vmem:[%s288 + $0xd08] sm:$0xf]
      %v1437 = vld [vmem:[%s288 + $0xd0c] sm:$0xf]
      %v1438 = vld [vmem:[%s288 + $0xd10] sm:$0xf]
      %v1439 = vld [vmem:[%s288 + $0xd14] sm:$0xf]
      %v1440 = vld [vmem:[%s288 + $0xd18] sm:$0xf]
      %v1441 = vld [vmem:[%s288 + $0xd1c] sm:$0xf]
      %v1442 = vld [vmem:[%s288 + $0xd20] sm:$0xf]
      %v1443 = vld [vmem:[%s288 + $0xd24] sm:$0xf]
      %v1444 = vld [vmem:[%s288 + $0xd28] sm:$0xf]
      %v1445 = vld [vmem:[%s288 + $0xd2c] sm:$0xf]
      %v1446 = vld [vmem:[%s288 + $0xd30] sm:$0xf]
      %v1447 = vld [vmem:[%s288 + $0xd34] sm:$0xf]
      %v1448 = vld [vmem:[%s288 + $0xd38] sm:$0xf]
      %v1449 = vld [vmem:[%s288 + $0xd3c] sm:$0xf]
      %v1450 = vld [vmem:[%s288 + $0xd40] sm:$0xf]
      %v1451 = vld [vmem:[%s288 + $0xd44] sm:$0xf]
      %v1452 = vld [vmem:[%s288 + $0xd48] sm:$0xf]
      %v1453 = vld [vmem:[%s288 + $0xd4c] sm:$0xf]
      %v1454 = vld [vmem:[%s288 + $0xd50] sm:$0xf]
      %v1455 = vld [vmem:[%s288 + $0xd54] sm:$0xf]
      %v1456 = vld [vmem:[%s288 + $0xd58] sm:$0xf]
      %v1457 = vld [vmem:[%s288 + $0xd5c] sm:$0xf]
      %v1458 = vld [vmem:[%s288 + $0xd60] sm:$0xf]
      %v1459 = vld [vmem:[%s288 + $0xd64] sm:$0xf]
      %v1460 = vld [vmem:[%s288 + $0xd68] sm:$0xf]
      %v1461 = vld [vmem:[%s288 + $0xd6c] sm:$0xf]
      %v1462 = vld [vmem:[%s288 + $0xd70] sm:$0xf]
      %v1463 = vld [vmem:[%s288 + $0xd74] sm:$0xf]
      %v1464 = vld [vmem:[%s288 + $0xd78] sm:$0xf]
      %v1465 = vld [vmem:[%s288 + $0xd7c] sm:$0xf]
      %v1466 = vld [vmem:[%s288 + $0xd80] sm:$0xf]
      %v1467 = vld [vmem:[%s288 + $0xd84] sm:$0xf]
      %v1468 = vld [vmem:[%s288 + $0xd88] sm:$0xf]
      %v1469 = vld [vmem:[%s288 + $0xd8c] sm:$0xf]
      %v1470 = vld [vmem:[%s288 + $0xd90] sm:$0xf]
      %v1471 = vld [vmem:[%s288 + $0xd94] sm:$0xf]
      %v1472 = vld [vmem:[%s288 + $0xd98] sm:$0xf]
      %v1473 = vld [vmem:[%s288 + $0xd9c] sm:$0xf]
      %v1474 = vld [vmem:[%s288 + $0xda0] sm:$0xf]
      %v1475 = vld [vmem:[%s288 + $0xda4] sm:$0xf]
      %v1476 = vld [vmem:[%s288 + $0xda8] sm:$0xf]
      %v1477 = vld [vmem:[%s288 + $0xdac] sm:$0xf]
      %v1478 = vld [vmem:[%s288 + $0xdb0] sm:$0xf]
      %v1479 = vld [vmem:[%s288 + $0xdb4] sm:$0xf]
      %v1480 = vld [vmem:[%s288 + $0xdb8] sm:$0xf]
      %v1481 = vld [vmem:[%s288 + $0xdbc] sm:$0xf]
      %v1482 = vld [vmem:[%s288 + $0xdc0] sm:$0xf]
      %v1483 = vld [vmem:[%s288 + $0xdc4] sm:$0xf]
      %v1484 = vld [vmem:[%s288 + $0xdc8] sm:$0xf]
      %v1485 = vld [vmem:[%s288 + $0xdcc] sm:$0xf]
      %v1486 = vld [vmem:[%s288 + $0xdd0] sm:$0xf]
      %v1487 = vld [vmem:[%s288 + $0xdd4] sm:$0xf]
      %v1488 = vld [vmem:[%s288 + $0xdd8] sm:$0xf]
      %v1489 = vld [vmem:[%s288 + $0xddc] sm:$0xf]
      %v1490 = vld [vmem:[%s288 + $0xde0] sm:$0xf]
      %v1491 = vld [vmem:[%s288 + $0xde4] sm:$0xf]
      %v1492 = vld [vmem:[%s288 + $0xde8] sm:$0xf]
      %v1493 = vld [vmem:[%s288 + $0xdec] sm:$0xf]
      %v1494 = vld [vmem:[%s288 + $0xdf0] sm:$0xf]
      %v1495 = vld [vmem:[%s288 + $0xdf4] sm:$0xf]
      %v1496 = vld [vmem:[%s288 + $0xdf8] sm:$0xf]
      %v1497 = vld [vmem:[%s288 + $0xdfc] sm:$0xf]
      %v1498 = vld [vmem:[%s288 + $0xe00] sm:$0xf]
      %v1499 = vld [vmem:[%s288 + $0xe04] sm:$0xf]
      %v1500 = vld [vmem:[%s288 + $0xe08] sm:$0xf]
      %v1501 = vld [vmem:[%s288 + $0xe0c] sm:$0xf]
      %v1502 = vld [vmem:[%s288 + $0xe10] sm:$0xf]
      %v1503 = vld [vmem:[%s288 + $0xe14] sm:$0xf]
      %v1504 = vld [vmem:[%s288 + $0xe18] sm:$0xf]
      %v1505 = vld [vmem:[%s288 + $0xe1c] sm:$0xf]
      %v1506 = vld [vmem:[%s288 + $0xe20] sm:$0xf]
      %v1507 = vld [vmem:[%s288 + $0xe24] sm:$0xf]
      %v1508 = vld [vmem:[%s288 + $0xe28] sm:$0xf]
      %v1509 = vld [vmem:[%s288 + $0xe2c] sm:$0xf]
      %v1510 = vld [vmem:[%s288 + $0xe30] sm:$0xf]
      %v1511 = vld [vmem:[%s288 + $0xe34] sm:$0xf]
      %v1512 = vld [vmem:[%s288 + $0xe38] sm:$0xf]
      %v1513 = vld [vmem:[%s288 + $0xe3c] sm:$0xf]
      %v1514 = vld [vmem:[%s288 + $0xe40] sm:$0xf]
      %v1515 = vld [vmem:[%s288 + $0xe44] sm:$0xf]
      %v1516 = vld [vmem:[%s288 + $0xe48] sm:$0xf]
      %v1517 = vld [vmem:[%s288 + $0xe4c] sm:$0xf]
      %v1518 = vld [vmem:[%s288 + $0xe50] sm:$0xf]
      %v1519 = vld [vmem:[%s288 + $0xe54] sm:$0xf]
      %v1520 = vld [vmem:[%s288 + $0xe58] sm:$0xf]
      %v1521 = vld [vmem:[%s288 + $0xe5c] sm:$0xf]
      %v1522 = vld [vmem:[%s288 + $0xe60] sm:$0xf]
      %v1523 = vld [vmem:[%s288 + $0xe64] sm:$0xf]
      %v1524 = vld [vmem:[%s288 + $0xe68] sm:$0xf]
      %v1525 = vld [vmem:[%s288 + $0xe6c] sm:$0xf]
      %v1526 = vld [vmem:[%s288 + $0xe70] sm:$0xf]
      %v1527 = vld [vmem:[%s288 + $0xe74] sm:$0xf]
      %v1528 = vld [vmem:[%s288 + $0xe78] sm:$0xf]
      %v1529 = vld [vmem:[%s288 + $0xe7c] sm:$0xf]
      %v1530 = vld [vmem:[%s288 + $0xe80] sm:$0xf]
      %v1531 = vld [vmem:[%s288 + $0xe84] sm:$0xf]
      %v1532 = vld [vmem:[%s288 + $0xe88] sm:$0xf]
      %v1533 = vld [vmem:[%s288 + $0xe8c] sm:$0xf]
      %v1534 = vld [vmem:[%s288 + $0xe90] sm:$0xf]
      %v1535 = vld [vmem:[%s288 + $0xe94] sm:$0xf]
      %v1536 = vld [vmem:[%s288 + $0xe98] sm:$0xf]
      %v1537 = vld [vmem:[%s288 + $0xe9c] sm:$0xf]
      %v1538 = vld [vmem:[%s288 + $0xea0] sm:$0xf]
      %v1539 = vld [vmem:[%s288 + $0xea4] sm:$0xf]
      %v1540 = vld [vmem:[%s288 + $0xea8] sm:$0xf]
      %v1541 = vld [vmem:[%s288 + $0xeac] sm:$0xf]
      %v1542 = vld [vmem:[%s288 + $0xeb0] sm:$0xf]
      %v1543 = vld [vmem:[%s288 + $0xeb4] sm:$0xf]
      %v1544 = vld [vmem:[%s288 + $0xeb8] sm:$0xf]
      %v1545 = vld [vmem:[%s288 + $0xebc] sm:$0xf]
      %v1546 = vld [vmem:[%s288 + $0xec0] sm:$0xf]
      %v1547 = vld [vmem:[%s288 + $0xec4] sm:$0xf]
      %v1548 = vld [vmem:[%s288 + $0xec8] sm:$0xf]
      %v1549 = vld [vmem:[%s288 + $0xecc] sm:$0xf]
      %v1550 = vld [vmem:[%s288 + $0xed0] sm:$0xf]
      %v1551 = vld [vmem:[%s288 + $0xed4] sm:$0xf]
      %v1552 = vld [vmem:[%s288 + $0xed8] sm:$0xf]
      %v1553 = vld [vmem:[%s288 + $0xedc] sm:$0xf]
      %v1554 = vld [vmem:[%s288 + $0xee0] sm:$0xf]
      %v1555 = vld [vmem:[%s288 + $0xee4] sm:$0xf]
      %v1556 = vld [vmem:[%s288 + $0xee8] sm:$0xf]
      %v1557 = vld [vmem:[%s288 + $0xeec] sm:$0xf]
      %v1558 = vld [vmem:[%s288 + $0xef0] sm:$0xf]
      %v1559 = vld [vmem:[%s288 + $0xef4] sm:$0xf]
      %v1560 = vld [vmem:[%s288 + $0xef8] sm:$0xf]
      %v1561 = vld [vmem:[%s288 + $0xefc] sm:$0xf]
      %v1562 = vld [vmem:[%s288 + $0xf00] sm:$0xf]
      %v1563 = vld [vmem:[%s288 + $0xf04] sm:$0xf]
      %v1564 = vld [vmem:[%s288 + $0xf08] sm:$0xf]
      %v1565 = vld [vmem:[%s288 + $0xf0c] sm:$0xf]
      %v1566 = vld [vmem:[%s288 + $0xf10] sm:$0xf]
      %v1567 = vld [vmem:[%s288 + $0xf14] sm:$0xf]
      %v1568 = vld [vmem:[%s288 + $0xf18] sm:$0xf]
      %v1569 = vld [vmem:[%s288 + $0xf1c] sm:$0xf]
      %v1570 = vld [vmem:[%s288 + $0xf20] sm:$0xf]
      %v1571 = vld [vmem:[%s288 + $0xf24] sm:$0xf]
      %v1572 = vld [vmem:[%s288 + $0xf28] sm:$0xf]
      %v1573 = vld [vmem:[%s288 + $0xf2c] sm:$0xf]
      %v1574 = vld [vmem:[%s288 + $0xf30] sm:$0xf]
      %v1575 = vld [vmem:[%s288 + $0xf34] sm:$0xf]
      %v1576 = vld [vmem:[%s288 + $0xf38] sm:$0xf]
      %v1577 = vld [vmem:[%s288 + $0xf3c] sm:$0xf]
      %v1578 = vld [vmem:[%s288 + $0xf40] sm:$0xf]
      %v1579 = vld [vmem:[%s288 + $0xf44] sm:$0xf]
      %v1580 = vld [vmem:[%s288 + $0xf48] sm:$0xf]
      %v1581 = vld [vmem:[%s288 + $0xf4c] sm:$0xf]
      %v1582 = vld [vmem:[%s288 + $0xf50] sm:$0xf]
      %v1583 = vld [vmem:[%s288 + $0xf54] sm:$0xf]
      %v1584 = vld [vmem:[%s288 + $0xf58] sm:$0xf]
      %v1585 = vld [vmem:[%s288 + $0xf5c] sm:$0xf]
      %v1586 = vld [vmem:[%s288 + $0xf60] sm:$0xf]
      %v1587 = vld [vmem:[%s288 + $0xf64] sm:$0xf]
      %v1588 = vld [vmem:[%s288 + $0xf68] sm:$0xf]
      %v1589 = vld [vmem:[%s288 + $0xf6c] sm:$0xf]
      %v1590 = vld [vmem:[%s288 + $0xf70] sm:$0xf]
      %v1591 = vld [vmem:[%s288 + $0xf74] sm:$0xf]
      %v1592 = vld [vmem:[%s288 + $0xf78] sm:$0xf]
      %v1593 = vld [vmem:[%s288 + $0xf7c] sm:$0xf]
      %v1594 = vld [vmem:[%s288 + $0xf80] sm:$0xf]
      %v1595 = vld [vmem:[%s288 + $0xf84] sm:$0xf]
      %v1596 = vld [vmem:[%s288 + $0xf88] sm:$0xf]
      %v1597 = vld [vmem:[%s288 + $0xf8c] sm:$0xf]
      %v1598 = vld [vmem:[%s288 + $0xf90] sm:$0xf]
      %v1599 = vld [vmem:[%s288 + $0xf94] sm:$0xf]
      %v1600 = vld [vmem:[%s288 + $0xf98] sm:$0xf]
      %v1601 = vld [vmem:[%s288 + $0xf9c] sm:$0xf]
      %v1602 = vld [vmem:[%s288 + $0xfa0] sm:$0xf]
      %v1603 = vld [vmem:[%s288 + $0xfa4] sm:$0xf]
      %v1604 = vld [vmem:[%s288 + $0xfa8] sm:$0xf]
      %v1605 = vld [vmem:[%s288 + $0xfac] sm:$0xf]
      %v1606 = vld [vmem:[%s288 + $0xfb0] sm:$0xf]
      %v1607 = vld [vmem:[%s288 + $0xfb4] sm:$0xf]
      %v1608 = vld [vmem:[%s288 + $0xfb8] sm:$0xf]
      %v1609 = vld [vmem:[%s288 + $0xfbc] sm:$0xf]
      %v1610 = vld [vmem:[%s288 + $0xfc0] sm:$0xf]
      %v1611 = vld [vmem:[%s288 + $0xfc4] sm:$0xf]
      %v1612 = vld [vmem:[%s288 + $0xfc8] sm:$0xf]
      %v1613 = vld [vmem:[%s288 + $0xfcc] sm:$0xf]
      %v1614 = vld [vmem:[%s288 + $0xfd0] sm:$0xf]
      %v1615 = vld [vmem:[%s288 + $0xfd4] sm:$0xf]
      %v1616 = vld [vmem:[%s288 + $0xfd8] sm:$0xf]
      %v1617 = vld [vmem:[%s288 + $0xfdc] sm:$0xf]
      %v1618 = vld [vmem:[%s288 + $0xfe0] sm:$0xf]
      %v1619 = vld [vmem:[%s288 + $0xfe4] sm:$0xf]
      %v1620 = vld [vmem:[%s288 + $0xfe8] sm:$0xf]
      %v1621 = vld [vmem:[%s288 + $0xfec] sm:$0xf]
      %v1622 = vld [vmem:[%s288 + $0xff0] sm:$0xf]
      %v1623 = vld [vmem:[%s288 + $0xff4] sm:$0xf]
      %v1624 = vld [vmem:[%s288 + $0xff8] sm:$0xf]
      %v1625 = vld [vmem:[%s288 + $0xffc] sm:$0xf]
      %v1626 = vld [vmem:[%s288 + $0x1000] sm:$0xf]
      %v1627 = vld [vmem:[%s288 + $0x1004] sm:$0xf]
      %v1628 = vld [vmem:[%s288 + $0x1008] sm:$0xf]
      %v1629 = vld [vmem:[%s288 + $0x100c] sm:$0xf]
      %v1630 = vld [vmem:[%s288 + $0x1010] sm:$0xf]
      %v1631 = vld [vmem:[%s288 + $0x1014] sm:$0xf]
      %v1632 = vld [vmem:[%s288 + $0x1018] sm:$0xf]
      %v1633 = vld [vmem:[%s288 + $0x101c] sm:$0xf]
      %v1634 = vld [vmem:[%s288 + $0x1020] sm:$0xf]
      %v1635 = vld [vmem:[%s288 + $0x1024] sm:$0xf]
      %v1636 = vld [vmem:[%s288 + $0x1028] sm:$0xf]
      %v1637 = vld [vmem:[%s288 + $0x102c] sm:$0xf]
      %v1638 = vld [vmem:[%s288 + $0x1030] sm:$0xf]
      %v1639 = vld [vmem:[%s288 + $0x1034] sm:$0xf]
      %v1640 = vld [vmem:[%s288 + $0x1038] sm:$0xf]
      %v1641 = vld [vmem:[%s288 + $0x103c] sm:$0xf]
      %v1642 = vld [vmem:[%s288 + $0x1040] sm:$0xf]
      %v1643 = vld [vmem:[%s288 + $0x1044] sm:$0xf]
      %v1644 = vld [vmem:[%s288 + $0x1048] sm:$0xf]
      %v1645 = vld [vmem:[%s288 + $0x104c] sm:$0xf]
      %v1646 = vld [vmem:[%s288 + $0x1050] sm:$0xf]
      %v1647 = vld [vmem:[%s288 + $0x1054] sm:$0xf]
      %v1648 = vld [vmem:[%s288 + $0x1058] sm:$0xf]
      %v1649 = vld [vmem:[%s288 + $0x105c] sm:$0xf]
      %v1650 = vld [vmem:[%s288 + $0x1060] sm:$0xf]
      %v1651 = vld [vmem:[%s288 + $0x1064] sm:$0xf]
      %v1652 = vld [vmem:[%s288 + $0x1068] sm:$0xf]
      %v1653 = vld [vmem:[%s288 + $0x106c] sm:$0xf]
      %v1654 = vld [vmem:[%s288 + $0x1070] sm:$0xf]
      %v1655 = vld [vmem:[%s288 + $0x1074] sm:$0xf]
      %v1656 = vld [vmem:[%s288 + $0x1078] sm:$0xf]
      %v1657 = vld [vmem:[%s288 + $0x107c] sm:$0xf]
      %v1658 = vld [vmem:[%s288 + $0x1080] sm:$0xf]
      %v1659 = vld [vmem:[%s288 + $0x1084] sm:$0xf]
      %v1660 = vld [vmem:[%s288 + $0x1088] sm:$0xf]
      %v1661 = vld [vmem:[%s288 + $0x108c] sm:$0xf]
      %v1662 = vld [vmem:[%s288 + $0x1090] sm:$0xf]
      %v1663 = vld [vmem:[%s288 + $0x1094] sm:$0xf]
      %v1664 = vld [vmem:[%s288 + $0x1098] sm:$0xf]
      %v1665 = vld [vmem:[%s288 + $0x109c] sm:$0xf]
      %v1666 = vld [vmem:[%s288 + $0x10a0] sm:$0xf]
      %v1667 = vld [vmem:[%s288 + $0x10a4] sm:$0xf]
      %v1668 = vld [vmem:[%s288 + $0x10a8] sm:$0xf]
      %v1669 = vld [vmem:[%s288 + $0x10ac] sm:$0xf]
      %v1670 = vld [vmem:[%s288 + $0x10b0] sm:$0xf]
      %v1671 = vld [vmem:[%s288 + $0x10b4] sm:$0xf]
      %v1672 = vld [vmem:[%s288 + $0x10b8] sm:$0xf]
      %v1673 = vld [vmem:[%s288 + $0x10bc] sm:$0xf]
      %v1674 = vld [vmem:[%s288 + $0x10c0] sm:$0xf]
      %v1675 = vld [vmem:[%s288 + $0x10c4] sm:$0xf]
      %v1676 = vld [vmem:[%s288 + $0x10c8] sm:$0xf]
      %v1677 = vld [vmem:[%s288 + $0x10cc] sm:$0xf]
      %v1678 = vld [vmem:[%s288 + $0x10d0] sm:$0xf]
      %v1679 = vld [vmem:[%s288 + $0x10d4] sm:$0xf]
      %v1680 = vld [vmem:[%s288 + $0x10d8] sm:$0xf]
      %v1681 = vld [vmem:[%s288 + $0x10dc] sm:$0xf]
      %v1682 = vld [vmem:[%s288 + $0x10e0] sm:$0xf]
      %v1683 = vld [vmem:[%s288 + $0x10e4] sm:$0xf]
      %v1684 = vld [vmem:[%s288 + $0x10e8] sm:$0xf]
      %v1685 = vld [vmem:[%s288 + $0x10ec] sm:$0xf]
      %v1686 = vld [vmem:[%s288 + $0x10f0] sm:$0xf]
      %v1687 = vld [vmem:[%s288 + $0x10f4] sm:$0xf]
      %v1688 = vld [vmem:[%s288 + $0x10f8] sm:$0xf]
      %v1689 = vld [vmem:[%s288 + $0x10fc] sm:$0xf]
      %v1690 = vld [vmem:[%s288 + $0x1100] sm:$0xf]
      %v1691 = vld [vmem:[%s288 + $0x1104] sm:$0xf]
      %v1692 = vld [vmem:[%s288 + $0x1108] sm:$0xf]
      %v1693 = vld [vmem:[%s288 + $0x110c] sm:$0xf]
      %v1694 = vld [vmem:[%s288 + $0x1110] sm:$0xf]
      %v1695 = vld [vmem:[%s288 + $0x1114] sm:$0xf]
      %v1696 = vld [vmem:[%s288 + $0x1118] sm:$0xf]
      %v1697 = vld [vmem:[%s288 + $0x111c] sm:$0xf]
      %v1698 = vld [vmem:[%s288 + $0x1120] sm:$0xf]
      %v1699 = vld [vmem:[%s288 + $0x1124] sm:$0xf]
      %v1700 = vld [vmem:[%s288 + $0x1128] sm:$0xf]
      %v1701 = vld [vmem:[%s288 + $0x112c] sm:$0xf]
      %v1702 = vld [vmem:[%s288 + $0x1130] sm:$0xf]
      %v1703 = vld [vmem:[%s288 + $0x1134] sm:$0xf]
      %v1704 = vld [vmem:[%s288 + $0x1138] sm:$0xf]
      %v1705 = vld [vmem:[%s288 + $0x113c] sm:$0xf]
      %v1706 = vld [vmem:[%s288 + $0x1140] sm:$0xf]
      %v1707 = vld [vmem:[%s288 + $0x1144] sm:$0xf]
      %v1708 = vld [vmem:[%s288 + $0x1148] sm:$0xf]
      %v1709 = vld [vmem:[%s288 + $0x114c] sm:$0xf]
      %v1710 = vld [vmem:[%s288 + $0x1150] sm:$0xf]
      %v1711 = vld [vmem:[%s288 + $0x1154] sm:$0xf]
      %v1712 = vld [vmem:[%s288 + $0x1158] sm:$0xf]
      %v1713 = vld [vmem:[%s288 + $0x115c] sm:$0xf]
      %v1714 = vld [vmem:[%s288 + $0x1160] sm:$0xf]
      %v1715 = vld [vmem:[%s288 + $0x1164] sm:$0xf]
      %v1716 = vld [vmem:[%s288 + $0x1168] sm:$0xf]
      %v1717 = vld [vmem:[%s288 + $0x116c] sm:$0xf]
      %v1718 = vld [vmem:[%s288 + $0x1170] sm:$0xf]
      %v1719 = vld [vmem:[%s288 + $0x1174] sm:$0xf]
      %v1720 = vld [vmem:[%s288 + $0x1178] sm:$0xf]
      %v1721 = vld [vmem:[%s288 + $0x117c] sm:$0xf]
      %v1722 = vld [vmem:[%s288 + $0x1180] sm:$0xf]
      %v1723 = vld [vmem:[%s288 + $0x1184] sm:$0xf]
      %v1724 = vld [vmem:[%s288 + $0x1188] sm:$0xf]
      %v1725 = vld [vmem:[%s288 + $0x118c] sm:$0xf]
      %v1726 = vld [vmem:[%s288 + $0x1190] sm:$0xf]
      %v1727 = vld [vmem:[%s288 + $0x1194] sm:$0xf]
      %v1728 = vld [vmem:[%s288 + $0x1198] sm:$0xf]
      %v1729 = vld [vmem:[%s288 + $0x119c] sm:$0xf]
      %v1730 = vld [vmem:[%s288 + $0x11a0] sm:$0xf]
      %v1731 = vld [vmem:[%s288 + $0x11a4] sm:$0xf]
      %v1732 = vld [vmem:[%s288 + $0x11a8] sm:$0xf]
      %v1733 = vld [vmem:[%s288 + $0x11ac] sm:$0xf]
      %v1734 = vld [vmem:[%s288 + $0x11b0] sm:$0xf]
      %v1735 = vld [vmem:[%s288 + $0x11b4] sm:$0xf]
      %v1736 = vld [vmem:[%s288 + $0x11b8] sm:$0xf]
      %v1737 = vld [vmem:[%s288 + $0x11bc] sm:$0xf]
      %v1738 = vld [vmem:[%s288 + $0x11c0] sm:$0xf]
      %v1739 = vld [vmem:[%s288 + $0x11c4] sm:$0xf]
      %v1740 = vld [vmem:[%s288 + $0x11c8] sm:$0xf]
      %v1741 = vld [vmem:[%s288 + $0x11cc] sm:$0xf]
      %v1742 = vld [vmem:[%s288 + $0x11d0] sm:$0xf]
      %v1743 = vld [vmem:[%s288 + $0x11d4] sm:$0xf]
      %v1744 = vld [vmem:[%s288 + $0x11d8] sm:$0xf]
      %v1745 = vld [vmem:[%s288 + $0x11dc] sm:$0xf]
      %v1746 = vld [vmem:[%s288 + $0x11e0] sm:$0xf]
      %v1747 = vld [vmem:[%s288 + $0x11e4] sm:$0xf]
      %v1748 = vld [vmem:[%s288 + $0x11e8] sm:$0xf]
      %v1749 = vld [vmem:[%s288 + $0x11ec] sm:$0xf]
      %v1750 = vld [vmem:[%s288 + $0x11f0] sm:$0xf]
      %v1751 = vld [vmem:[%s288 + $0x11f4] sm:$0xf]
      %v1752 = vld [vmem:[%s288 + $0x11f8] sm:$0xf]
      %v1753 = vld [vmem:[%s288 + $0x11fc] sm:$0xf]
      %v1754 = vld [vmem:[%s288 + $0x1200] sm:$0xf]
      %v1755 = vld [vmem:[%s288 + $0x1204] sm:$0xf]
      %v1756 = vld [vmem:[%s288 + $0x1208] sm:$0xf]
      %v1757 = vld [vmem:[%s288 + $0x120c] sm:$0xf]
      %v1758 = vld [vmem:[%s288 + $0x1210] sm:$0xf]
      %v1759 = vld [vmem:[%s288 + $0x1214] sm:$0xf]
      %v1760 = vld [vmem:[%s288 + $0x1218] sm:$0xf]
      %v1761 = vld [vmem:[%s288 + $0x121c] sm:$0xf]
      %v1762 = vld [vmem:[%s288 + $0x1220] sm:$0xf]
      %v1763 = vld [vmem:[%s288 + $0x1224] sm:$0xf]
      %v1764 = vld [vmem:[%s288 + $0x1228] sm:$0xf]
      %v1765 = vld [vmem:[%s288 + $0x122c] sm:$0xf]
      %v1766 = vld [vmem:[%s288 + $0x1230] sm:$0xf]
      %v1767 = vld [vmem:[%s288 + $0x1234] sm:$0xf]
      %v1768 = vld [vmem:[%s288 + $0x1238] sm:$0xf]
      %v1769 = vld [vmem:[%s288 + $0x123c] sm:$0xf]
      %v1770 = vld [vmem:[%s288 + $0x1240] sm:$0xf]
      %v1771 = vld [vmem:[%s288 + $0x1244] sm:$0xf]
      %v1772 = vld [vmem:[%s288 + $0x1248] sm:$0xf]
      %v1773 = vld [vmem:[%s288 + $0x124c] sm:$0xf]
      %v1774 = vld [vmem:[%s288 + $0x1250] sm:$0xf]
      %v1775 = vld [vmem:[%s288 + $0x1254] sm:$0xf]
      %v1776 = vld [vmem:[%s288 + $0x1258] sm:$0xf]
      %v1777 = vld [vmem:[%s288 + $0x125c] sm:$0xf]
      %v1778 = vld [vmem:[%s288 + $0x1260] sm:$0xf]
      %v1779 = vld [vmem:[%s288 + $0x1264] sm:$0xf]
      %v1780 = vld [vmem:[%s288 + $0x1268] sm:$0xf]
      %v1781 = vld [vmem:[%s288 + $0x126c] sm:$0xf]
      %v1782 = vld [vmem:[%s288 + $0x1270] sm:$0xf]
      %v1783 = vld [vmem:[%s288 + $0x1274] sm:$0xf]
      %v1784 = vld [vmem:[%s288 + $0x1278] sm:$0xf]
      %v1785 = vld [vmem:[%s288 + $0x127c] sm:$0xf]
      %v1786 = vld [vmem:[%s288 + $0x1280] sm:$0xf]
      %v1787 = vld [vmem:[%s288 + $0x1284] sm:$0xf]
      %v1788 = vld [vmem:[%s288 + $0x1288] sm:$0xf]
      %v1789 = vld [vmem:[%s288 + $0x128c] sm:$0xf]
      %v1790 = vld [vmem:[%s288 + $0x1290] sm:$0xf]
      %v1791 = vld [vmem:[%s288 + $0x1294] sm:$0xf]
      %v1792 = vld [vmem:[%s288 + $0x1298] sm:$0xf]
      %v1793 = vld [vmem:[%s288 + $0x129c] sm:$0xf]
      %v1794 = vld [vmem:[%s288 + $0x12a0] sm:$0xf]
      %v1795 = vld [vmem:[%s288 + $0x12a4] sm:$0xf]
      %v1796 = vld [vmem:[%s288 + $0x12a8] sm:$0xf]
      %v1797 = vld [vmem:[%s288 + $0x12ac] sm:$0xf]
      %v1798 = vld [vmem:[%s288 + $0x12b0] sm:$0xf]
      %v1799 = vld [vmem:[%s288 + $0x12b4] sm:$0xf]
      %v1800 = vld [vmem:[%s288 + $0x12b8] sm:$0xf]
      %v1801 = vld [vmem:[%s288 + $0x12bc] sm:$0xf]
      %v1802 = vld [vmem:[%s288 + $0x12c0] sm:$0xf]
      %v1803 = vld [vmem:[%s288 + $0x12c4] sm:$0xf]
      %v1804 = vld [vmem:[%s288 + $0x12c8] sm:$0xf]
      %v1805 = vld [vmem:[%s288 + $0x12cc] sm:$0xf]
      %v1806 = vld [vmem:[%s288 + $0x12d0] sm:$0xf]
      %v1807 = vld [vmem:[%s288 + $0x12d4] sm:$0xf]
      %v1808 = vld [vmem:[%s288 + $0x12d8] sm:$0xf]
      %v1809 = vld [vmem:[%s288 + $0x12dc] sm:$0xf]
      %v1810 = vld [vmem:[%s288 + $0x12e0] sm:$0xf]
      %v1811 = vld [vmem:[%s288 + $0x12e4] sm:$0xf]
      %v1812 = vld [vmem:[%s288 + $0x12e8] sm:$0xf]
      %v1813 = vld [vmem:[%s288 + $0x12ec] sm:$0xf]
      %v1814 = vld [vmem:[%s288 + $0x12f0] sm:$0xf]
      %v1815 = vld [vmem:[%s288 + $0x12f4] sm:$0xf]
      %v1816 = vld [vmem:[%s288 + $0x12f8] sm:$0xf]
      %v1817 = vld [vmem:[%s288 + $0x12fc] sm:$0xf]
      %v1818 = vld [vmem:[%s288 + $0x1300] sm:$0xf]
      %v1819 = vld [vmem:[%s288 + $0x1304] sm:$0xf]
      %v1820 = vld [vmem:[%s288 + $0x1308] sm:$0xf]
      %v1821 = vld [vmem:[%s288 + $0x130c] sm:$0xf]
      %v1822 = vld [vmem:[%s288 + $0x1310] sm:$0xf]
      %v1823 = vld [vmem:[%s288 + $0x1314] sm:$0xf]
      %v1824 = vld [vmem:[%s288 + $0x1318] sm:$0xf]
      %v1825 = vld [vmem:[%s288 + $0x131c] sm:$0xf]
      %v1826 = vld [vmem:[%s288 + $0x1320] sm:$0xf]
      %v1827 = vld [vmem:[%s288 + $0x1324] sm:$0xf]
      %v1828 = vld [vmem:[%s288 + $0x1328] sm:$0xf]
      %v1829 = vld [vmem:[%s288 + $0x132c] sm:$0xf]
      %v1830 = vld [vmem:[%s288 + $0x1330] sm:$0xf]
      %v1831 = vld [vmem:[%s288 + $0x1334] sm:$0xf]
      %v1832 = vld [vmem:[%s288 + $0x1338] sm:$0xf]
      %v1833 = vld [vmem:[%s288 + $0x133c] sm:$0xf]
      %v1834 = vld [vmem:[%s288 + $0x1340] sm:$0xf]
      %v1835 = vld [vmem:[%s288 + $0x1344] sm:$0xf]
      %v1836 = vld [vmem:[%s288 + $0x1348] sm:$0xf]
      %v1837 = vld [vmem:[%s288 + $0x134c] sm:$0xf]
      %v1838 = vld [vmem:[%s288 + $0x1350] sm:$0xf]
      %v1839 = vld [vmem:[%s288 + $0x1354] sm:$0xf]
      %v1840 = vld [vmem:[%s288 + $0x1358] sm:$0xf]
      %v1841 = vld [vmem:[%s288 + $0x135c] sm:$0xf]
      %v1842 = vld [vmem:[%s288 + $0x1360] sm:$0xf]
      %v1843 = vld [vmem:[%s288 + $0x1364] sm:$0xf]
      %v1844 = vld [vmem:[%s288 + $0x1368] sm:$0xf]
      %v1845 = vld [vmem:[%s288 + $0x136c] sm:$0xf]
      %v1846 = vld [vmem:[%s288 + $0x1370] sm:$0xf]
      %v1847 = vld [vmem:[%s288 + $0x1374] sm:$0xf]
      %v1848 = vld [vmem:[%s288 + $0x1378] sm:$0xf]
      %v1849 = vld [vmem:[%s288 + $0x137c] sm:$0xf]
      %v1850 = vld [vmem:[%s288 + $0x1380] sm:$0xf]
      %v1851 = vld [vmem:[%s288 + $0x1384] sm:$0xf]
      %v1852 = vld [vmem:[%s288 + $0x1388] sm:$0xf]
      %v1853 = vld [vmem:[%s288 + $0x138c] sm:$0xf]
      %v1854 = vld [vmem:[%s288 + $0x1390] sm:$0xf]
      %v1855 = vld [vmem:[%s288 + $0x1394] sm:$0xf]
      %v1856 = vld [vmem:[%s288 + $0x1398] sm:$0xf]
      %v1857 = vld [vmem:[%s288 + $0x139c] sm:$0xf]
      %v1858 = vld [vmem:[%s288 + $0x13a0] sm:$0xf]
      %v1859 = vld [vmem:[%s288 + $0x13a4] sm:$0xf]
      %v1860 = vld [vmem:[%s288 + $0x13a8] sm:$0xf]
      %v1861 = vld [vmem:[%s288 + $0x13ac] sm:$0xf]
      %v1862 = vld [vmem:[%s288 + $0x13b0] sm:$0xf]
      %v1863 = vld [vmem:[%s288 + $0x13b4] sm:$0xf]
      %v1864 = vld [vmem:[%s288 + $0x13b8] sm:$0xf]
      %v1865 = vld [vmem:[%s288 + $0x13bc] sm:$0xf]
      %v1866 = vld [vmem:[%s288 + $0x13c0] sm:$0xf]
      %v1867 = vld [vmem:[%s288 + $0x13c4] sm:$0xf]
      %v1868 = vld [vmem:[%s288 + $0x13c8] sm:$0xf]
      %v1869 = vld [vmem:[%s288 + $0x13cc] sm:$0xf]
      %v1870 = vld [vmem:[%s288 + $0x13d0] sm:$0xf]
      %v1871 = vld [vmem:[%s288 + $0x13d4] sm:$0xf]
      %v1872 = vld [vmem:[%s288 + $0x13d8] sm:$0xf]
      %v1873 = vld [vmem:[%s288 + $0x13dc] sm:$0xf]
      %v1874 = vld [vmem:[%s288 + $0x13e0] sm:$0xf]
      %v1875 = vld [vmem:[%s288 + $0x13e4] sm:$0xf]
      %v1876 = vld [vmem:[%s288 + $0x13e8] sm:$0xf]
      %v1877 = vld [vmem:[%s288 + $0x13ec] sm:$0xf]
      %v1878 = vld [vmem:[%s288 + $0x13f0] sm:$0xf]
      %v1879 = vld [vmem:[%s288 + $0x13f4] sm:$0xf]
      %v1880 = vld [vmem:[%s288 + $0x13f8] sm:$0xf]
      %v1881 = vld [vmem:[%s288 + $0x13fc] sm:$0xf]
      %v3162 = vunpack.c.l.b16 %v602
      %v3163 = vunpack.c.l.b16 %v603
      %v3164 = vunpack.c.l.b16 %v604
      %v3165 = vunpack.c.l.b16 %v605
      %v3166 = vunpack.c.l.b16 %v606
      %v3167 = vunpack.c.l.b16 %v607
      %v3168 = vunpack.c.l.b16 %v608
      %v3169 = vunpack.c.l.b16 %v609
      %v3170 = vunpack.c.l.b16 %v610
      %v3171 = vunpack.c.l.b16 %v611
      %v3172 = vunpack.c.l.b16 %v612
      %v3173 = vunpack.c.l.b16 %v613
      %v3174 = vunpack.c.l.b16 %v614
      %v3175 = vunpack.c.l.b16 %v615
      %v3176 = vunpack.c.l.b16 %v616
      %v3177 = vunpack.c.l.b16 %v617
      %v3178 = vunpack.c.l.b16 %v618
      %v3179 = vunpack.c.l.b16 %v619
      %v3180 = vunpack.c.l.b16 %v620
      %v3181 = vunpack.c.l.b16 %v621
      %v3182 = vunpack.c.l.b16 %v622
      %v3183 = vunpack.c.l.b16 %v623
      %v3184 = vunpack.c.l.b16 %v624
      %v3185 = vunpack.c.l.b16 %v625
      %v3186 = vunpack.c.l.b16 %v626
      %v3187 = vunpack.c.l.b16 %v627
      %v3188 = vunpack.c.l.b16 %v628
      %v3189 = vunpack.c.l.b16 %v629
      %v3190 = vunpack.c.l.b16 %v630
      %v3191 = vunpack.c.l.b16 %v631
      %v3192 = vunpack.c.l.b16 %v632
      %v3193 = vunpack.c.l.b16 %v633
      %v3194 = vunpack.c.l.b16 %v634
      %v3195 = vunpack.c.l.b16 %v635
      %v3196 = vunpack.c.l.b16 %v636
      %v3197 = vunpack.c.l.b16 %v637
      %v3198 = vunpack.c.l.b16 %v638
      %v3199 = vunpack.c.l.b16 %v639
      %v3200 = vunpack.c.l.b16 %v640
      %v3201 = vunpack.c.l.b16 %v641
      %v3202 = vunpack.c.l.b16 %v642
      %v3203 = vunpack.c.l.b16 %v643
      %v3204 = vunpack.c.l.b16 %v644
      %v3205 = vunpack.c.l.b16 %v645
      %v3206 = vunpack.c.l.b16 %v646
      %v3207 = vunpack.c.l.b16 %v647
      %v3208 = vunpack.c.l.b16 %v648
      %v3209 = vunpack.c.l.b16 %v649
      %v3210 = vunpack.c.l.b16 %v650
      %v3211 = vunpack.c.l.b16 %v651
      %v3212 = vunpack.c.l.b16 %v652
      %v3213 = vunpack.c.l.b16 %v653
      %v3214 = vunpack.c.l.b16 %v654
      %v3215 = vunpack.c.l.b16 %v655
      %v3216 = vunpack.c.l.b16 %v656
      %v3217 = vunpack.c.l.b16 %v657
      %v3218 = vunpack.c.l.b16 %v658
      %v3219 = vunpack.c.l.b16 %v659
      %v3220 = vunpack.c.l.b16 %v660
      %v3221 = vunpack.c.l.b16 %v661
      %v3222 = vunpack.c.l.b16 %v662
      %v3223 = vunpack.c.l.b16 %v663
      %v3224 = vunpack.c.l.b16 %v664
      %v3225 = vunpack.c.l.b16 %v665
      %v3226 = vunpack.c.l.b16 %v666
      %v3227 = vunpack.c.l.b16 %v667
      %v3228 = vunpack.c.l.b16 %v668
      %v3229 = vunpack.c.l.b16 %v669
      %v3230 = vunpack.c.l.b16 %v670
      %v3231 = vunpack.c.l.b16 %v671
      %v3232 = vunpack.c.l.b16 %v672
      %v3233 = vunpack.c.l.b16 %v673
      %v3234 = vunpack.c.l.b16 %v674
      %v3235 = vunpack.c.l.b16 %v675
      %v3236 = vunpack.c.l.b16 %v676
      %v3237 = vunpack.c.l.b16 %v677
      %v3238 = vunpack.c.l.b16 %v678
      %v3239 = vunpack.c.l.b16 %v679
      %v3240 = vunpack.c.l.b16 %v680
      %v3241 = vunpack.c.l.b16 %v681
      %v3242 = vunpack.c.l.b16 %v682
      %v3243 = vunpack.c.l.b16 %v683
      %v3244 = vunpack.c.l.b16 %v684
      %v3245 = vunpack.c.l.b16 %v685
      %v3246 = vunpack.c.l.b16 %v686
      %v3247 = vunpack.c.l.b16 %v687
      %v3248 = vunpack.c.l.b16 %v688
      %v3249 = vunpack.c.l.b16 %v689
      %v3250 = vunpack.c.l.b16 %v690
      %v3251 = vunpack.c.l.b16 %v691
      %v3252 = vunpack.c.l.b16 %v692
      %v3253 = vunpack.c.l.b16 %v693
      %v3254 = vunpack.c.l.b16 %v694
      %v3255 = vunpack.c.l.b16 %v695
      %v3256 = vunpack.c.l.b16 %v696
      %v3257 = vunpack.c.l.b16 %v697
      %v3258 = vunpack.c.l.b16 %v698
      %v3259 = vunpack.c.l.b16 %v699
      %v3260 = vunpack.c.l.b16 %v700
      %v3261 = vunpack.c.l.b16 %v701
      %v3262 = vunpack.c.l.b16 %v702
      %v3263 = vunpack.c.l.b16 %v703
      %v3264 = vunpack.c.l.b16 %v704
      %v3265 = vunpack.c.l.b16 %v705
      %v3266 = vunpack.c.l.b16 %v706
      %v3267 = vunpack.c.l.b16 %v707
      %v3268 = vunpack.c.l.b16 %v708
      %v3269 = vunpack.c.l.b16 %v709
      %v3270 = vunpack.c.l.b16 %v710
      %v3271 = vunpack.c.l.b16 %v711
      %v3272 = vunpack.c.l.b16 %v712
      %v3273 = vunpack.c.l.b16 %v713
      %v3274 = vunpack.c.l.b16 %v714
      %v3275 = vunpack.c.l.b16 %v715
      %v3276 = vunpack.c.l.b16 %v716
      %v3277 = vunpack.c.l.b16 %v717
      %v3278 = vunpack.c.l.b16 %v718
      %v3279 = vunpack.c.l.b16 %v719
      %v3280 = vunpack.c.l.b16 %v720
      %v3281 = vunpack.c.l.b16 %v721
      %v3282 = vunpack.c.l.b16 %v722
      %v3283 = vunpack.c.l.b16 %v723
      %v3284 = vunpack.c.l.b16 %v724
      %v3285 = vunpack.c.l.b16 %v725
      %v3286 = vunpack.c.l.b16 %v726
      %v3287 = vunpack.c.l.b16 %v727
      %v3288 = vunpack.c.l.b16 %v728
      %v3289 = vunpack.c.l.b16 %v729
      %v3290 = vunpack.c.l.b16 %v730
      %v3291 = vunpack.c.l.b16 %v731
      %v3292 = vunpack.c.l.b16 %v732
      %v3293 = vunpack.c.l.b16 %v733
      %v3294 = vunpack.c.l.b16 %v734
      %v3295 = vunpack.c.l.b16 %v735
      %v3296 = vunpack.c.l.b16 %v736
      %v3297 = vunpack.c.l.b16 %v737
      %v3298 = vunpack.c.l.b16 %v738
      %v3299 = vunpack.c.l.b16 %v739
      %v3300 = vunpack.c.l.b16 %v740
      %v3301 = vunpack.c.l.b16 %v741
      %v3302 = vunpack.c.l.b16 %v742
      %v3303 = vunpack.c.l.b16 %v743
      %v3304 = vunpack.c.l.b16 %v744
      %v3305 = vunpack.c.l.b16 %v745
      %v3306 = vunpack.c.l.b16 %v746
      %v3307 = vunpack.c.l.b16 %v747
      %v3308 = vunpack.c.l.b16 %v748
      %v3309 = vunpack.c.l.b16 %v749
      %v3310 = vunpack.c.l.b16 %v750
      %v3311 = vunpack.c.l.b16 %v751
      %v3312 = vunpack.c.l.b16 %v752
      %v3313 = vunpack.c.l.b16 %v753
      %v3314 = vunpack.c.l.b16 %v754
      %v3315 = vunpack.c.l.b16 %v755
      %v3316 = vunpack.c.l.b16 %v756
      %v3317 = vunpack.c.l.b16 %v757
      %v3318 = vunpack.c.l.b16 %v758
      %v3319 = vunpack.c.l.b16 %v759
      %v3320 = vunpack.c.l.b16 %v760
      %v3321 = vunpack.c.l.b16 %v761
      %v3322 = vunpack.c.l.b16 %v762
      %v3323 = vunpack.c.l.b16 %v763
      %v3324 = vunpack.c.l.b16 %v764
      %v3325 = vunpack.c.l.b16 %v765
      %v3326 = vunpack.c.l.b16 %v766
      %v3327 = vunpack.c.l.b16 %v767
      %v3328 = vunpack.c.l.b16 %v768
      %v3329 = vunpack.c.l.b16 %v769
      %v3330 = vunpack.c.l.b16 %v770
      %v3331 = vunpack.c.l.b16 %v771
      %v3332 = vunpack.c.l.b16 %v772
      %v3333 = vunpack.c.l.b16 %v773
      %v3334 = vunpack.c.l.b16 %v774
      %v3335 = vunpack.c.l.b16 %v775
      %v3336 = vunpack.c.l.b16 %v776
      %v3337 = vunpack.c.l.b16 %v777
      %v3338 = vunpack.c.l.b16 %v778
      %v3339 = vunpack.c.l.b16 %v779
      %v3340 = vunpack.c.l.b16 %v780
      %v3341 = vunpack.c.l.b16 %v781
      %v3342 = vunpack.c.l.b16 %v782
      %v3343 = vunpack.c.l.b16 %v783
      %v3344 = vunpack.c.l.b16 %v784
      %v3345 = vunpack.c.l.b16 %v785
      %v3346 = vunpack.c.l.b16 %v786
      %v3347 = vunpack.c.l.b16 %v787
      %v3348 = vunpack.c.l.b16 %v788
      %v3349 = vunpack.c.l.b16 %v789
      %v3350 = vunpack.c.l.b16 %v790
      %v3351 = vunpack.c.l.b16 %v791
      %v3352 = vunpack.c.l.b16 %v792
      %v3353 = vunpack.c.l.b16 %v793
      %v3354 = vunpack.c.l.b16 %v794
      %v3355 = vunpack.c.l.b16 %v795
      %v3356 = vunpack.c.l.b16 %v796
      %v3357 = vunpack.c.l.b16 %v797
      %v3358 = vunpack.c.l.b16 %v798
      %v3359 = vunpack.c.l.b16 %v799
      %v3360 = vunpack.c.l.b16 %v800
      %v3361 = vunpack.c.l.b16 %v801
      %v3362 = vunpack.c.l.b16 %v802
      %v3363 = vunpack.c.l.b16 %v803
      %v3364 = vunpack.c.l.b16 %v804
      %v3365 = vunpack.c.l.b16 %v805
      %v3366 = vunpack.c.l.b16 %v806
      %v3367 = vunpack.c.l.b16 %v807
      %v3368 = vunpack.c.l.b16 %v808
      %v3369 = vunpack.c.l.b16 %v809
      %v3370 = vunpack.c.l.b16 %v810
      %v3371 = vunpack.c.l.b16 %v811
      %v3372 = vunpack.c.l.b16 %v812
      %v3373 = vunpack.c.l.b16 %v813
      %v3374 = vunpack.c.l.b16 %v814
      %v3375 = vunpack.c.l.b16 %v815
      %v3376 = vunpack.c.l.b16 %v816
      %v3377 = vunpack.c.l.b16 %v817
      %v3378 = vunpack.c.l.b16 %v818
      %v3379 = vunpack.c.l.b16 %v819
      %v3380 = vunpack.c.l.b16 %v820
      %v3381 = vunpack.c.l.b16 %v821
      %v3382 = vunpack.c.l.b16 %v822
      %v3383 = vunpack.c.l.b16 %v823
      %v3384 = vunpack.c.l.b16 %v824
      %v3385 = vunpack.c.l.b16 %v825
      %v3386 = vunpack.c.l.b16 %v826
      %v3387 = vunpack.c.l.b16 %v827
      %v3388 = vunpack.c.l.b16 %v828
      %v3389 = vunpack.c.l.b16 %v829
      %v3390 = vunpack.c.l.b16 %v830
      %v3391 = vunpack.c.l.b16 %v831
      %v3392 = vunpack.c.l.b16 %v832
      %v3393 = vunpack.c.l.b16 %v833
      %v3394 = vunpack.c.l.b16 %v834
      %v3395 = vunpack.c.l.b16 %v835
      %v3396 = vunpack.c.l.b16 %v836
      %v3397 = vunpack.c.l.b16 %v837
      %v3398 = vunpack.c.l.b16 %v838
      %v3399 = vunpack.c.l.b16 %v839
      %v3400 = vunpack.c.l.b16 %v840
      %v3401 = vunpack.c.l.b16 %v841
      %v3402 = vunpack.c.l.b16 %v842
      %v3403 = vunpack.c.l.b16 %v843
      %v3404 = vunpack.c.l.b16 %v844
      %v3405 = vunpack.c.l.b16 %v845
      %v3406 = vunpack.c.l.b16 %v846
      %v3407 = vunpack.c.l.b16 %v847
      %v3408 = vunpack.c.l.b16 %v848
      %v3409 = vunpack.c.l.b16 %v849
      %v3410 = vunpack.c.l.b16 %v850
      %v3411 = vunpack.c.l.b16 %v851
      %v3412 = vunpack.c.l.b16 %v852
      %v3413 = vunpack.c.l.b16 %v853
      %v3414 = vunpack.c.l.b16 %v854
      %v3415 = vunpack.c.l.b16 %v855
      %v3416 = vunpack.c.l.b16 %v856
      %v3417 = vunpack.c.l.b16 %v857
      %v3418 = vunpack.c.l.b16 %v858
      %v3419 = vunpack.c.l.b16 %v859
      %v3420 = vunpack.c.l.b16 %v860
      %v3421 = vunpack.c.l.b16 %v861
      %v3422 = vunpack.c.l.b16 %v862
      %v3423 = vunpack.c.l.b16 %v863
      %v3424 = vunpack.c.l.b16 %v864
      %v3425 = vunpack.c.l.b16 %v865
      %v3426 = vunpack.c.l.b16 %v866
      %v3427 = vunpack.c.l.b16 %v867
      %v3428 = vunpack.c.l.b16 %v868
      %v3429 = vunpack.c.l.b16 %v869
      %v3430 = vunpack.c.l.b16 %v870
      %v3431 = vunpack.c.l.b16 %v871
      %v3432 = vunpack.c.l.b16 %v872
      %v3433 = vunpack.c.l.b16 %v873
      %v3434 = vunpack.c.l.b16 %v874
      %v3435 = vunpack.c.l.b16 %v875
      %v3436 = vunpack.c.l.b16 %v876
      %v3437 = vunpack.c.l.b16 %v877
      %v3438 = vunpack.c.l.b16 %v878
      %v3439 = vunpack.c.l.b16 %v879
      %v3440 = vunpack.c.l.b16 %v880
      %v3441 = vunpack.c.l.b16 %v881
      %v3442 = vunpack.c.l.b16 %v882
      %v3443 = vunpack.c.l.b16 %v883
      %v3444 = vunpack.c.l.b16 %v884
      %v3445 = vunpack.c.l.b16 %v885
      %v3446 = vunpack.c.l.b16 %v886
      %v3447 = vunpack.c.l.b16 %v887
      %v3448 = vunpack.c.l.b16 %v888
      %v3449 = vunpack.c.l.b16 %v889
      %v3450 = vunpack.c.l.b16 %v890
      %v3451 = vunpack.c.l.b16 %v891
      %v3452 = vunpack.c.l.b16 %v892
      %v3453 = vunpack.c.l.b16 %v893
      %v3454 = vunpack.c.l.b16 %v894
      %v3455 = vunpack.c.l.b16 %v895
      %v3456 = vunpack.c.l.b16 %v896
      %v3457 = vunpack.c.l.b16 %v897
      %v3458 = vunpack.c.l.b16 %v898
      %v3459 = vunpack.c.l.b16 %v899
      %v3460 = vunpack.c.l.b16 %v900
      %v3461 = vunpack.c.l.b16 %v901
      %v3462 = vunpack.c.l.b16 %v902
      %v3463 = vunpack.c.l.b16 %v903
      %v3464 = vunpack.c.l.b16 %v904
      %v3465 = vunpack.c.l.b16 %v905
      %v3466 = vunpack.c.l.b16 %v906
      %v3467 = vunpack.c.l.b16 %v907
      %v3468 = vunpack.c.l.b16 %v908
      %v3469 = vunpack.c.l.b16 %v909
      %v3470 = vunpack.c.l.b16 %v910
      %v3471 = vunpack.c.l.b16 %v911
      %v3472 = vunpack.c.l.b16 %v912
      %v3473 = vunpack.c.l.b16 %v913
      %v3474 = vunpack.c.l.b16 %v914
      %v3475 = vunpack.c.l.b16 %v915
      %v3476 = vunpack.c.l.b16 %v916
      %v3477 = vunpack.c.l.b16 %v917
      %v3478 = vunpack.c.l.b16 %v918
      %v3479 = vunpack.c.l.b16 %v919
      %v3480 = vunpack.c.l.b16 %v920
      %v3481 = vunpack.c.l.b16 %v921
      %v3482 = vunpack.c.l.b16 %v922
      %v3483 = vunpack.c.l.b16 %v923
      %v3484 = vunpack.c.l.b16 %v924
      %v3485 = vunpack.c.l.b16 %v925
      %v3486 = vunpack.c.l.b16 %v926
      %v3487 = vunpack.c.l.b16 %v927
      %v3488 = vunpack.c.l.b16 %v928
      %v3489 = vunpack.c.l.b16 %v929
      %v3490 = vunpack.c.l.b16 %v930
      %v3491 = vunpack.c.l.b16 %v931
      %v3492 = vunpack.c.l.b16 %v932
      %v3493 = vunpack.c.l.b16 %v933
      %v3494 = vunpack.c.l.b16 %v934
      %v3495 = vunpack.c.l.b16 %v935
      %v3496 = vunpack.c.l.b16 %v936
      %v3497 = vunpack.c.l.b16 %v937
      %v3498 = vunpack.c.l.b16 %v938
      %v3499 = vunpack.c.l.b16 %v939
      %v3500 = vunpack.c.l.b16 %v940
      %v3501 = vunpack.c.l.b16 %v941
      %v3502 = vunpack.c.l.b16 %v942
      %v3503 = vunpack.c.l.b16 %v943
      %v3504 = vunpack.c.l.b16 %v944
      %v3505 = vunpack.c.l.b16 %v945
      %v3506 = vunpack.c.l.b16 %v946
      %v3507 = vunpack.c.l.b16 %v947
      %v3508 = vunpack.c.l.b16 %v948
      %v3509 = vunpack.c.l.b16 %v949
      %v3510 = vunpack.c.l.b16 %v950
      %v3511 = vunpack.c.l.b16 %v951
      %v3512 = vunpack.c.l.b16 %v952
      %v3513 = vunpack.c.l.b16 %v953
      %v3514 = vunpack.c.l.b16 %v954
      %v3515 = vunpack.c.l.b16 %v955
      %v3516 = vunpack.c.l.b16 %v956
      %v3517 = vunpack.c.l.b16 %v957
      %v3518 = vunpack.c.l.b16 %v958
      %v3519 = vunpack.c.l.b16 %v959
      %v3520 = vunpack.c.l.b16 %v960
      %v3521 = vunpack.c.l.b16 %v961
      %v3522 = vunpack.c.l.b16 %v962
      %v3523 = vunpack.c.l.b16 %v963
      %v3524 = vunpack.c.l.b16 %v964
      %v3525 = vunpack.c.l.b16 %v965
      %v3526 = vunpack.c.l.b16 %v966
      %v3527 = vunpack.c.l.b16 %v967
      %v3528 = vunpack.c.l.b16 %v968
      %v3529 = vunpack.c.l.b16 %v969
      %v3530 = vunpack.c.l.b16 %v970
      %v3531 = vunpack.c.l.b16 %v971
      %v3532 = vunpack.c.l.b16 %v972
      %v3533 = vunpack.c.l.b16 %v973
      %v3534 = vunpack.c.l.b16 %v974
      %v3535 = vunpack.c.l.b16 %v975
      %v3536 = vunpack.c.l.b16 %v976
      %v3537 = vunpack.c.l.b16 %v977
      %v3538 = vunpack.c.l.b16 %v978
      %v3539 = vunpack.c.l.b16 %v979
      %v3540 = vunpack.c.l.b16 %v980
      %v3541 = vunpack.c.l.b16 %v981
      %v3542 = vunpack.c.l.b16 %v982
      %v3543 = vunpack.c.l.b16 %v983
      %v3544 = vunpack.c.l.b16 %v984
      %v3545 = vunpack.c.l.b16 %v985
      %v3546 = vunpack.c.l.b16 %v986
      %v3547 = vunpack.c.l.b16 %v987
      %v3548 = vunpack.c.l.b16 %v988
      %v3549 = vunpack.c.l.b16 %v989
      %v3550 = vunpack.c.l.b16 %v990
      %v3551 = vunpack.c.l.b16 %v991
      %v3552 = vunpack.c.l.b16 %v992
      %v3553 = vunpack.c.l.b16 %v993
      %v3554 = vunpack.c.l.b16 %v994
      %v3555 = vunpack.c.l.b16 %v995
      %v3556 = vunpack.c.l.b16 %v996
      %v3557 = vunpack.c.l.b16 %v997
      %v3558 = vunpack.c.l.b16 %v998
      %v3559 = vunpack.c.l.b16 %v999
      %v3560 = vunpack.c.l.b16 %v1000
      %v3561 = vunpack.c.l.b16 %v1001
      %v3562 = vunpack.c.l.b16 %v1002
      %v3563 = vunpack.c.l.b16 %v1003
      %v3564 = vunpack.c.l.b16 %v1004
      %v3565 = vunpack.c.l.b16 %v1005
      %v3566 = vunpack.c.l.b16 %v1006
      %v3567 = vunpack.c.l.b16 %v1007
      %v3568 = vunpack.c.l.b16 %v1008
      %v3569 = vunpack.c.l.b16 %v1009
      %v3570 = vunpack.c.l.b16 %v1010
      %v3571 = vunpack.c.l.b16 %v1011
      %v3572 = vunpack.c.l.b16 %v1012
      %v3573 = vunpack.c.l.b16 %v1013
      %v3574 = vunpack.c.l.b16 %v1014
      %v3575 = vunpack.c.l.b16 %v1015
      %v3576 = vunpack.c.l.b16 %v1016
      %v3577 = vunpack.c.l.b16 %v1017
      %v3578 = vunpack.c.l.b16 %v1018
      %v3579 = vunpack.c.l.b16 %v1019
      %v3580 = vunpack.c.l.b16 %v1020
      %v3581 = vunpack.c.l.b16 %v1021
      %v3582 = vunpack.c.l.b16 %v1022
      %v3583 = vunpack.c.l.b16 %v1023
      %v3584 = vunpack.c.l.b16 %v1024
      %v3585 = vunpack.c.l.b16 %v1025
      %v3586 = vunpack.c.l.b16 %v1026
      %v3587 = vunpack.c.l.b16 %v1027
      %v3588 = vunpack.c.l.b16 %v1028
      %v3589 = vunpack.c.l.b16 %v1029
      %v3590 = vunpack.c.l.b16 %v1030
      %v3591 = vunpack.c.l.b16 %v1031
      %v3592 = vunpack.c.l.b16 %v1032
      %v3593 = vunpack.c.l.b16 %v1033
      %v3594 = vunpack.c.l.b16 %v1034
      %v3595 = vunpack.c.l.b16 %v1035
      %v3596 = vunpack.c.l.b16 %v1036
      %v3597 = vunpack.c.l.b16 %v1037
      %v3598 = vunpack.c.l.b16 %v1038
      %v3599 = vunpack.c.l.b16 %v1039
      %v3600 = vunpack.c.l.b16 %v1040
      %v3601 = vunpack.c.l.b16 %v1041
      %v3602 = vunpack.c.l.b16 %v1042
      %v3603 = vunpack.c.l.b16 %v1043
      %v3604 = vunpack.c.l.b16 %v1044
      %v3605 = vunpack.c.l.b16 %v1045
      %v3606 = vunpack.c.l.b16 %v1046
      %v3607 = vunpack.c.l.b16 %v1047
      %v3608 = vunpack.c.l.b16 %v1048
      %v3609 = vunpack.c.l.b16 %v1049
      %v3610 = vunpack.c.l.b16 %v1050
      %v3611 = vunpack.c.l.b16 %v1051
      %v3612 = vunpack.c.l.b16 %v1052
      %v3613 = vunpack.c.l.b16 %v1053
      %v3614 = vunpack.c.l.b16 %v1054
      %v3615 = vunpack.c.l.b16 %v1055
      %v3616 = vunpack.c.l.b16 %v1056
      %v3617 = vunpack.c.l.b16 %v1057
      %v3618 = vunpack.c.l.b16 %v1058
      %v3619 = vunpack.c.l.b16 %v1059
      %v3620 = vunpack.c.l.b16 %v1060
      %v3621 = vunpack.c.l.b16 %v1061
      %v3622 = vunpack.c.l.b16 %v1062
      %v3623 = vunpack.c.l.b16 %v1063
      %v3624 = vunpack.c.l.b16 %v1064
      %v3625 = vunpack.c.l.b16 %v1065
      %v3626 = vunpack.c.l.b16 %v1066
      %v3627 = vunpack.c.l.b16 %v1067
      %v3628 = vunpack.c.l.b16 %v1068
      %v3629 = vunpack.c.l.b16 %v1069
      %v3630 = vunpack.c.l.b16 %v1070
      %v3631 = vunpack.c.l.b16 %v1071
      %v3632 = vunpack.c.l.b16 %v1072
      %v3633 = vunpack.c.l.b16 %v1073
      %v3634 = vunpack.c.l.b16 %v1074
      %v3635 = vunpack.c.l.b16 %v1075
      %v3636 = vunpack.c.l.b16 %v1076
      %v3637 = vunpack.c.l.b16 %v1077
      %v3638 = vunpack.c.l.b16 %v1078
      %v3639 = vunpack.c.l.b16 %v1079
      %v3640 = vunpack.c.l.b16 %v1080
      %v3641 = vunpack.c.l.b16 %v1081
      %v3642 = vunpack.c.l.b16 %v1082
      %v3643 = vunpack.c.l.b16 %v1083
      %v3644 = vunpack.c.l.b16 %v1084
      %v3645 = vunpack.c.l.b16 %v1085
      %v3646 = vunpack.c.l.b16 %v1086
      %v3647 = vunpack.c.l.b16 %v1087
      %v3648 = vunpack.c.l.b16 %v1088
      %v3649 = vunpack.c.l.b16 %v1089
      %v3650 = vunpack.c.l.b16 %v1090
      %v3651 = vunpack.c.l.b16 %v1091
      %v3652 = vunpack.c.l.b16 %v1092
      %v3653 = vunpack.c.l.b16 %v1093
      %v3654 = vunpack.c.l.b16 %v1094
      %v3655 = vunpack.c.l.b16 %v1095
      %v3656 = vunpack.c.l.b16 %v1096
      %v3657 = vunpack.c.l.b16 %v1097
      %v3658 = vunpack.c.l.b16 %v1098
      %v3659 = vunpack.c.l.b16 %v1099
      %v3660 = vunpack.c.l.b16 %v1100
      %v3661 = vunpack.c.l.b16 %v1101
      %v3662 = vunpack.c.l.b16 %v1102
      %v3663 = vunpack.c.l.b16 %v1103
      %v3664 = vunpack.c.l.b16 %v1104
      %v3665 = vunpack.c.l.b16 %v1105
      %v3666 = vunpack.c.l.b16 %v1106
      %v3667 = vunpack.c.l.b16 %v1107
      %v3668 = vunpack.c.l.b16 %v1108
      %v3669 = vunpack.c.l.b16 %v1109
      %v3670 = vunpack.c.l.b16 %v1110
      %v3671 = vunpack.c.l.b16 %v1111
      %v3672 = vunpack.c.l.b16 %v1112
      %v3673 = vunpack.c.l.b16 %v1113
      %v3674 = vunpack.c.l.b16 %v1114
      %v3675 = vunpack.c.l.b16 %v1115
      %v3676 = vunpack.c.l.b16 %v1116
      %v3677 = vunpack.c.l.b16 %v1117
      %v3678 = vunpack.c.l.b16 %v1118
      %v3679 = vunpack.c.l.b16 %v1119
      %v3680 = vunpack.c.l.b16 %v1120
      %v3681 = vunpack.c.l.b16 %v1121
      %v3682 = vunpack.c.l.b16 %v1122
      %v3683 = vunpack.c.l.b16 %v1123
      %v3684 = vunpack.c.l.b16 %v1124
      %v3685 = vunpack.c.l.b16 %v1125
      %v3686 = vunpack.c.l.b16 %v1126
      %v3687 = vunpack.c.l.b16 %v1127
      %v3688 = vunpack.c.l.b16 %v1128
      %v3689 = vunpack.c.l.b16 %v1129
      %v3690 = vunpack.c.l.b16 %v1130
      %v3691 = vunpack.c.l.b16 %v1131
      %v3692 = vunpack.c.l.b16 %v1132
      %v3693 = vunpack.c.l.b16 %v1133
      %v3694 = vunpack.c.l.b16 %v1134
      %v3695 = vunpack.c.l.b16 %v1135
      %v3696 = vunpack.c.l.b16 %v1136
      %v3697 = vunpack.c.l.b16 %v1137
      %v3698 = vunpack.c.l.b16 %v1138
      %v3699 = vunpack.c.l.b16 %v1139
      %v3700 = vunpack.c.l.b16 %v1140
      %v3701 = vunpack.c.l.b16 %v1141
      %v3702 = vunpack.c.l.b16 %v1142
      %v3703 = vunpack.c.l.b16 %v1143
      %v3704 = vunpack.c.l.b16 %v1144
      %v3705 = vunpack.c.l.b16 %v1145
      %v3706 = vunpack.c.l.b16 %v1146
      %v3707 = vunpack.c.l.b16 %v1147
      %v3708 = vunpack.c.l.b16 %v1148
      %v3709 = vunpack.c.l.b16 %v1149
      %v3710 = vunpack.c.l.b16 %v1150
      %v3711 = vunpack.c.l.b16 %v1151
      %v3712 = vunpack.c.l.b16 %v1152
      %v3713 = vunpack.c.l.b16 %v1153
      %v3714 = vunpack.c.l.b16 %v1154
      %v3715 = vunpack.c.l.b16 %v1155
      %v3716 = vunpack.c.l.b16 %v1156
      %v3717 = vunpack.c.l.b16 %v1157
      %v3718 = vunpack.c.l.b16 %v1158
      %v3719 = vunpack.c.l.b16 %v1159
      %v3720 = vunpack.c.l.b16 %v1160
      %v3721 = vunpack.c.l.b16 %v1161
      %v3722 = vunpack.c.l.b16 %v1162
      %v3723 = vunpack.c.l.b16 %v1163
      %v3724 = vunpack.c.l.b16 %v1164
      %v3725 = vunpack.c.l.b16 %v1165
      %v3726 = vunpack.c.l.b16 %v1166
      %v3727 = vunpack.c.l.b16 %v1167
      %v3728 = vunpack.c.l.b16 %v1168
      %v3729 = vunpack.c.l.b16 %v1169
      %v3730 = vunpack.c.l.b16 %v1170
      %v3731 = vunpack.c.l.b16 %v1171
      %v3732 = vunpack.c.l.b16 %v1172
      %v3733 = vunpack.c.l.b16 %v1173
      %v3734 = vunpack.c.l.b16 %v1174
      %v3735 = vunpack.c.l.b16 %v1175
      %v3736 = vunpack.c.l.b16 %v1176
      %v3737 = vunpack.c.l.b16 %v1177
      %v3738 = vunpack.c.l.b16 %v1178
      %v3739 = vunpack.c.l.b16 %v1179
      %v3740 = vunpack.c.l.b16 %v1180
      %v3741 = vunpack.c.l.b16 %v1181
      %v3742 = vunpack.c.l.b16 %v1182
      %v3743 = vunpack.c.l.b16 %v1183
      %v3744 = vunpack.c.l.b16 %v1184
      %v3745 = vunpack.c.l.b16 %v1185
      %v3746 = vunpack.c.l.b16 %v1186
      %v3747 = vunpack.c.l.b16 %v1187
      %v3748 = vunpack.c.l.b16 %v1188
      %v3749 = vunpack.c.l.b16 %v1189
      %v3750 = vunpack.c.l.b16 %v1190
      %v3751 = vunpack.c.l.b16 %v1191
      %v3752 = vunpack.c.l.b16 %v1192
      %v3753 = vunpack.c.l.b16 %v1193
      %v3754 = vunpack.c.l.b16 %v1194
      %v3755 = vunpack.c.l.b16 %v1195
      %v3756 = vunpack.c.l.b16 %v1196
      %v3757 = vunpack.c.l.b16 %v1197
      %v3758 = vunpack.c.l.b16 %v1198
      %v3759 = vunpack.c.l.b16 %v1199
      %v3760 = vunpack.c.l.b16 %v1200
      %v3761 = vunpack.c.l.b16 %v1201
      %v3762 = vunpack.c.l.b16 %v1202
      %v3763 = vunpack.c.l.b16 %v1203
      %v3764 = vunpack.c.l.b16 %v1204
      %v3765 = vunpack.c.l.b16 %v1205
      %v3766 = vunpack.c.l.b16 %v1206
      %v3767 = vunpack.c.l.b16 %v1207
      %v3768 = vunpack.c.l.b16 %v1208
      %v3769 = vunpack.c.l.b16 %v1209
      %v3770 = vunpack.c.l.b16 %v1210
      %v3771 = vunpack.c.l.b16 %v1211
      %v3772 = vunpack.c.l.b16 %v1212
      %v3773 = vunpack.c.l.b16 %v1213
      %v3774 = vunpack.c.l.b16 %v1214
      %v3775 = vunpack.c.l.b16 %v1215
      %v3776 = vunpack.c.l.b16 %v1216
      %v3777 = vunpack.c.l.b16 %v1217
      %v3778 = vunpack.c.l.b16 %v1218
      %v3779 = vunpack.c.l.b16 %v1219
      %v3780 = vunpack.c.l.b16 %v1220
      %v3781 = vunpack.c.l.b16 %v1221
      %v3782 = vunpack.c.l.b16 %v1222
      %v3783 = vunpack.c.l.b16 %v1223
      %v3784 = vunpack.c.l.b16 %v1224
      %v3785 = vunpack.c.l.b16 %v1225
      %v3786 = vunpack.c.l.b16 %v1226
      %v3787 = vunpack.c.l.b16 %v1227
      %v3788 = vunpack.c.l.b16 %v1228
      %v3789 = vunpack.c.l.b16 %v1229
      %v3790 = vunpack.c.l.b16 %v1230
      %v3791 = vunpack.c.l.b16 %v1231
      %v3792 = vunpack.c.l.b16 %v1232
      %v3793 = vunpack.c.l.b16 %v1233
      %v3794 = vunpack.c.l.b16 %v1234
      %v3795 = vunpack.c.l.b16 %v1235
      %v3796 = vunpack.c.l.b16 %v1236
      %v3797 = vunpack.c.l.b16 %v1237
      %v3798 = vunpack.c.l.b16 %v1238
      %v3799 = vunpack.c.l.b16 %v1239
      %v3800 = vunpack.c.l.b16 %v1240
      %v3801 = vunpack.c.l.b16 %v1241
      %v3802 = vunpack.c.l.b16 %v1242
      %v3803 = vunpack.c.l.b16 %v1243
      %v3804 = vunpack.c.l.b16 %v1244
      %v3805 = vunpack.c.l.b16 %v1245
      %v3806 = vunpack.c.l.b16 %v1246
      %v3807 = vunpack.c.l.b16 %v1247
      %v3808 = vunpack.c.l.b16 %v1248
      %v3809 = vunpack.c.l.b16 %v1249
      %v3810 = vunpack.c.l.b16 %v1250
      %v3811 = vunpack.c.l.b16 %v1251
      %v3812 = vunpack.c.l.b16 %v1252
      %v3813 = vunpack.c.l.b16 %v1253
      %v3814 = vunpack.c.l.b16 %v1254
      %v3815 = vunpack.c.l.b16 %v1255
      %v3816 = vunpack.c.l.b16 %v1256
      %v3817 = vunpack.c.l.b16 %v1257
      %v3818 = vunpack.c.l.b16 %v1258
      %v3819 = vunpack.c.l.b16 %v1259
      %v3820 = vunpack.c.l.b16 %v1260
      %v3821 = vunpack.c.l.b16 %v1261
      %v3822 = vunpack.c.l.b16 %v1262
      %v3823 = vunpack.c.l.b16 %v1263
      %v3824 = vunpack.c.l.b16 %v1264
      %v3825 = vunpack.c.l.b16 %v1265
      %v3826 = vunpack.c.l.b16 %v1266
      %v3827 = vunpack.c.l.b16 %v1267
      %v3828 = vunpack.c.l.b16 %v1268
      %v3829 = vunpack.c.l.b16 %v1269
      %v3830 = vunpack.c.l.b16 %v1270
      %v3831 = vunpack.c.l.b16 %v1271
      %v3832 = vunpack.c.l.b16 %v1272
      %v3833 = vunpack.c.l.b16 %v1273
      %v3834 = vunpack.c.l.b16 %v1274
      %v3835 = vunpack.c.l.b16 %v1275
      %v3836 = vunpack.c.l.b16 %v1276
      %v3837 = vunpack.c.l.b16 %v1277
      %v3838 = vunpack.c.l.b16 %v1278
      %v3839 = vunpack.c.l.b16 %v1279
      %v3840 = vunpack.c.l.b16 %v1280
      %v3841 = vunpack.c.l.b16 %v1281
      %v3842 = vunpack.c.l.b16 %v1282
      %v3843 = vunpack.c.l.b16 %v1283
      %v3844 = vunpack.c.l.b16 %v1284
      %v3845 = vunpack.c.l.b16 %v1285
      %v3846 = vunpack.c.l.b16 %v1286
      %v3847 = vunpack.c.l.b16 %v1287
      %v3848 = vunpack.c.l.b16 %v1288
      %v3849 = vunpack.c.l.b16 %v1289
      %v3850 = vunpack.c.l.b16 %v1290
      %v3851 = vunpack.c.l.b16 %v1291
      %v3852 = vunpack.c.l.b16 %v1292
      %v3853 = vunpack.c.l.b16 %v1293
      %v3854 = vunpack.c.l.b16 %v1294
      %v3855 = vunpack.c.l.b16 %v1295
      %v3856 = vunpack.c.l.b16 %v1296
      %v3857 = vunpack.c.l.b16 %v1297
      %v3858 = vunpack.c.l.b16 %v1298
      %v3859 = vunpack.c.l.b16 %v1299
      %v3860 = vunpack.c.l.b16 %v1300
      %v3861 = vunpack.c.l.b16 %v1301
      %v3862 = vunpack.c.l.b16 %v1302
      %v3863 = vunpack.c.l.b16 %v1303
      %v3864 = vunpack.c.l.b16 %v1304
      %v3865 = vunpack.c.l.b16 %v1305
      %v3866 = vunpack.c.l.b16 %v1306
      %v3867 = vunpack.c.l.b16 %v1307
      %v3868 = vunpack.c.l.b16 %v1308
      %v3869 = vunpack.c.l.b16 %v1309
      %v3870 = vunpack.c.l.b16 %v1310
      %v3871 = vunpack.c.l.b16 %v1311
      %v3872 = vunpack.c.l.b16 %v1312
      %v3873 = vunpack.c.l.b16 %v1313
      %v3874 = vunpack.c.l.b16 %v1314
      %v3875 = vunpack.c.l.b16 %v1315
      %v3876 = vunpack.c.l.b16 %v1316
      %v3877 = vunpack.c.l.b16 %v1317
      %v3878 = vunpack.c.l.b16 %v1318
      %v3879 = vunpack.c.l.b16 %v1319
      %v3880 = vunpack.c.l.b16 %v1320
      %v3881 = vunpack.c.l.b16 %v1321
      %v3882 = vunpack.c.l.b16 %v1322
      %v3883 = vunpack.c.l.b16 %v1323
      %v3884 = vunpack.c.l.b16 %v1324
      %v3885 = vunpack.c.l.b16 %v1325
      %v3886 = vunpack.c.l.b16 %v1326
      %v3887 = vunpack.c.l.b16 %v1327
      %v3888 = vunpack.c.l.b16 %v1328
      %v3889 = vunpack.c.l.b16 %v1329
      %v3890 = vunpack.c.l.b16 %v1330
      %v3891 = vunpack.c.l.b16 %v1331
      %v3892 = vunpack.c.l.b16 %v1332
      %v3893 = vunpack.c.l.b16 %v1333
      %v3894 = vunpack.c.l.b16 %v1334
      %v3895 = vunpack.c.l.b16 %v1335
      %v3896 = vunpack.c.l.b16 %v1336
      %v3897 = vunpack.c.l.b16 %v1337
      %v3898 = vunpack.c.l.b16 %v1338
      %v3899 = vunpack.c.l.b16 %v1339
      %v3900 = vunpack.c.l.b16 %v1340
      %v3901 = vunpack.c.l.b16 %v1341
      %v3902 = vunpack.c.l.b16 %v1342
      %v3903 = vunpack.c.l.b16 %v1343
      %v3904 = vunpack.c.l.b16 %v1344
      %v3905 = vunpack.c.l.b16 %v1345
      %v3906 = vunpack.c.l.b16 %v1346
      %v3907 = vunpack.c.l.b16 %v1347
      %v3908 = vunpack.c.l.b16 %v1348
      %v3909 = vunpack.c.l.b16 %v1349
      %v3910 = vunpack.c.l.b16 %v1350
      %v3911 = vunpack.c.l.b16 %v1351
      %v3912 = vunpack.c.l.b16 %v1352
      %v3913 = vunpack.c.l.b16 %v1353
      %v3914 = vunpack.c.l.b16 %v1354
      %v3915 = vunpack.c.l.b16 %v1355
      %v3916 = vunpack.c.l.b16 %v1356
      %v3917 = vunpack.c.l.b16 %v1357
      %v3918 = vunpack.c.l.b16 %v1358
      %v3919 = vunpack.c.l.b16 %v1359
      %v3920 = vunpack.c.l.b16 %v1360
      %v3921 = vunpack.c.l.b16 %v1361
      %v3922 = vunpack.c.l.b16 %v1362
      %v3923 = vunpack.c.l.b16 %v1363
      %v3924 = vunpack.c.l.b16 %v1364
      %v3925 = vunpack.c.l.b16 %v1365
      %v3926 = vunpack.c.l.b16 %v1366
      %v3927 = vunpack.c.l.b16 %v1367
      %v3928 = vunpack.c.l.b16 %v1368
      %v3929 = vunpack.c.l.b16 %v1369
      %v3930 = vunpack.c.l.b16 %v1370
      %v3931 = vunpack.c.l.b16 %v1371
      %v3932 = vunpack.c.l.b16 %v1372
      %v3933 = vunpack.c.l.b16 %v1373
      %v3934 = vunpack.c.l.b16 %v1374
      %v3935 = vunpack.c.l.b16 %v1375
      %v3936 = vunpack.c.l.b16 %v1376
      %v3937 = vunpack.c.l.b16 %v1377
      %v3938 = vunpack.c.l.b16 %v1378
      %v3939 = vunpack.c.l.b16 %v1379
      %v3940 = vunpack.c.l.b16 %v1380
      %v3941 = vunpack.c.l.b16 %v1381
      %v3942 = vunpack.c.l.b16 %v1382
      %v3943 = vunpack.c.l.b16 %v1383
      %v3944 = vunpack.c.l.b16 %v1384
      %v3945 = vunpack.c.l.b16 %v1385
      %v3946 = vunpack.c.l.b16 %v1386
      %v3947 = vunpack.c.l.b16 %v1387
      %v3948 = vunpack.c.l.b16 %v1388
      %v3949 = vunpack.c.l.b16 %v1389
      %v3950 = vunpack.c.l.b16 %v1390
      %v3951 = vunpack.c.l.b16 %v1391
      %v3952 = vunpack.c.l.b16 %v1392
      %v3953 = vunpack.c.l.b16 %v1393
      %v3954 = vunpack.c.l.b16 %v1394
      %v3955 = vunpack.c.l.b16 %v1395
      %v3956 = vunpack.c.l.b16 %v1396
      %v3957 = vunpack.c.l.b16 %v1397
      %v3958 = vunpack.c.l.b16 %v1398
      %v3959 = vunpack.c.l.b16 %v1399
      %v3960 = vunpack.c.l.b16 %v1400
      %v3961 = vunpack.c.l.b16 %v1401
      %v3962 = vunpack.c.l.b16 %v1402
      %v3963 = vunpack.c.l.b16 %v1403
      %v3964 = vunpack.c.l.b16 %v1404
      %v3965 = vunpack.c.l.b16 %v1405
      %v3966 = vunpack.c.l.b16 %v1406
      %v3967 = vunpack.c.l.b16 %v1407
      %v3968 = vunpack.c.l.b16 %v1408
      %v3969 = vunpack.c.l.b16 %v1409
      %v3970 = vunpack.c.l.b16 %v1410
      %v3971 = vunpack.c.l.b16 %v1411
      %v3972 = vunpack.c.l.b16 %v1412
      %v3973 = vunpack.c.l.b16 %v1413
      %v3974 = vunpack.c.l.b16 %v1414
      %v3975 = vunpack.c.l.b16 %v1415
      %v3976 = vunpack.c.l.b16 %v1416
      %v3977 = vunpack.c.l.b16 %v1417
      %v3978 = vunpack.c.l.b16 %v1418
      %v3979 = vunpack.c.l.b16 %v1419
      %v3980 = vunpack.c.l.b16 %v1420
      %v3981 = vunpack.c.l.b16 %v1421
      %v3982 = vunpack.c.l.b16 %v1422
      %v3983 = vunpack.c.l.b16 %v1423
      %v3984 = vunpack.c.l.b16 %v1424
      %v3985 = vunpack.c.l.b16 %v1425
      %v3986 = vunpack.c.l.b16 %v1426
      %v3987 = vunpack.c.l.b16 %v1427
      %v3988 = vunpack.c.l.b16 %v1428
      %v3989 = vunpack.c.l.b16 %v1429
      %v3990 = vunpack.c.l.b16 %v1430
      %v3991 = vunpack.c.l.b16 %v1431
      %v3992 = vunpack.c.l.b16 %v1432
      %v3993 = vunpack.c.l.b16 %v1433
      %v3994 = vunpack.c.l.b16 %v1434
      %v3995 = vunpack.c.l.b16 %v1435
      %v3996 = vunpack.c.l.b16 %v1436
      %v3997 = vunpack.c.l.b16 %v1437
      %v3998 = vunpack.c.l.b16 %v1438
      %v3999 = vunpack.c.l.b16 %v1439
      %v4000 = vunpack.c.l.b16 %v1440
      %v4001 = vunpack.c.l.b16 %v1441
      %v4002 = vunpack.c.l.b16 %v1442
      %v4003 = vunpack.c.l.b16 %v1443
      %v4004 = vunpack.c.l.b16 %v1444
      %v4005 = vunpack.c.l.b16 %v1445
      %v4006 = vunpack.c.l.b16 %v1446
      %v4007 = vunpack.c.l.b16 %v1447
      %v4008 = vunpack.c.l.b16 %v1448
      %v4009 = vunpack.c.l.b16 %v1449
      %v4010 = vunpack.c.l.b16 %v1450
      %v4011 = vunpack.c.l.b16 %v1451
      %v4012 = vunpack.c.l.b16 %v1452
      %v4013 = vunpack.c.l.b16 %v1453
      %v4014 = vunpack.c.l.b16 %v1454
      %v4015 = vunpack.c.l.b16 %v1455
      %v4016 = vunpack.c.l.b16 %v1456
      %v4017 = vunpack.c.l.b16 %v1457
      %v4018 = vunpack.c.l.b16 %v1458
      %v4019 = vunpack.c.l.b16 %v1459
      %v4020 = vunpack.c.l.b16 %v1460
      %v4021 = vunpack.c.l.b16 %v1461
      %v4022 = vunpack.c.l.b16 %v1462
      %v4023 = vunpack.c.l.b16 %v1463
      %v4024 = vunpack.c.l.b16 %v1464
      %v4025 = vunpack.c.l.b16 %v1465
      %v4026 = vunpack.c.l.b16 %v1466
      %v4027 = vunpack.c.l.b16 %v1467
      %v4028 = vunpack.c.l.b16 %v1468
      %v4029 = vunpack.c.l.b16 %v1469
      %v4030 = vunpack.c.l.b16 %v1470
      %v4031 = vunpack.c.l.b16 %v1471
      %v4032 = vunpack.c.l.b16 %v1472
      %v4033 = vunpack.c.l.b16 %v1473
      %v4034 = vunpack.c.l.b16 %v1474
      %v4035 = vunpack.c.l.b16 %v1475
      %v4036 = vunpack.c.l.b16 %v1476
      %v4037 = vunpack.c.l.b16 %v1477
      %v4038 = vunpack.c.l.b16 %v1478
      %v4039 = vunpack.c.l.b16 %v1479
      %v4040 = vunpack.c.l.b16 %v1480
      %v4041 = vunpack.c.l.b16 %v1481
      %v4042 = vunpack.c.l.b16 %v1482
      %v4043 = vunpack.c.l.b16 %v1483
      %v4044 = vunpack.c.l.b16 %v1484
      %v4045 = vunpack.c.l.b16 %v1485
      %v4046 = vunpack.c.l.b16 %v1486
      %v4047 = vunpack.c.l.b16 %v1487
      %v4048 = vunpack.c.l.b16 %v1488
      %v4049 = vunpack.c.l.b16 %v1489
      %v4050 = vunpack.c.l.b16 %v1490
      %v4051 = vunpack.c.l.b16 %v1491
      %v4052 = vunpack.c.l.b16 %v1492
      %v4053 = vunpack.c.l.b16 %v1493
      %v4054 = vunpack.c.l.b16 %v1494
      %v4055 = vunpack.c.l.b16 %v1495
      %v4056 = vunpack.c.l.b16 %v1496
      %v4057 = vunpack.c.l.b16 %v1497
      %v4058 = vunpack.c.l.b16 %v1498
      %v4059 = vunpack.c.l.b16 %v1499
      %v4060 = vunpack.c.l.b16 %v1500
      %v4061 = vunpack.c.l.b16 %v1501
      %v4062 = vunpack.c.l.b16 %v1502
      %v4063 = vunpack.c.l.b16 %v1503
      %v4064 = vunpack.c.l.b16 %v1504
      %v4065 = vunpack.c.l.b16 %v1505
      %v4066 = vunpack.c.l.b16 %v1506
      %v4067 = vunpack.c.l.b16 %v1507
      %v4068 = vunpack.c.l.b16 %v1508
      %v4069 = vunpack.c.l.b16 %v1509
      %v4070 = vunpack.c.l.b16 %v1510
      %v4071 = vunpack.c.l.b16 %v1511
      %v4072 = vunpack.c.l.b16 %v1512
      %v4073 = vunpack.c.l.b16 %v1513
      %v4074 = vunpack.c.l.b16 %v1514
      %v4075 = vunpack.c.l.b16 %v1515
      %v4076 = vunpack.c.l.b16 %v1516
      %v4077 = vunpack.c.l.b16 %v1517
      %v4078 = vunpack.c.l.b16 %v1518
      %v4079 = vunpack.c.l.b16 %v1519
      %v4080 = vunpack.c.l.b16 %v1520
      %v4081 = vunpack.c.l.b16 %v1521
      %v4082 = vunpack.c.l.b16 %v1522
      %v4083 = vunpack.c.l.b16 %v1523
      %v4084 = vunpack.c.l.b16 %v1524
      %v4085 = vunpack.c.l.b16 %v1525
      %v4086 = vunpack.c.l.b16 %v1526
      %v4087 = vunpack.c.l.b16 %v1527
      %v4088 = vunpack.c.l.b16 %v1528
      %v4089 = vunpack.c.l.b16 %v1529
      %v4090 = vunpack.c.l.b16 %v1530
      %v4091 = vunpack.c.l.b16 %v1531
      %v4092 = vunpack.c.l.b16 %v1532
      %v4093 = vunpack.c.l.b16 %v1533
      %v4094 = vunpack.c.l.b16 %v1534
      %v4095 = vunpack.c.l.b16 %v1535
      %v4096 = vunpack.c.l.b16 %v1536
      %v4097 = vunpack.c.l.b16 %v1537
      %v4098 = vunpack.c.l.b16 %v1538
      %v4099 = vunpack.c.l.b16 %v1539
      %v4100 = vunpack.c.l.b16 %v1540
      %v4101 = vunpack.c.l.b16 %v1541
      %v4102 = vunpack.c.l.b16 %v1542
      %v4103 = vunpack.c.l.b16 %v1543
      %v4104 = vunpack.c.l.b16 %v1544
      %v4105 = vunpack.c.l.b16 %v1545
      %v4106 = vunpack.c.l.b16 %v1546
      %v4107 = vunpack.c.l.b16 %v1547
      %v4108 = vunpack.c.l.b16 %v1548
      %v4109 = vunpack.c.l.b16 %v1549
      %v4110 = vunpack.c.l.b16 %v1550
      %v4111 = vunpack.c.l.b16 %v1551
      %v4112 = vunpack.c.l.b16 %v1552
      %v4113 = vunpack.c.l.b16 %v1553
      %v4114 = vunpack.c.l.b16 %v1554
      %v4115 = vunpack.c.l.b16 %v1555
      %v4116 = vunpack.c.l.b16 %v1556
      %v4117 = vunpack.c.l.b16 %v1557
      %v4118 = vunpack.c.l.b16 %v1558
      %v4119 = vunpack.c.l.b16 %v1559
      %v4120 = vunpack.c.l.b16 %v1560
      %v4121 = vunpack.c.l.b16 %v1561
      %v4122 = vunpack.c.l.b16 %v1562
      %v4123 = vunpack.c.l.b16 %v1563
      %v4124 = vunpack.c.l.b16 %v1564
      %v4125 = vunpack.c.l.b16 %v1565
      %v4126 = vunpack.c.l.b16 %v1566
      %v4127 = vunpack.c.l.b16 %v1567
      %v4128 = vunpack.c.l.b16 %v1568
      %v4129 = vunpack.c.l.b16 %v1569
      %v4130 = vunpack.c.l.b16 %v1570
      %v4131 = vunpack.c.l.b16 %v1571
      %v4132 = vunpack.c.l.b16 %v1572
      %v4133 = vunpack.c.l.b16 %v1573
      %v4134 = vunpack.c.l.b16 %v1574
      %v4135 = vunpack.c.l.b16 %v1575
      %v4136 = vunpack.c.l.b16 %v1576
      %v4137 = vunpack.c.l.b16 %v1577
      %v4138 = vunpack.c.l.b16 %v1578
      %v4139 = vunpack.c.l.b16 %v1579
      %v4140 = vunpack.c.l.b16 %v1580
      %v4141 = vunpack.c.l.b16 %v1581
      %v4142 = vunpack.c.l.b16 %v1582
      %v4143 = vunpack.c.l.b16 %v1583
      %v4144 = vunpack.c.l.b16 %v1584
      %v4145 = vunpack.c.l.b16 %v1585
      %v4146 = vunpack.c.l.b16 %v1586
      %v4147 = vunpack.c.l.b16 %v1587
      %v4148 = vunpack.c.l.b16 %v1588
      %v4149 = vunpack.c.l.b16 %v1589
      %v4150 = vunpack.c.l.b16 %v1590
      %v4151 = vunpack.c.l.b16 %v1591
      %v4152 = vunpack.c.l.b16 %v1592
      %v4153 = vunpack.c.l.b16 %v1593
      %v4154 = vunpack.c.l.b16 %v1594
      %v4155 = vunpack.c.l.b16 %v1595
      %v4156 = vunpack.c.l.b16 %v1596
      %v4157 = vunpack.c.l.b16 %v1597
      %v4158 = vunpack.c.l.b16 %v1598
      %v4159 = vunpack.c.l.b16 %v1599
      %v4160 = vunpack.c.l.b16 %v1600
      %v4161 = vunpack.c.l.b16 %v1601
      %v4162 = vunpack.c.l.b16 %v1602
      %v4163 = vunpack.c.l.b16 %v1603
      %v4164 = vunpack.c.l.b16 %v1604
      %v4165 = vunpack.c.l.b16 %v1605
      %v4166 = vunpack.c.l.b16 %v1606
      %v4167 = vunpack.c.l.b16 %v1607
      %v4168 = vunpack.c.l.b16 %v1608
      %v4169 = vunpack.c.l.b16 %v1609
      %v4170 = vunpack.c.l.b16 %v1610
      %v4171 = vunpack.c.l.b16 %v1611
      %v4172 = vunpack.c.l.b16 %v1612
      %v4173 = vunpack.c.l.b16 %v1613
      %v4174 = vunpack.c.l.b16 %v1614
      %v4175 = vunpack.c.l.b16 %v1615
      %v4176 = vunpack.c.l.b16 %v1616
      %v4177 = vunpack.c.l.b16 %v1617
      %v4178 = vunpack.c.l.b16 %v1618
      %v4179 = vunpack.c.l.b16 %v1619
      %v4180 = vunpack.c.l.b16 %v1620
      %v4181 = vunpack.c.l.b16 %v1621
      %v4182 = vunpack.c.l.b16 %v1622
      %v4183 = vunpack.c.l.b16 %v1623
      %v4184 = vunpack.c.l.b16 %v1624
      %v4185 = vunpack.c.l.b16 %v1625
      %v4186 = vunpack.c.l.b16 %v1626
      %v4187 = vunpack.c.l.b16 %v1627
      %v4188 = vunpack.c.l.b16 %v1628
      %v4189 = vunpack.c.l.b16 %v1629
      %v4190 = vunpack.c.l.b16 %v1630
      %v4191 = vunpack.c.l.b16 %v1631
      %v4192 = vunpack.c.l.b16 %v1632
      %v4193 = vunpack.c.l.b16 %v1633
      %v4194 = vunpack.c.l.b16 %v1634
      %v4195 = vunpack.c.l.b16 %v1635
      %v4196 = vunpack.c.l.b16 %v1636
      %v4197 = vunpack.c.l.b16 %v1637
      %v4198 = vunpack.c.l.b16 %v1638
      %v4199 = vunpack.c.l.b16 %v1639
      %v4200 = vunpack.c.l.b16 %v1640
      %v4201 = vunpack.c.l.b16 %v1641
      %v4202 = vunpack.c.l.b16 %v1642
      %v4203 = vunpack.c.l.b16 %v1643
      %v4204 = vunpack.c.l.b16 %v1644
      %v4205 = vunpack.c.l.b16 %v1645
      %v4206 = vunpack.c.l.b16 %v1646
      %v4207 = vunpack.c.l.b16 %v1647
      %v4208 = vunpack.c.l.b16 %v1648
      %v4209 = vunpack.c.l.b16 %v1649
      %v4210 = vunpack.c.l.b16 %v1650
      %v4211 = vunpack.c.l.b16 %v1651
      %v4212 = vunpack.c.l.b16 %v1652
      %v4213 = vunpack.c.l.b16 %v1653
      %v4214 = vunpack.c.l.b16 %v1654
      %v4215 = vunpack.c.l.b16 %v1655
      %v4216 = vunpack.c.l.b16 %v1656
      %v4217 = vunpack.c.l.b16 %v1657
      %v4218 = vunpack.c.l.b16 %v1658
      %v4219 = vunpack.c.l.b16 %v1659
      %v4220 = vunpack.c.l.b16 %v1660
      %v4221 = vunpack.c.l.b16 %v1661
      %v4222 = vunpack.c.l.b16 %v1662
      %v4223 = vunpack.c.l.b16 %v1663
      %v4224 = vunpack.c.l.b16 %v1664
      %v4225 = vunpack.c.l.b16 %v1665
      %v4226 = vunpack.c.l.b16 %v1666
      %v4227 = vunpack.c.l.b16 %v1667
      %v4228 = vunpack.c.l.b16 %v1668
      %v4229 = vunpack.c.l.b16 %v1669
      %v4230 = vunpack.c.l.b16 %v1670
      %v4231 = vunpack.c.l.b16 %v1671
      %v4232 = vunpack.c.l.b16 %v1672
      %v4233 = vunpack.c.l.b16 %v1673
      %v4234 = vunpack.c.l.b16 %v1674
      %v4235 = vunpack.c.l.b16 %v1675
      %v4236 = vunpack.c.l.b16 %v1676
      %v4237 = vunpack.c.l.b16 %v1677
      %v4238 = vunpack.c.l.b16 %v1678
      %v4239 = vunpack.c.l.b16 %v1679
      %v4240 = vunpack.c.l.b16 %v1680
      %v4241 = vunpack.c.l.b16 %v1681
      %v4242 = vunpack.c.l.b16 %v1682
      %v4243 = vunpack.c.l.b16 %v1683
      %v4244 = vunpack.c.l.b16 %v1684
      %v4245 = vunpack.c.l.b16 %v1685
      %v4246 = vunpack.c.l.b16 %v1686
      %v4247 = vunpack.c.l.b16 %v1687
      %v4248 = vunpack.c.l.b16 %v1688
      %v4249 = vunpack.c.l.b16 %v1689
      %v4250 = vunpack.c.l.b16 %v1690
      %v4251 = vunpack.c.l.b16 %v1691
      %v4252 = vunpack.c.l.b16 %v1692
      %v4253 = vunpack.c.l.b16 %v1693
      %v4254 = vunpack.c.l.b16 %v1694
      %v4255 = vunpack.c.l.b16 %v1695
      %v4256 = vunpack.c.l.b16 %v1696
      %v4257 = vunpack.c.l.b16 %v1697
      %v4258 = vunpack.c.l.b16 %v1698
      %v4259 = vunpack.c.l.b16 %v1699
      %v4260 = vunpack.c.l.b16 %v1700
      %v4261 = vunpack.c.l.b16 %v1701
      %v4262 = vunpack.c.l.b16 %v1702
      %v4263 = vunpack.c.l.b16 %v1703
      %v4264 = vunpack.c.l.b16 %v1704
      %v4265 = vunpack.c.l.b16 %v1705
      %v4266 = vunpack.c.l.b16 %v1706
      %v4267 = vunpack.c.l.b16 %v1707
      %v4268 = vunpack.c.l.b16 %v1708
      %v4269 = vunpack.c.l.b16 %v1709
      %v4270 = vunpack.c.l.b16 %v1710
      %v4271 = vunpack.c.l.b16 %v1711
      %v4272 = vunpack.c.l.b16 %v1712
      %v4273 = vunpack.c.l.b16 %v1713
      %v4274 = vunpack.c.l.b16 %v1714
      %v4275 = vunpack.c.l.b16 %v1715
      %v4276 = vunpack.c.l.b16 %v1716
      %v4277 = vunpack.c.l.b16 %v1717
      %v4278 = vunpack.c.l.b16 %v1718
      %v4279 = vunpack.c.l.b16 %v1719
      %v4280 = vunpack.c.l.b16 %v1720
      %v4281 = vunpack.c.l.b16 %v1721
      %v4282 = vunpack.c.l.b16 %v1722
      %v4283 = vunpack.c.l.b16 %v1723
      %v4284 = vunpack.c.l.b16 %v1724
      %v4285 = vunpack.c.l.b16 %v1725
      %v4286 = vunpack.c.l.b16 %v1726
      %v4287 = vunpack.c.l.b16 %v1727
      %v4288 = vunpack.c.l.b16 %v1728
      %v4289 = vunpack.c.l.b16 %v1729
      %v4290 = vunpack.c.l.b16 %v1730
      %v4291 = vunpack.c.l.b16 %v1731
      %v4292 = vunpack.c.l.b16 %v1732
      %v4293 = vunpack.c.l.b16 %v1733
      %v4294 = vunpack.c.l.b16 %v1734
      %v4295 = vunpack.c.l.b16 %v1735
      %v4296 = vunpack.c.l.b16 %v1736
      %v4297 = vunpack.c.l.b16 %v1737
      %v4298 = vunpack.c.l.b16 %v1738
      %v4299 = vunpack.c.l.b16 %v1739
      %v4300 = vunpack.c.l.b16 %v1740
      %v4301 = vunpack.c.l.b16 %v1741
      %v4302 = vunpack.c.l.b16 %v1742
      %v4303 = vunpack.c.l.b16 %v1743
      %v4304 = vunpack.c.l.b16 %v1744
      %v4305 = vunpack.c.l.b16 %v1745
      %v4306 = vunpack.c.l.b16 %v1746
      %v4307 = vunpack.c.l.b16 %v1747
      %v4308 = vunpack.c.l.b16 %v1748
      %v4309 = vunpack.c.l.b16 %v1749
      %v4310 = vunpack.c.l.b16 %v1750
      %v4311 = vunpack.c.l.b16 %v1751
      %v4312 = vunpack.c.l.b16 %v1752
      %v4313 = vunpack.c.l.b16 %v1753
      %v4314 = vunpack.c.l.b16 %v1754
      %v4315 = vunpack.c.l.b16 %v1755
      %v4316 = vunpack.c.l.b16 %v1756
      %v4317 = vunpack.c.l.b16 %v1757
      %v4318 = vunpack.c.l.b16 %v1758
      %v4319 = vunpack.c.l.b16 %v1759
      %v4320 = vunpack.c.l.b16 %v1760
      %v4321 = vunpack.c.l.b16 %v1761
      %v4322 = vunpack.c.l.b16 %v1762
      %v4323 = vunpack.c.l.b16 %v1763
      %v4324 = vunpack.c.l.b16 %v1764
      %v4325 = vunpack.c.l.b16 %v1765
      %v4326 = vunpack.c.l.b16 %v1766
      %v4327 = vunpack.c.l.b16 %v1767
      %v4328 = vunpack.c.l.b16 %v1768
      %v4329 = vunpack.c.l.b16 %v1769
      %v4330 = vunpack.c.l.b16 %v1770
      %v4331 = vunpack.c.l.b16 %v1771
      %v4332 = vunpack.c.l.b16 %v1772
      %v4333 = vunpack.c.l.b16 %v1773
      %v4334 = vunpack.c.l.b16 %v1774
      %v4335 = vunpack.c.l.b16 %v1775
      %v4336 = vunpack.c.l.b16 %v1776
      %v4337 = vunpack.c.l.b16 %v1777
      %v4338 = vunpack.c.l.b16 %v1778
      %v4339 = vunpack.c.l.b16 %v1779
      %v4340 = vunpack.c.l.b16 %v1780
      %v4341 = vunpack.c.l.b16 %v1781
      %v4342 = vunpack.c.l.b16 %v1782
      %v4343 = vunpack.c.l.b16 %v1783
      %v4344 = vunpack.c.l.b16 %v1784
      %v4345 = vunpack.c.l.b16 %v1785
      %v4346 = vunpack.c.l.b16 %v1786
      %v4347 = vunpack.c.l.b16 %v1787
      %v4348 = vunpack.c.l.b16 %v1788
      %v4349 = vunpack.c.l.b16 %v1789
      %v4350 = vunpack.c.l.b16 %v1790
      %v4351 = vunpack.c.l.b16 %v1791
      %v4352 = vunpack.c.l.b16 %v1792
      %v4353 = vunpack.c.l.b16 %v1793
      %v4354 = vunpack.c.l.b16 %v1794
      %v4355 = vunpack.c.l.b16 %v1795
      %v4356 = vunpack.c.l.b16 %v1796
      %v4357 = vunpack.c.l.b16 %v1797
      %v4358 = vunpack.c.l.b16 %v1798
      %v4359 = vunpack.c.l.b16 %v1799
      %v4360 = vunpack.c.l.b16 %v1800
      %v4361 = vunpack.c.l.b16 %v1801
      %v4362 = vunpack.c.l.b16 %v1802
      %v4363 = vunpack.c.l.b16 %v1803
      %v4364 = vunpack.c.l.b16 %v1804
      %v4365 = vunpack.c.l.b16 %v1805
      %v4366 = vunpack.c.l.b16 %v1806
      %v4367 = vunpack.c.l.b16 %v1807
      %v4368 = vunpack.c.l.b16 %v1808
      %v4369 = vunpack.c.l.b16 %v1809
      %v4370 = vunpack.c.l.b16 %v1810
      %v4371 = vunpack.c.l.b16 %v1811
      %v4372 = vunpack.c.l.b16 %v1812
      %v4373 = vunpack.c.l.b16 %v1813
      %v4374 = vunpack.c.l.b16 %v1814
      %v4375 = vunpack.c.l.b16 %v1815
      %v4376 = vunpack.c.l.b16 %v1816
      %v4377 = vunpack.c.l.b16 %v1817
      %v4378 = vunpack.c.l.b16 %v1818
      %v4379 = vunpack.c.l.b16 %v1819
      %v4380 = vunpack.c.l.b16 %v1820
      %v4381 = vunpack.c.l.b16 %v1821
      %v4382 = vunpack.c.l.b16 %v1822
      %v4383 = vunpack.c.l.b16 %v1823
      %v4384 = vunpack.c.l.b16 %v1824
      %v4385 = vunpack.c.l.b16 %v1825
      %v4386 = vunpack.c.l.b16 %v1826
      %v4387 = vunpack.c.l.b16 %v1827
      %v4388 = vunpack.c.l.b16 %v1828
      %v4389 = vunpack.c.l.b16 %v1829
      %v4390 = vunpack.c.l.b16 %v1830
      %v4391 = vunpack.c.l.b16 %v1831
      %v4392 = vunpack.c.l.b16 %v1832
      %v4393 = vunpack.c.l.b16 %v1833
      %v4394 = vunpack.c.l.b16 %v1834
      %v4395 = vunpack.c.l.b16 %v1835
      %v4396 = vunpack.c.l.b16 %v1836
      %v4397 = vunpack.c.l.b16 %v1837
      %v4398 = vunpack.c.l.b16 %v1838
      %v4399 = vunpack.c.l.b16 %v1839
      %v4400 = vunpack.c.l.b16 %v1840
      %v4401 = vunpack.c.l.b16 %v1841
      %v4402 = vunpack.c.l.b16 %v1842
      %v4403 = vunpack.c.l.b16 %v1843
      %v4404 = vunpack.c.l.b16 %v1844
      %v4405 = vunpack.c.l.b16 %v1845
      %v4406 = vunpack.c.l.b16 %v1846
      %v4407 = vunpack.c.l.b16 %v1847
      %v4408 = vunpack.c.l.b16 %v1848
      %v4409 = vunpack.c.l.b16 %v1849
      %v4410 = vunpack.c.l.b16 %v1850
      %v4411 = vunpack.c.l.b16 %v1851
      %v4412 = vunpack.c.l.b16 %v1852
      %v4413 = vunpack.c.l.b16 %v1853
      %v4414 = vunpack.c.l.b16 %v1854
      %v4415 = vunpack.c.l.b16 %v1855
      %v4416 = vunpack.c.l.b16 %v1856
      %v4417 = vunpack.c.l.b16 %v1857
      %v4418 = vunpack.c.l.b16 %v1858
      %v4419 = vunpack.c.l.b16 %v1859
      %v4420 = vunpack.c.l.b16 %v1860
      %v4421 = vunpack.c.l.b16 %v1861
      %v4422 = vunpack.c.l.b16 %v1862
      %v4423 = vunpack.c.l.b16 %v1863
      %v4424 = vunpack.c.l.b16 %v1864
      %v4425 = vunpack.c.l.b16 %v1865
      %v4426 = vunpack.c.l.b16 %v1866
      %v4427 = vunpack.c.l.b16 %v1867
      %v4428 = vunpack.c.l.b16 %v1868
      %v4429 = vunpack.c.l.b16 %v1869
      %v4430 = vunpack.c.l.b16 %v1870
      %v4431 = vunpack.c.l.b16 %v1871
      %v4432 = vunpack.c.l.b16 %v1872
      %v4433 = vunpack.c.l.b16 %v1873
      %v4434 = vunpack.c.l.b16 %v1874
      %v4435 = vunpack.c.l.b16 %v1875
      %v4436 = vunpack.c.l.b16 %v1876
      %v4437 = vunpack.c.l.b16 %v1877
      %v4438 = vunpack.c.l.b16 %v1878
      %v4439 = vunpack.c.l.b16 %v1879
      %v4440 = vunpack.c.l.b16 %v1880
      %v4441 = vunpack.c.l.b16 %v1881
      %v4442 = vpack.c.b16 %v3163, %v3162
      %v4443 = vpack.c.b16 %v3165, %v3164
      %v4444 = vpack.c.b16 %v3167, %v3166
      %v4445 = vpack.c.b16 %v3169, %v3168
      %v4446 = vpack.c.b16 %v3171, %v3170
      %v4447 = vpack.c.b16 %v3173, %v3172
      %v4448 = vpack.c.b16 %v3175, %v3174
      %v4449 = vpack.c.b16 %v3177, %v3176
      %v4450 = vpack.c.b16 %v3179, %v3178
      %v4451 = vpack.c.b16 %v3181, %v3180
      %v4452 = vpack.c.b16 %v3183, %v3182
      %v4453 = vpack.c.b16 %v3185, %v3184
      %v4454 = vpack.c.b16 %v3187, %v3186
      %v4455 = vpack.c.b16 %v3189, %v3188
      %v4456 = vpack.c.b16 %v3191, %v3190
      %v4457 = vpack.c.b16 %v3193, %v3192
      %v4458 = vpack.c.b16 %v3195, %v3194
      %v4459 = vpack.c.b16 %v3197, %v3196
      %v4460 = vpack.c.b16 %v3199, %v3198
      %v4461 = vpack.c.b16 %v3201, %v3200
      %v4462 = vpack.c.b16 %v3203, %v3202
      %v4463 = vpack.c.b16 %v3205, %v3204
      %v4464 = vpack.c.b16 %v3207, %v3206
      %v4465 = vpack.c.b16 %v3209, %v3208
      %v4466 = vpack.c.b16 %v3211, %v3210
      %v4467 = vpack.c.b16 %v3213, %v3212
      %v4468 = vpack.c.b16 %v3215, %v3214
      %v4469 = vpack.c.b16 %v3217, %v3216
      %v4470 = vpack.c.b16 %v3219, %v3218
      %v4471 = vpack.c.b16 %v3221, %v3220
      %v4472 = vpack.c.b16 %v3223, %v3222
      %v4473 = vpack.c.b16 %v3225, %v3224
      %v4474 = vpack.c.b16 %v3227, %v3226
      %v4475 = vpack.c.b16 %v3229, %v3228
      %v4476 = vpack.c.b16 %v3231, %v3230
      %v4477 = vpack.c.b16 %v3233, %v3232
      %v4478 = vpack.c.b16 %v3235, %v3234
      %v4479 = vpack.c.b16 %v3237, %v3236
      %v4480 = vpack.c.b16 %v3239, %v3238
      %v4481 = vpack.c.b16 %v3241, %v3240
      %v4482 = vpack.c.b16 %v3243, %v3242
      %v4483 = vpack.c.b16 %v3245, %v3244
      %v4484 = vpack.c.b16 %v3247, %v3246
      %v4485 = vpack.c.b16 %v3249, %v3248
      %v4486 = vpack.c.b16 %v3251, %v3250
      %v4487 = vpack.c.b16 %v3253, %v3252
      %v4488 = vpack.c.b16 %v3255, %v3254
      %v4489 = vpack.c.b16 %v3257, %v3256
      %v4490 = vpack.c.b16 %v3259, %v3258
      %v4491 = vpack.c.b16 %v3261, %v3260
      %v4492 = vpack.c.b16 %v3263, %v3262
      %v4493 = vpack.c.b16 %v3265, %v3264
      %v4494 = vpack.c.b16 %v3267, %v3266
      %v4495 = vpack.c.b16 %v3269, %v3268
      %v4496 = vpack.c.b16 %v3271, %v3270
      %v4497 = vpack.c.b16 %v3273, %v3272
      %v4498 = vpack.c.b16 %v3275, %v3274
      %v4499 = vpack.c.b16 %v3277, %v3276
      %v4500 = vpack.c.b16 %v3279, %v3278
      %v4501 = vpack.c.b16 %v3281, %v3280
      %v4502 = vpack.c.b16 %v3283, %v3282
      %v4503 = vpack.c.b16 %v3285, %v3284
      %v4504 = vpack.c.b16 %v3287, %v3286
      %v4505 = vpack.c.b16 %v3289, %v3288
      %v4506 = vpack.c.b16 %v3291, %v3290
      %v4507 = vpack.c.b16 %v3293, %v3292
      %v4508 = vpack.c.b16 %v3295, %v3294
      %v4509 = vpack.c.b16 %v3297, %v3296
      %v4510 = vpack.c.b16 %v3299, %v3298
      %v4511 = vpack.c.b16 %v3301, %v3300
      %v4512 = vpack.c.b16 %v3303, %v3302
      %v4513 = vpack.c.b16 %v3305, %v3304
      %v4514 = vpack.c.b16 %v3307, %v3306
      %v4515 = vpack.c.b16 %v3309, %v3308
      %v4516 = vpack.c.b16 %v3311, %v3310
      %v4517 = vpack.c.b16 %v3313, %v3312
      %v4518 = vpack.c.b16 %v3315, %v3314
      %v4519 = vpack.c.b16 %v3317, %v3316
      %v4520 = vpack.c.b16 %v3319, %v3318
      %v4521 = vpack.c.b16 %v3321, %v3320
      %v4522 = vpack.c.b16 %v3323, %v3322
      %v4523 = vpack.c.b16 %v3325, %v3324
      %v4524 = vpack.c.b16 %v3327, %v3326
      %v4525 = vpack.c.b16 %v3329, %v3328
      %v4526 = vpack.c.b16 %v3331, %v3330
      %v4527 = vpack.c.b16 %v3333, %v3332
      %v4528 = vpack.c.b16 %v3335, %v3334
      %v4529 = vpack.c.b16 %v3337, %v3336
      %v4530 = vpack.c.b16 %v3339, %v3338
      %v4531 = vpack.c.b16 %v3341, %v3340
      %v4532 = vpack.c.b16 %v3343, %v3342
      %v4533 = vpack.c.b16 %v3345, %v3344
      %v4534 = vpack.c.b16 %v3347, %v3346
      %v4535 = vpack.c.b16 %v3349, %v3348
      %v4536 = vpack.c.b16 %v3351, %v3350
      %v4537 = vpack.c.b16 %v3353, %v3352
      %v4538 = vpack.c.b16 %v3355, %v3354
      %v4539 = vpack.c.b16 %v3357, %v3356
      %v4540 = vpack.c.b16 %v3359, %v3358
      %v4541 = vpack.c.b16 %v3361, %v3360
      %v4542 = vpack.c.b16 %v3363, %v3362
      %v4543 = vpack.c.b16 %v3365, %v3364
      %v4544 = vpack.c.b16 %v3367, %v3366
      %v4545 = vpack.c.b16 %v3369, %v3368
      %v4546 = vpack.c.b16 %v3371, %v3370
      %v4547 = vpack.c.b16 %v3373, %v3372
      %v4548 = vpack.c.b16 %v3375, %v3374
      %v4549 = vpack.c.b16 %v3377, %v3376
      %v4550 = vpack.c.b16 %v3379, %v3378
      %v4551 = vpack.c.b16 %v3381, %v3380
      %v4552 = vpack.c.b16 %v3383, %v3382
      %v4553 = vpack.c.b16 %v3385, %v3384
      %v4554 = vpack.c.b16 %v3387, %v3386
      %v4555 = vpack.c.b16 %v3389, %v3388
      %v4556 = vpack.c.b16 %v3391, %v3390
      %v4557 = vpack.c.b16 %v3393, %v3392
      %v4558 = vpack.c.b16 %v3395, %v3394
      %v4559 = vpack.c.b16 %v3397, %v3396
      %v4560 = vpack.c.b16 %v3399, %v3398
      %v4561 = vpack.c.b16 %v3401, %v3400
      %v4562 = vpack.c.b16 %v3403, %v3402
      %v4563 = vpack.c.b16 %v3405, %v3404
      %v4564 = vpack.c.b16 %v3407, %v3406
      %v4565 = vpack.c.b16 %v3409, %v3408
      %v4566 = vpack.c.b16 %v3411, %v3410
      %v4567 = vpack.c.b16 %v3413, %v3412
      %v4568 = vpack.c.b16 %v3415, %v3414
      %v4569 = vpack.c.b16 %v3417, %v3416
      %v4570 = vpack.c.b16 %v3419, %v3418
      %v4571 = vpack.c.b16 %v3421, %v3420
      %v4572 = vpack.c.b16 %v3423, %v3422
      %v4573 = vpack.c.b16 %v3425, %v3424
      %v4574 = vpack.c.b16 %v3427, %v3426
      %v4575 = vpack.c.b16 %v3429, %v3428
      %v4576 = vpack.c.b16 %v3431, %v3430
      %v4577 = vpack.c.b16 %v3433, %v3432
      %v4578 = vpack.c.b16 %v3435, %v3434
      %v4579 = vpack.c.b16 %v3437, %v3436
      %v4580 = vpack.c.b16 %v3439, %v3438
      %v4581 = vpack.c.b16 %v3441, %v3440
      %v4582 = vpack.c.b16 %v3443, %v3442
      %v4583 = vpack.c.b16 %v3445, %v3444
      %v4584 = vpack.c.b16 %v3447, %v3446
      %v4585 = vpack.c.b16 %v3449, %v3448
      %v4586 = vpack.c.b16 %v3451, %v3450
      %v4587 = vpack.c.b16 %v3453, %v3452
      %v4588 = vpack.c.b16 %v3455, %v3454
      %v4589 = vpack.c.b16 %v3457, %v3456
      %v4590 = vpack.c.b16 %v3459, %v3458
      %v4591 = vpack.c.b16 %v3461, %v3460
      %v4592 = vpack.c.b16 %v3463, %v3462
      %v4593 = vpack.c.b16 %v3465, %v3464
      %v4594 = vpack.c.b16 %v3467, %v3466
      %v4595 = vpack.c.b16 %v3469, %v3468
      %v4596 = vpack.c.b16 %v3471, %v3470
      %v4597 = vpack.c.b16 %v3473, %v3472
      %v4598 = vpack.c.b16 %v3475, %v3474
      %v4599 = vpack.c.b16 %v3477, %v3476
      %v4600 = vpack.c.b16 %v3479, %v3478
      %v4601 = vpack.c.b16 %v3481, %v3480
      %v4602 = vpack.c.b16 %v3483, %v3482
      %v4603 = vpack.c.b16 %v3485, %v3484
      %v4604 = vpack.c.b16 %v3487, %v3486
      %v4605 = vpack.c.b16 %v3489, %v3488
      %v4606 = vpack.c.b16 %v3491, %v3490
      %v4607 = vpack.c.b16 %v3493, %v3492
      %v4608 = vpack.c.b16 %v3495, %v3494
      %v4609 = vpack.c.b16 %v3497, %v3496
      %v4610 = vpack.c.b16 %v3499, %v3498
      %v4611 = vpack.c.b16 %v3501, %v3500
      %v4612 = vpack.c.b16 %v3503, %v3502
      %v4613 = vpack.c.b16 %v3505, %v3504
      %v4614 = vpack.c.b16 %v3507, %v3506
      %v4615 = vpack.c.b16 %v3509, %v3508
      %v4616 = vpack.c.b16 %v3511, %v3510
      %v4617 = vpack.c.b16 %v3513, %v3512
      %v4618 = vpack.c.b16 %v3515, %v3514
      %v4619 = vpack.c.b16 %v3517, %v3516
      %v4620 = vpack.c.b16 %v3519, %v3518
      %v4621 = vpack.c.b16 %v3521, %v3520
      %v4622 = vpack.c.b16 %v3523, %v3522
      %v4623 = vpack.c.b16 %v3525, %v3524
      %v4624 = vpack.c.b16 %v3527, %v3526
      %v4625 = vpack.c.b16 %v3529, %v3528
      %v4626 = vpack.c.b16 %v3531, %v3530
      %v4627 = vpack.c.b16 %v3533, %v3532
      %v4628 = vpack.c.b16 %v3535, %v3534
      %v4629 = vpack.c.b16 %v3537, %v3536
      %v4630 = vpack.c.b16 %v3539, %v3538
      %v4631 = vpack.c.b16 %v3541, %v3540
      %v4632 = vpack.c.b16 %v3543, %v3542
      %v4633 = vpack.c.b16 %v3545, %v3544
      %v4634 = vpack.c.b16 %v3547, %v3546
      %v4635 = vpack.c.b16 %v3549, %v3548
      %v4636 = vpack.c.b16 %v3551, %v3550
      %v4637 = vpack.c.b16 %v3553, %v3552
      %v4638 = vpack.c.b16 %v3555, %v3554
      %v4639 = vpack.c.b16 %v3557, %v3556
      %v4640 = vpack.c.b16 %v3559, %v3558
      %v4641 = vpack.c.b16 %v3561, %v3560
      %v4642 = vpack.c.b16 %v3563, %v3562
      %v4643 = vpack.c.b16 %v3565, %v3564
      %v4644 = vpack.c.b16 %v3567, %v3566
      %v4645 = vpack.c.b16 %v3569, %v3568
      %v4646 = vpack.c.b16 %v3571, %v3570
      %v4647 = vpack.c.b16 %v3573, %v3572
      %v4648 = vpack.c.b16 %v3575, %v3574
      %v4649 = vpack.c.b16 %v3577, %v3576
      %v4650 = vpack.c.b16 %v3579, %v3578
      %v4651 = vpack.c.b16 %v3581, %v3580
      %v4652 = vpack.c.b16 %v3583, %v3582
      %v4653 = vpack.c.b16 %v3585, %v3584
      %v4654 = vpack.c.b16 %v3587, %v3586
      %v4655 = vpack.c.b16 %v3589, %v3588
      %v4656 = vpack.c.b16 %v3591, %v3590
      %v4657 = vpack.c.b16 %v3593, %v3592
      %v4658 = vpack.c.b16 %v3595, %v3594
      %v4659 = vpack.c.b16 %v3597, %v3596
      %v4660 = vpack.c.b16 %v3599, %v3598
      %v4661 = vpack.c.b16 %v3601, %v3600
      %v4662 = vpack.c.b16 %v3603, %v3602
      %v4663 = vpack.c.b16 %v3605, %v3604
      %v4664 = vpack.c.b16 %v3607, %v3606
      %v4665 = vpack.c.b16 %v3609, %v3608
      %v4666 = vpack.c.b16 %v3611, %v3610
      %v4667 = vpack.c.b16 %v3613, %v3612
      %v4668 = vpack.c.b16 %v3615, %v3614
      %v4669 = vpack.c.b16 %v3617, %v3616
      %v4670 = vpack.c.b16 %v3619, %v3618
      %v4671 = vpack.c.b16 %v3621, %v3620
      %v4672 = vpack.c.b16 %v3623, %v3622
      %v4673 = vpack.c.b16 %v3625, %v3624
      %v4674 = vpack.c.b16 %v3627, %v3626
      %v4675 = vpack.c.b16 %v3629, %v3628
      %v4676 = vpack.c.b16 %v3631, %v3630
      %v4677 = vpack.c.b16 %v3633, %v3632
      %v4678 = vpack.c.b16 %v3635, %v3634
      %v4679 = vpack.c.b16 %v3637, %v3636
      %v4680 = vpack.c.b16 %v3639, %v3638
      %v4681 = vpack.c.b16 %v3641, %v3640
      %v4682 = vpack.c.b16 %v3643, %v3642
      %v4683 = vpack.c.b16 %v3645, %v3644
      %v4684 = vpack.c.b16 %v3647, %v3646
      %v4685 = vpack.c.b16 %v3649, %v3648
      %v4686 = vpack.c.b16 %v3651, %v3650
      %v4687 = vpack.c.b16 %v3653, %v3652
      %v4688 = vpack.c.b16 %v3655, %v3654
      %v4689 = vpack.c.b16 %v3657, %v3656
      %v4690 = vpack.c.b16 %v3659, %v3658
      %v4691 = vpack.c.b16 %v3661, %v3660
      %v4692 = vpack.c.b16 %v3663, %v3662
      %v4693 = vpack.c.b16 %v3665, %v3664
      %v4694 = vpack.c.b16 %v3667, %v3666
      %v4695 = vpack.c.b16 %v3669, %v3668
      %v4696 = vpack.c.b16 %v3671, %v3670
      %v4697 = vpack.c.b16 %v3673, %v3672
      %v4698 = vpack.c.b16 %v3675, %v3674
      %v4699 = vpack.c.b16 %v3677, %v3676
      %v4700 = vpack.c.b16 %v3679, %v3678
      %v4701 = vpack.c.b16 %v3681, %v3680
      %v4702 = vpack.c.b16 %v3683, %v3682
      %v4703 = vpack.c.b16 %v3685, %v3684
      %v4704 = vpack.c.b16 %v3687, %v3686
      %v4705 = vpack.c.b16 %v3689, %v3688
      %v4706 = vpack.c.b16 %v3691, %v3690
      %v4707 = vpack.c.b16 %v3693, %v3692
      %v4708 = vpack.c.b16 %v3695, %v3694
      %v4709 = vpack.c.b16 %v3697, %v3696
      %v4710 = vpack.c.b16 %v3699, %v3698
      %v4711 = vpack.c.b16 %v3701, %v3700
      %v4712 = vpack.c.b16 %v3703, %v3702
      %v4713 = vpack.c.b16 %v3705, %v3704
      %v4714 = vpack.c.b16 %v3707, %v3706
      %v4715 = vpack.c.b16 %v3709, %v3708
      %v4716 = vpack.c.b16 %v3711, %v3710
      %v4717 = vpack.c.b16 %v3713, %v3712
      %v4718 = vpack.c.b16 %v3715, %v3714
      %v4719 = vpack.c.b16 %v3717, %v3716
      %v4720 = vpack.c.b16 %v3719, %v3718
      %v4721 = vpack.c.b16 %v3721, %v3720
      %v4722 = vpack.c.b16 %v3723, %v3722
      %v4723 = vpack.c.b16 %v3725, %v3724
      %v4724 = vpack.c.b16 %v3727, %v3726
      %v4725 = vpack.c.b16 %v3729, %v3728
      %v4726 = vpack.c.b16 %v3731, %v3730
      %v4727 = vpack.c.b16 %v3733, %v3732
      %v4728 = vpack.c.b16 %v3735, %v3734
      %v4729 = vpack.c.b16 %v3737, %v3736
      %v4730 = vpack.c.b16 %v3739, %v3738
      %v4731 = vpack.c.b16 %v3741, %v3740
      %v4732 = vpack.c.b16 %v3743, %v3742
      %v4733 = vpack.c.b16 %v3745, %v3744
      %v4734 = vpack.c.b16 %v3747, %v3746
      %v4735 = vpack.c.b16 %v3749, %v3748
      %v4736 = vpack.c.b16 %v3751, %v3750
      %v4737 = vpack.c.b16 %v3753, %v3752
      %v4738 = vpack.c.b16 %v3755, %v3754
      %v4739 = vpack.c.b16 %v3757, %v3756
      %v4740 = vpack.c.b16 %v3759, %v3758
      %v4741 = vpack.c.b16 %v3761, %v3760
      %v4742 = vpack.c.b16 %v3763, %v3762
      %v4743 = vpack.c.b16 %v3765, %v3764
      %v4744 = vpack.c.b16 %v3767, %v3766
      %v4745 = vpack.c.b16 %v3769, %v3768
      %v4746 = vpack.c.b16 %v3771, %v3770
      %v4747 = vpack.c.b16 %v3773, %v3772
      %v4748 = vpack.c.b16 %v3775, %v3774
      %v4749 = vpack.c.b16 %v3777, %v3776
      %v4750 = vpack.c.b16 %v3779, %v3778
      %v4751 = vpack.c.b16 %v3781, %v3780
      %v4752 = vpack.c.b16 %v3783, %v3782
      %v4753 = vpack.c.b16 %v3785, %v3784
      %v4754 = vpack.c.b16 %v3787, %v3786
      %v4755 = vpack.c.b16 %v3789, %v3788
      %v4756 = vpack.c.b16 %v3791, %v3790
      %v4757 = vpack.c.b16 %v3793, %v3792
      %v4758 = vpack.c.b16 %v3795, %v3794
      %v4759 = vpack.c.b16 %v3797, %v3796
      %v4760 = vpack.c.b16 %v3799, %v3798
      %v4761 = vpack.c.b16 %v3801, %v3800
      %v4762 = vpack.c.b16 %v3803, %v3802
      %v4763 = vpack.c.b16 %v3805, %v3804
      %v4764 = vpack.c.b16 %v3807, %v3806
      %v4765 = vpack.c.b16 %v3809, %v3808
      %v4766 = vpack.c.b16 %v3811, %v3810
      %v4767 = vpack.c.b16 %v3813, %v3812
      %v4768 = vpack.c.b16 %v3815, %v3814
      %v4769 = vpack.c.b16 %v3817, %v3816
      %v4770 = vpack.c.b16 %v3819, %v3818
      %v4771 = vpack.c.b16 %v3821, %v3820
      %v4772 = vpack.c.b16 %v3823, %v3822
      %v4773 = vpack.c.b16 %v3825, %v3824
      %v4774 = vpack.c.b16 %v3827, %v3826
      %v4775 = vpack.c.b16 %v3829, %v3828
      %v4776 = vpack.c.b16 %v3831, %v3830
      %v4777 = vpack.c.b16 %v3833, %v3832
      %v4778 = vpack.c.b16 %v3835, %v3834
      %v4779 = vpack.c.b16 %v3837, %v3836
      %v4780 = vpack.c.b16 %v3839, %v3838
      %v4781 = vpack.c.b16 %v3841, %v3840
      %v4782 = vpack.c.b16 %v3843, %v3842
      %v4783 = vpack.c.b16 %v3845, %v3844
      %v4784 = vpack.c.b16 %v3847, %v3846
      %v4785 = vpack.c.b16 %v3849, %v3848
      %v4786 = vpack.c.b16 %v3851, %v3850
      %v4787 = vpack.c.b16 %v3853, %v3852
      %v4788 = vpack.c.b16 %v3855, %v3854
      %v4789 = vpack.c.b16 %v3857, %v3856
      %v4790 = vpack.c.b16 %v3859, %v3858
      %v4791 = vpack.c.b16 %v3861, %v3860
      %v4792 = vpack.c.b16 %v3863, %v3862
      %v4793 = vpack.c.b16 %v3865, %v3864
      %v4794 = vpack.c.b16 %v3867, %v3866
      %v4795 = vpack.c.b16 %v3869, %v3868
      %v4796 = vpack.c.b16 %v3871, %v3870
      %v4797 = vpack.c.b16 %v3873, %v3872
      %v4798 = vpack.c.b16 %v3875, %v3874
      %v4799 = vpack.c.b16 %v3877, %v3876
      %v4800 = vpack.c.b16 %v3879, %v3878
      %v4801 = vpack.c.b16 %v3881, %v3880
      %v4802 = vpack.c.b16 %v3883, %v3882
      %v4803 = vpack.c.b16 %v3885, %v3884
      %v4804 = vpack.c.b16 %v3887, %v3886
      %v4805 = vpack.c.b16 %v3889, %v3888
      %v4806 = vpack.c.b16 %v3891, %v3890
      %v4807 = vpack.c.b16 %v3893, %v3892
      %v4808 = vpack.c.b16 %v3895, %v3894
      %v4809 = vpack.c.b16 %v3897, %v3896
      %v4810 = vpack.c.b16 %v3899, %v3898
      %v4811 = vpack.c.b16 %v3901, %v3900
      %v4812 = vpack.c.b16 %v3903, %v3902
      %v4813 = vpack.c.b16 %v3905, %v3904
      %v4814 = vpack.c.b16 %v3907, %v3906
      %v4815 = vpack.c.b16 %v3909, %v3908
      %v4816 = vpack.c.b16 %v3911, %v3910
      %v4817 = vpack.c.b16 %v3913, %v3912
      %v4818 = vpack.c.b16 %v3915, %v3914
      %v4819 = vpack.c.b16 %v3917, %v3916
      %v4820 = vpack.c.b16 %v3919, %v3918
      %v4821 = vpack.c.b16 %v3921, %v3920
      %v4822 = vpack.c.b16 %v3923, %v3922
      %v4823 = vpack.c.b16 %v3925, %v3924
      %v4824 = vpack.c.b16 %v3927, %v3926
      %v4825 = vpack.c.b16 %v3929, %v3928
      %v4826 = vpack.c.b16 %v3931, %v3930
      %v4827 = vpack.c.b16 %v3933, %v3932
      %v4828 = vpack.c.b16 %v3935, %v3934
      %v4829 = vpack.c.b16 %v3937, %v3936
      %v4830 = vpack.c.b16 %v3939, %v3938
      %v4831 = vpack.c.b16 %v3941, %v3940
      %v4832 = vpack.c.b16 %v3943, %v3942
      %v4833 = vpack.c.b16 %v3945, %v3944
      %v4834 = vpack.c.b16 %v3947, %v3946
      %v4835 = vpack.c.b16 %v3949, %v3948
      %v4836 = vpack.c.b16 %v3951, %v3950
      %v4837 = vpack.c.b16 %v3953, %v3952
      %v4838 = vpack.c.b16 %v3955, %v3954
      %v4839 = vpack.c.b16 %v3957, %v3956
      %v4840 = vpack.c.b16 %v3959, %v3958
      %v4841 = vpack.c.b16 %v3961, %v3960
      %v4842 = vpack.c.b16 %v3963, %v3962
      %v4843 = vpack.c.b16 %v3965, %v3964
      %v4844 = vpack.c.b16 %v3967, %v3966
      %v4845 = vpack.c.b16 %v3969, %v3968
      %v4846 = vpack.c.b16 %v3971, %v3970
      %v4847 = vpack.c.b16 %v3973, %v3972
      %v4848 = vpack.c.b16 %v3975, %v3974
      %v4849 = vpack.c.b16 %v3977, %v3976
      %v4850 = vpack.c.b16 %v3979, %v3978
      %v4851 = vpack.c.b16 %v3981, %v3980
      %v4852 = vpack.c.b16 %v3983, %v3982
      %v4853 = vpack.c.b16 %v3985, %v3984
      %v4854 = vpack.c.b16 %v3987, %v3986
      %v4855 = vpack.c.b16 %v3989, %v3988
      %v4856 = vpack.c.b16 %v3991, %v3990
      %v4857 = vpack.c.b16 %v3993, %v3992
      %v4858 = vpack.c.b16 %v3995, %v3994
      %v4859 = vpack.c.b16 %v3997, %v3996
      %v4860 = vpack.c.b16 %v3999, %v3998
      %v4861 = vpack.c.b16 %v4001, %v4000
      %v4862 = vpack.c.b16 %v4003, %v4002
      %v4863 = vpack.c.b16 %v4005, %v4004
      %v4864 = vpack.c.b16 %v4007, %v4006
      %v4865 = vpack.c.b16 %v4009, %v4008
      %v4866 = vpack.c.b16 %v4011, %v4010
      %v4867 = vpack.c.b16 %v4013, %v4012
      %v4868 = vpack.c.b16 %v4015, %v4014
      %v4869 = vpack.c.b16 %v4017, %v4016
      %v4870 = vpack.c.b16 %v4019, %v4018
      %v4871 = vpack.c.b16 %v4021, %v4020
      %v4872 = vpack.c.b16 %v4023, %v4022
      %v4873 = vpack.c.b16 %v4025, %v4024
      %v4874 = vpack.c.b16 %v4027, %v4026
      %v4875 = vpack.c.b16 %v4029, %v4028
      %v4876 = vpack.c.b16 %v4031, %v4030
      %v4877 = vpack.c.b16 %v4033, %v4032
      %v4878 = vpack.c.b16 %v4035, %v4034
      %v4879 = vpack.c.b16 %v4037, %v4036
      %v4880 = vpack.c.b16 %v4039, %v4038
      %v4881 = vpack.c.b16 %v4041, %v4040
      %v4882 = vpack.c.b16 %v4043, %v4042
      %v4883 = vpack.c.b16 %v4045, %v4044
      %v4884 = vpack.c.b16 %v4047, %v4046
      %v4885 = vpack.c.b16 %v4049, %v4048
      %v4886 = vpack.c.b16 %v4051, %v4050
      %v4887 = vpack.c.b16 %v4053, %v4052
      %v4888 = vpack.c.b16 %v4055, %v4054
      %v4889 = vpack.c.b16 %v4057, %v4056
      %v4890 = vpack.c.b16 %v4059, %v4058
      %v4891 = vpack.c.b16 %v4061, %v4060
      %v4892 = vpack.c.b16 %v4063, %v4062
      %v4893 = vpack.c.b16 %v4065, %v4064
      %v4894 = vpack.c.b16 %v4067, %v4066
      %v4895 = vpack.c.b16 %v4069, %v4068
      %v4896 = vpack.c.b16 %v4071, %v4070
      %v4897 = vpack.c.b16 %v4073, %v4072
      %v4898 = vpack.c.b16 %v4075, %v4074
      %v4899 = vpack.c.b16 %v4077, %v4076
      %v4900 = vpack.c.b16 %v4079, %v4078
      %v4901 = vpack.c.b16 %v4081, %v4080
      %v4902 = vpack.c.b16 %v4083, %v4082
      %v4903 = vpack.c.b16 %v4085, %v4084
      %v4904 = vpack.c.b16 %v4087, %v4086
      %v4905 = vpack.c.b16 %v4089, %v4088
      %v4906 = vpack.c.b16 %v4091, %v4090
      %v4907 = vpack.c.b16 %v4093, %v4092
      %v4908 = vpack.c.b16 %v4095, %v4094
      %v4909 = vpack.c.b16 %v4097, %v4096
      %v4910 = vpack.c.b16 %v4099, %v4098
      %v4911 = vpack.c.b16 %v4101, %v4100
      %v4912 = vpack.c.b16 %v4103, %v4102
      %v4913 = vpack.c.b16 %v4105, %v4104
      %v4914 = vpack.c.b16 %v4107, %v4106
      %v4915 = vpack.c.b16 %v4109, %v4108
      %v4916 = vpack.c.b16 %v4111, %v4110
      %v4917 = vpack.c.b16 %v4113, %v4112
      %v4918 = vpack.c.b16 %v4115, %v4114
      %v4919 = vpack.c.b16 %v4117, %v4116
      %v4920 = vpack.c.b16 %v4119, %v4118
      %v4921 = vpack.c.b16 %v4121, %v4120
      %v4922 = vpack.c.b16 %v4123, %v4122
      %v4923 = vpack.c.b16 %v4125, %v4124
      %v4924 = vpack.c.b16 %v4127, %v4126
      %v4925 = vpack.c.b16 %v4129, %v4128
      %v4926 = vpack.c.b16 %v4131, %v4130
      %v4927 = vpack.c.b16 %v4133, %v4132
      %v4928 = vpack.c.b16 %v4135, %v4134
      %v4929 = vpack.c.b16 %v4137, %v4136
      %v4930 = vpack.c.b16 %v4139, %v4138
      %v4931 = vpack.c.b16 %v4141, %v4140
      %v4932 = vpack.c.b16 %v4143, %v4142
      %v4933 = vpack.c.b16 %v4145, %v4144
      %v4934 = vpack.c.b16 %v4147, %v4146
      %v4935 = vpack.c.b16 %v4149, %v4148
      %v4936 = vpack.c.b16 %v4151, %v4150
      %v4937 = vpack.c.b16 %v4153, %v4152
      %v4938 = vpack.c.b16 %v4155, %v4154
      %v4939 = vpack.c.b16 %v4157, %v4156
      %v4940 = vpack.c.b16 %v4159, %v4158
      %v4941 = vpack.c.b16 %v4161, %v4160
      %v4942 = vpack.c.b16 %v4163, %v4162
      %v4943 = vpack.c.b16 %v4165, %v4164
      %v4944 = vpack.c.b16 %v4167, %v4166
      %v4945 = vpack.c.b16 %v4169, %v4168
      %v4946 = vpack.c.b16 %v4171, %v4170
      %v4947 = vpack.c.b16 %v4173, %v4172
      %v4948 = vpack.c.b16 %v4175, %v4174
      %v4949 = vpack.c.b16 %v4177, %v4176
      %v4950 = vpack.c.b16 %v4179, %v4178
      %v4951 = vpack.c.b16 %v4181, %v4180
      %v4952 = vpack.c.b16 %v4183, %v4182
      %v4953 = vpack.c.b16 %v4185, %v4184
      %v4954 = vpack.c.b16 %v4187, %v4186
      %v4955 = vpack.c.b16 %v4189, %v4188
      %v4956 = vpack.c.b16 %v4191, %v4190
      %v4957 = vpack.c.b16 %v4193, %v4192
      %v4958 = vpack.c.b16 %v4195, %v4194
      %v4959 = vpack.c.b16 %v4197, %v4196
      %v4960 = vpack.c.b16 %v4199, %v4198
      %v4961 = vpack.c.b16 %v4201, %v4200
      %v4962 = vpack.c.b16 %v4203, %v4202
      %v4963 = vpack.c.b16 %v4205, %v4204
      %v4964 = vpack.c.b16 %v4207, %v4206
      %v4965 = vpack.c.b16 %v4209, %v4208
      %v4966 = vpack.c.b16 %v4211, %v4210
      %v4967 = vpack.c.b16 %v4213, %v4212
      %v4968 = vpack.c.b16 %v4215, %v4214
      %v4969 = vpack.c.b16 %v4217, %v4216
      %v4970 = vpack.c.b16 %v4219, %v4218
      %v4971 = vpack.c.b16 %v4221, %v4220
      %v4972 = vpack.c.b16 %v4223, %v4222
      %v4973 = vpack.c.b16 %v4225, %v4224
      %v4974 = vpack.c.b16 %v4227, %v4226
      %v4975 = vpack.c.b16 %v4229, %v4228
      %v4976 = vpack.c.b16 %v4231, %v4230
      %v4977 = vpack.c.b16 %v4233, %v4232
      %v4978 = vpack.c.b16 %v4235, %v4234
      %v4979 = vpack.c.b16 %v4237, %v4236
      %v4980 = vpack.c.b16 %v4239, %v4238
      %v4981 = vpack.c.b16 %v4241, %v4240
      %v4982 = vpack.c.b16 %v4243, %v4242
      %v4983 = vpack.c.b16 %v4245, %v4244
      %v4984 = vpack.c.b16 %v4247, %v4246
      %v4985 = vpack.c.b16 %v4249, %v4248
      %v4986 = vpack.c.b16 %v4251, %v4250
      %v4987 = vpack.c.b16 %v4253, %v4252
      %v4988 = vpack.c.b16 %v4255, %v4254
      %v4989 = vpack.c.b16 %v4257, %v4256
      %v4990 = vpack.c.b16 %v4259, %v4258
      %v4991 = vpack.c.b16 %v4261, %v4260
      %v4992 = vpack.c.b16 %v4263, %v4262
      %v4993 = vpack.c.b16 %v4265, %v4264
      %v4994 = vpack.c.b16 %v4267, %v4266
      %v4995 = vpack.c.b16 %v4269, %v4268
      %v4996 = vpack.c.b16 %v4271, %v4270
      %v4997 = vpack.c.b16 %v4273, %v4272
      %v4998 = vpack.c.b16 %v4275, %v4274
      %v4999 = vpack.c.b16 %v4277, %v4276
      %v5000 = vpack.c.b16 %v4279, %v4278
      %v5001 = vpack.c.b16 %v4281, %v4280
      %v5002 = vpack.c.b16 %v4283, %v4282
      %v5003 = vpack.c.b16 %v4285, %v4284
      %v5004 = vpack.c.b16 %v4287, %v4286
      %v5005 = vpack.c.b16 %v4289, %v4288
      %v5006 = vpack.c.b16 %v4291, %v4290
      %v5007 = vpack.c.b16 %v4293, %v4292
      %v5008 = vpack.c.b16 %v4295, %v4294
      %v5009 = vpack.c.b16 %v4297, %v4296
      %v5010 = vpack.c.b16 %v4299, %v4298
      %v5011 = vpack.c.b16 %v4301, %v4300
      %v5012 = vpack.c.b16 %v4303, %v4302
      %v5013 = vpack.c.b16 %v4305, %v4304
      %v5014 = vpack.c.b16 %v4307, %v4306
      %v5015 = vpack.c.b16 %v4309, %v4308
      %v5016 = vpack.c.b16 %v4311, %v4310
      %v5017 = vpack.c.b16 %v4313, %v4312
      %v5018 = vpack.c.b16 %v4315, %v4314
      %v5019 = vpack.c.b16 %v4317, %v4316
      %v5020 = vpack.c.b16 %v4319, %v4318
      %v5021 = vpack.c.b16 %v4321, %v4320
      %v5022 = vpack.c.b16 %v4323, %v4322
      %v5023 = vpack.c.b16 %v4325, %v4324
      %v5024 = vpack.c.b16 %v4327, %v4326
      %v5025 = vpack.c.b16 %v4329, %v4328
      %v5026 = vpack.c.b16 %v4331, %v4330
      %v5027 = vpack.c.b16 %v4333, %v4332
      %v5028 = vpack.c.b16 %v4335, %v4334
      %v5029 = vpack.c.b16 %v4337, %v4336
      %v5030 = vpack.c.b16 %v4339, %v4338
      %v5031 = vpack.c.b16 %v4341, %v4340
      %v5032 = vpack.c.b16 %v4343, %v4342
      %v5033 = vpack.c.b16 %v4345, %v4344
      %v5034 = vpack.c.b16 %v4347, %v4346
      %v5035 = vpack.c.b16 %v4349, %v4348
      %v5036 = vpack.c.b16 %v4351, %v4350
      %v5037 = vpack.c.b16 %v4353, %v4352
      %v5038 = vpack.c.b16 %v4355, %v4354
      %v5039 = vpack.c.b16 %v4357, %v4356
      %v5040 = vpack.c.b16 %v4359, %v4358
      %v5041 = vpack.c.b16 %v4361, %v4360
      %v5042 = vpack.c.b16 %v4363, %v4362
      %v5043 = vpack.c.b16 %v4365, %v4364
      %v5044 = vpack.c.b16 %v4367, %v4366
      %v5045 = vpack.c.b16 %v4369, %v4368
      %v5046 = vpack.c.b16 %v4371, %v4370
      %v5047 = vpack.c.b16 %v4373, %v4372
      %v5048 = vpack.c.b16 %v4375, %v4374
      %v5049 = vpack.c.b16 %v4377, %v4376
      %v5050 = vpack.c.b16 %v4379, %v4378
      %v5051 = vpack.c.b16 %v4381, %v4380
      %v5052 = vpack.c.b16 %v4383, %v4382
      %v5053 = vpack.c.b16 %v4385, %v4384
      %v5054 = vpack.c.b16 %v4387, %v4386
      %v5055 = vpack.c.b16 %v4389, %v4388
      %v5056 = vpack.c.b16 %v4391, %v4390
      %v5057 = vpack.c.b16 %v4393, %v4392
      %v5058 = vpack.c.b16 %v4395, %v4394
      %v5059 = vpack.c.b16 %v4397, %v4396
      %v5060 = vpack.c.b16 %v4399, %v4398
      %v5061 = vpack.c.b16 %v4401, %v4400
      %v5062 = vpack.c.b16 %v4403, %v4402
      %v5063 = vpack.c.b16 %v4405, %v4404
      %v5064 = vpack.c.b16 %v4407, %v4406
      %v5065 = vpack.c.b16 %v4409, %v4408
      %v5066 = vpack.c.b16 %v4411, %v4410
      %v5067 = vpack.c.b16 %v4413, %v4412
      %v5068 = vpack.c.b16 %v4415, %v4414
      %v5069 = vpack.c.b16 %v4417, %v4416
      %v5070 = vpack.c.b16 %v4419, %v4418
      %v5071 = vpack.c.b16 %v4421, %v4420
      %v5072 = vpack.c.b16 %v4423, %v4422
      %v5073 = vpack.c.b16 %v4425, %v4424
      %v5074 = vpack.c.b16 %v4427, %v4426
      %v5075 = vpack.c.b16 %v4429, %v4428
      %v5076 = vpack.c.b16 %v4431, %v4430
      %v5077 = vpack.c.b16 %v4433, %v4432
      %v5078 = vpack.c.b16 %v4435, %v4434
      %v5079 = vpack.c.b16 %v4437, %v4436
      %v5080 = vpack.c.b16 %v4439, %v4438
      %v5081 = vpack.c.b16 %v4441, %v4440
      %5722 = vmatpush.bf16.msra.mxu0 %v4449
      %5723 = vmatpush.bf16.msra.mxu0 %v4448
      %5724 = vmatpush.bf16.msra.mxu0 %v4447
      %5725 = vmatpush.bf16.msra.mxu0 %v4446
      %5726 = vmatpush.bf16.msra.mxu0 %v4445
      %5727 = vmatpush.bf16.msra.mxu0 %v4444
      %5728 = vmatpush.bf16.msra.mxu0 %v4443
      %5729 = vmatpush.bf16.msra.mxu0 %v4442
      %5730 = vmatmul.bf16.gmra.mxu0 %v522
      %v5731 = vpop.f32.mrf.mxu0
      %v5732 = vadd.f32 0.0, %v5731
      %v5733 = vpop.f32.mrf.mxu0
      %5734 = vdwg.mxu0
      %5735 = vmatpush.bf16.msra.mxu0 %v4457
      %5736 = vmatpush.bf16.msra.mxu0 %v4456
      %5737 = vmatpush.bf16.msra.mxu0 %v4455
      %5738 = vmatpush.bf16.msra.mxu0 %v4454
      %5739 = vmatpush.bf16.msra.mxu0 %v4453
      %5740 = vmatpush.bf16.msra.mxu0 %v4452
      %5741 = vmatpush.bf16.msra.mxu0 %v4451
      %5742 = vmatpush.bf16.msra.mxu0 %v4450
      %5743 = vmatmul.bf16.gmra.mxu0 %v523
      %v5744 = vpop.f32.mrf.mxu0
      %v5745 = vadd.f32 %v5732, %v5744
      %v5746 = vpop.f32.mrf.mxu0
      %5747 = vdwg.mxu0
      %5748 = vmatpush.bf16.msra.mxu0 %v4465
      %5749 = vmatpush.bf16.msra.mxu0 %v4464
      %5750 = vmatpush.bf16.msra.mxu0 %v4463
      %5751 = vmatpush.bf16.msra.mxu0 %v4462
      %5752 = vmatpush.bf16.msra.mxu0 %v4461
      %5753 = vmatpush.bf16.msra.mxu0 %v4460
      %5754 = vmatpush.bf16.msra.mxu0 %v4459
      %5755 = vmatpush.bf16.msra.mxu0 %v4458
      %5756 = vmatmul.bf16.gmra.mxu0 %v524
      %v5757 = vpop.f32.mrf.mxu0
      %v5758 = vadd.f32 %v5745, %v5757
      %v5759 = vpop.f32.mrf.mxu0
      %5760 = vdwg.mxu0
      %5761 = vmatpush.bf16.msra.mxu0 %v4473
      %5762 = vmatpush.bf16.msra.mxu0 %v4472
      %5763 = vmatpush.bf16.msra.mxu0 %v4471
      %5764 = vmatpush.bf16.msra.mxu0 %v4470
      %5765 = vmatpush.bf16.msra.mxu0 %v4469
      %5766 = vmatpush.bf16.msra.mxu0 %v4468
      %5767 = vmatpush.bf16.msra.mxu0 %v4467
      %5768 = vmatpush.bf16.msra.mxu0 %v4466
      %5769 = vmatmul.bf16.gmra.mxu0 %v525
      %v5770 = vpop.f32.mrf.mxu0
      %v5771 = vadd.f32 %v5758, %v5770
      %v5772 = vpop.f32.mrf.mxu0
      %5773 = vdwg.mxu0
      %5774 = vmatpush.bf16.msra.mxu0 %v4481
      %5775 = vmatpush.bf16.msra.mxu0 %v4480
      %5776 = vmatpush.bf16.msra.mxu0 %v4479
      %5777 = vmatpush.bf16.msra.mxu0 %v4478
      %5778 = vmatpush.bf16.msra.mxu0 %v4477
      %5779 = vmatpush.bf16.msra.mxu0 %v4476
      %5780 = vmatpush.bf16.msra.mxu0 %v4475
      %5781 = vmatpush.bf16.msra.mxu0 %v4474
      %5782 = vmatmul.bf16.gmra.mxu0 %v526
      %v5783 = vpop.f32.mrf.mxu0
      %v5784 = vadd.f32 %v5771, %v5783
      %v5785 = vpop.f32.mrf.mxu0
      %5786 = vdwg.mxu0
      %5787 = vmatpush.bf16.msra.mxu0 %v4489
      %5788 = vmatpush.bf16.msra.mxu0 %v4488
      %5789 = vmatpush.bf16.msra.mxu0 %v4487
      %5790 = vmatpush.bf16.msra.mxu0 %v4486
      %5791 = vmatpush.bf16.msra.mxu0 %v4485
      %5792 = vmatpush.bf16.msra.mxu0 %v4484
      %5793 = vmatpush.bf16.msra.mxu0 %v4483
      %5794 = vmatpush.bf16.msra.mxu0 %v4482
      %5795 = vmatmul.bf16.gmra.mxu0 %v527
      %v5796 = vpop.f32.mrf.mxu0
      %v5797 = vadd.f32 %v5784, %v5796
      %v5798 = vpop.f32.mrf.mxu0
      %5799 = vdwg.mxu0
      %5800 = vmatpush.bf16.msra.mxu0 %v4497
      %5801 = vmatpush.bf16.msra.mxu0 %v4496
      %5802 = vmatpush.bf16.msra.mxu0 %v4495
      %5803 = vmatpush.bf16.msra.mxu0 %v4494
      %5804 = vmatpush.bf16.msra.mxu0 %v4493
      %5805 = vmatpush.bf16.msra.mxu0 %v4492
      %5806 = vmatpush.bf16.msra.mxu0 %v4491
      %5807 = vmatpush.bf16.msra.mxu0 %v4490
      %5808 = vmatmul.bf16.gmra.mxu0 %v528
      %v5809 = vpop.f32.mrf.mxu0
      %v5810 = vadd.f32 %v5797, %v5809
      %v5811 = vpop.f32.mrf.mxu0
      %5812 = vdwg.mxu0
      %5813 = vmatpush.bf16.msra.mxu0 %v4505
      %5814 = vmatpush.bf16.msra.mxu0 %v4504
      %5815 = vmatpush.bf16.msra.mxu0 %v4503
      %5816 = vmatpush.bf16.msra.mxu0 %v4502
      %5817 = vmatpush.bf16.msra.mxu0 %v4501
      %5818 = vmatpush.bf16.msra.mxu0 %v4500
      %5819 = vmatpush.bf16.msra.mxu0 %v4499
      %5820 = vmatpush.bf16.msra.mxu0 %v4498
      %5821 = vmatmul.bf16.gmra.mxu0 %v529
      %v5822 = vpop.f32.mrf.mxu0
      %v5823 = vadd.f32 %v5810, %v5822
      %v5824 = vpop.f32.mrf.mxu0
      %5825 = vdwg.mxu0
      %5826 = vmatpush.bf16.msra.mxu0 %v4513
      %5827 = vmatpush.bf16.msra.mxu0 %v4512
      %5828 = vmatpush.bf16.msra.mxu0 %v4511
      %5829 = vmatpush.bf16.msra.mxu0 %v4510
      %5830 = vmatpush.bf16.msra.mxu0 %v4509
      %5831 = vmatpush.bf16.msra.mxu0 %v4508
      %5832 = vmatpush.bf16.msra.mxu0 %v4507
      %5833 = vmatpush.bf16.msra.mxu0 %v4506
      %5834 = vmatmul.bf16.gmra.mxu0 %v530
      %v5835 = vpop.f32.mrf.mxu0
      %v5836 = vadd.f32 %v5823, %v5835
      %v5837 = vpop.f32.mrf.mxu0
      %5838 = vdwg.mxu0
      %5839 = vmatpush.bf16.msra.mxu0 %v4521
      %5840 = vmatpush.bf16.msra.mxu0 %v4520
      %5841 = vmatpush.bf16.msra.mxu0 %v4519
      %5842 = vmatpush.bf16.msra.mxu0 %v4518
      %5843 = vmatpush.bf16.msra.mxu0 %v4517
      %5844 = vmatpush.bf16.msra.mxu0 %v4516
      %5845 = vmatpush.bf16.msra.mxu0 %v4515
      %5846 = vmatpush.bf16.msra.mxu0 %v4514
      %5847 = vmatmul.bf16.gmra.mxu0 %v531
      %v5848 = vpop.f32.mrf.mxu0
      %v5849 = vadd.f32 %v5836, %v5848
      %v5850 = vpop.f32.mrf.mxu0
      %5851 = vdwg.mxu0
      %5852 = vmatpush.bf16.msra.mxu0 %v4529
      %5853 = vmatpush.bf16.msra.mxu0 %v4528
      %5854 = vmatpush.bf16.msra.mxu0 %v4527
      %5855 = vmatpush.bf16.msra.mxu0 %v4526
      %5856 = vmatpush.bf16.msra.mxu0 %v4525
      %5857 = vmatpush.bf16.msra.mxu0 %v4524
      %5858 = vmatpush.bf16.msra.mxu0 %v4523
      %5859 = vmatpush.bf16.msra.mxu0 %v4522
      %5860 = vmatmul.bf16.gmra.mxu0 %v532
      %v5861 = vpop.f32.mrf.mxu0
      %v5862 = vadd.f32 %v5849, %v5861
      %v5863 = vpop.f32.mrf.mxu0
      %5864 = vdwg.mxu0
      %5865 = vmatpush.bf16.msra.mxu0 %v4537
      %5866 = vmatpush.bf16.msra.mxu0 %v4536
      %5867 = vmatpush.bf16.msra.mxu0 %v4535
      %5868 = vmatpush.bf16.msra.mxu0 %v4534
      %5869 = vmatpush.bf16.msra.mxu0 %v4533
      %5870 = vmatpush.bf16.msra.mxu0 %v4532
      %5871 = vmatpush.bf16.msra.mxu0 %v4531
      %5872 = vmatpush.bf16.msra.mxu0 %v4530
      %5873 = vmatmul.bf16.gmra.mxu0 %v533
      %v5874 = vpop.f32.mrf.mxu0
      %v5875 = vadd.f32 %v5862, %v5874
      %v5876 = vpop.f32.mrf.mxu0
      %5877 = vdwg.mxu0
      %5878 = vmatpush.bf16.msra.mxu0 %v4545
      %5879 = vmatpush.bf16.msra.mxu0 %v4544
      %5880 = vmatpush.bf16.msra.mxu0 %v4543
      %5881 = vmatpush.bf16.msra.mxu0 %v4542
      %5882 = vmatpush.bf16.msra.mxu0 %v4541
      %5883 = vmatpush.bf16.msra.mxu0 %v4540
      %5884 = vmatpush.bf16.msra.mxu0 %v4539
      %5885 = vmatpush.bf16.msra.mxu0 %v4538
      %5886 = vmatmul.bf16.gmra.mxu0 %v534
      %v5887 = vpop.f32.mrf.mxu0
      %v5888 = vadd.f32 %v5875, %v5887
      %v5889 = vpop.f32.mrf.mxu0
      %5890 = vdwg.mxu0
      %5891 = vmatpush.bf16.msra.mxu0 %v4553
      %5892 = vmatpush.bf16.msra.mxu0 %v4552
      %5893 = vmatpush.bf16.msra.mxu0 %v4551
      %5894 = vmatpush.bf16.msra.mxu0 %v4550
      %5895 = vmatpush.bf16.msra.mxu0 %v4549
      %5896 = vmatpush.bf16.msra.mxu0 %v4548
      %5897 = vmatpush.bf16.msra.mxu0 %v4547
      %5898 = vmatpush.bf16.msra.mxu0 %v4546
      %5899 = vmatmul.bf16.gmra.mxu0 %v535
      %v5900 = vpop.f32.mrf.mxu0
      %v5901 = vadd.f32 %v5888, %v5900
      %v5902 = vpop.f32.mrf.mxu0
      %5903 = vdwg.mxu0
      %5904 = vmatpush.bf16.msra.mxu0 %v4561
      %5905 = vmatpush.bf16.msra.mxu0 %v4560
      %5906 = vmatpush.bf16.msra.mxu0 %v4559
      %5907 = vmatpush.bf16.msra.mxu0 %v4558
      %5908 = vmatpush.bf16.msra.mxu0 %v4557
      %5909 = vmatpush.bf16.msra.mxu0 %v4556
      %5910 = vmatpush.bf16.msra.mxu0 %v4555
      %5911 = vmatpush.bf16.msra.mxu0 %v4554
      %5912 = vmatmul.bf16.gmra.mxu0 %v536
      %v5913 = vpop.f32.mrf.mxu0
      %v5914 = vadd.f32 %v5901, %v5913
      %v5915 = vpop.f32.mrf.mxu0
      %5916 = vdwg.mxu0
      %5917 = vmatpush.bf16.msra.mxu0 %v4569
      %5918 = vmatpush.bf16.msra.mxu0 %v4568
      %5919 = vmatpush.bf16.msra.mxu0 %v4567
      %5920 = vmatpush.bf16.msra.mxu0 %v4566
      %5921 = vmatpush.bf16.msra.mxu0 %v4565
      %5922 = vmatpush.bf16.msra.mxu0 %v4564
      %5923 = vmatpush.bf16.msra.mxu0 %v4563
      %5924 = vmatpush.bf16.msra.mxu0 %v4562
      %5925 = vmatmul.bf16.gmra.mxu0 %v537
      %v5926 = vpop.f32.mrf.mxu0
      %v5927 = vadd.f32 %v5914, %v5926
      %v5928 = vpop.f32.mrf.mxu0
      %5929 = vdwg.mxu0
      %5930 = vmatpush.bf16.msra.mxu0 %v4577
      %5931 = vmatpush.bf16.msra.mxu0 %v4576
      %5932 = vmatpush.bf16.msra.mxu0 %v4575
      %5933 = vmatpush.bf16.msra.mxu0 %v4574
      %5934 = vmatpush.bf16.msra.mxu0 %v4573
      %5935 = vmatpush.bf16.msra.mxu0 %v4572
      %5936 = vmatpush.bf16.msra.mxu0 %v4571
      %5937 = vmatpush.bf16.msra.mxu0 %v4570
      %5938 = vmatmul.bf16.gmra.mxu0 %v538
      %v5939 = vpop.f32.mrf.mxu0
      %v5940 = vadd.f32 %v5927, %v5939
      %v5941 = vpop.f32.mrf.mxu0
      %5942 = vdwg.mxu0
      %5943 = vmatpush.bf16.msra.mxu0 %v4585
      %5944 = vmatpush.bf16.msra.mxu0 %v4584
      %5945 = vmatpush.bf16.msra.mxu0 %v4583
      %5946 = vmatpush.bf16.msra.mxu0 %v4582
      %5947 = vmatpush.bf16.msra.mxu0 %v4581
      %5948 = vmatpush.bf16.msra.mxu0 %v4580
      %5949 = vmatpush.bf16.msra.mxu0 %v4579
      %5950 = vmatpush.bf16.msra.mxu0 %v4578
      %5951 = vmatmul.bf16.gmra.mxu0 %v539
      %v5952 = vpop.f32.mrf.mxu0
      %v5953 = vadd.f32 %v5940, %v5952
      %v5954 = vpop.f32.mrf.mxu0
      %5955 = vdwg.mxu0
      %5956 = vmatpush.bf16.msra.mxu0 %v4593
      %5957 = vmatpush.bf16.msra.mxu0 %v4592
      %5958 = vmatpush.bf16.msra.mxu0 %v4591
      %5959 = vmatpush.bf16.msra.mxu0 %v4590
      %5960 = vmatpush.bf16.msra.mxu0 %v4589
      %5961 = vmatpush.bf16.msra.mxu0 %v4588
      %5962 = vmatpush.bf16.msra.mxu0 %v4587
      %5963 = vmatpush.bf16.msra.mxu0 %v4586
      %5964 = vmatmul.bf16.gmra.mxu0 %v540
      %v5965 = vpop.f32.mrf.mxu0
      %v5966 = vadd.f32 %v5953, %v5965
      %v5967 = vpop.f32.mrf.mxu0
      %5968 = vdwg.mxu0
      %5969 = vmatpush.bf16.msra.mxu0 %v4601
      %5970 = vmatpush.bf16.msra.mxu0 %v4600
      %5971 = vmatpush.bf16.msra.mxu0 %v4599
      %5972 = vmatpush.bf16.msra.mxu0 %v4598
      %5973 = vmatpush.bf16.msra.mxu0 %v4597
      %5974 = vmatpush.bf16.msra.mxu0 %v4596
      %5975 = vmatpush.bf16.msra.mxu0 %v4595
      %5976 = vmatpush.bf16.msra.mxu0 %v4594
      %5977 = vmatmul.bf16.gmra.mxu0 %v541
      %v5978 = vpop.f32.mrf.mxu0
      %v5979 = vadd.f32 %v5966, %v5978
      %v5980 = vpop.f32.mrf.mxu0
      %5981 = vdwg.mxu0
      %5982 = vmatpush.bf16.msra.mxu0 %v4609
      %5983 = vmatpush.bf16.msra.mxu0 %v4608
      %5984 = vmatpush.bf16.msra.mxu0 %v4607
      %5985 = vmatpush.bf16.msra.mxu0 %v4606
      %5986 = vmatpush.bf16.msra.mxu0 %v4605
      %5987 = vmatpush.bf16.msra.mxu0 %v4604
      %5988 = vmatpush.bf16.msra.mxu0 %v4603
      %5989 = vmatpush.bf16.msra.mxu0 %v4602
      %5990 = vmatmul.bf16.gmra.mxu0 %v542
      %v5991 = vpop.f32.mrf.mxu0
      %v5992 = vadd.f32 %v5979, %v5991
      %v5993 = vpop.f32.mrf.mxu0
      %5994 = vdwg.mxu0
      %5995 = vmatpush.bf16.msra.mxu0 %v4617
      %5996 = vmatpush.bf16.msra.mxu0 %v4616
      %5997 = vmatpush.bf16.msra.mxu0 %v4615
      %5998 = vmatpush.bf16.msra.mxu0 %v4614
      %5999 = vmatpush.bf16.msra.mxu0 %v4613
      %6000 = vmatpush.bf16.msra.mxu0 %v4612
      %6001 = vmatpush.bf16.msra.mxu0 %v4611
      %6002 = vmatpush.bf16.msra.mxu0 %v4610
      %6003 = vmatmul.bf16.gmra.mxu0 %v543
      %v6004 = vpop.f32.mrf.mxu0
      %v6005 = vadd.f32 %v5992, %v6004
      %v6006 = vpop.f32.mrf.mxu0
      %6007 = vdwg.mxu0
      %6008 = vmatpush.bf16.msra.mxu0 %v4625
      %6009 = vmatpush.bf16.msra.mxu0 %v4624
      %6010 = vmatpush.bf16.msra.mxu0 %v4623
      %6011 = vmatpush.bf16.msra.mxu0 %v4622
      %6012 = vmatpush.bf16.msra.mxu0 %v4621
      %6013 = vmatpush.bf16.msra.mxu0 %v4620
      %6014 = vmatpush.bf16.msra.mxu0 %v4619
      %6015 = vmatpush.bf16.msra.mxu0 %v4618
      %6016 = vmatmul.bf16.gmra.mxu0 %v544
      %v6017 = vpop.f32.mrf.mxu0
      %v6018 = vadd.f32 %v6005, %v6017
      %v6019 = vpop.f32.mrf.mxu0
      %6020 = vdwg.mxu0
      %6021 = vmatpush.bf16.msra.mxu0 %v4633
      %6022 = vmatpush.bf16.msra.mxu0 %v4632
      %6023 = vmatpush.bf16.msra.mxu0 %v4631
      %6024 = vmatpush.bf16.msra.mxu0 %v4630
      %6025 = vmatpush.bf16.msra.mxu0 %v4629
      %6026 = vmatpush.bf16.msra.mxu0 %v4628
      %6027 = vmatpush.bf16.msra.mxu0 %v4627
      %6028 = vmatpush.bf16.msra.mxu0 %v4626
      %6029 = vmatmul.bf16.gmra.mxu0 %v545
      %v6030 = vpop.f32.mrf.mxu0
      %v6031 = vadd.f32 %v6018, %v6030
      %v6032 = vpop.f32.mrf.mxu0
      %6033 = vdwg.mxu0
      %6034 = vmatpush.bf16.msra.mxu0 %v4641
      %6035 = vmatpush.bf16.msra.mxu0 %v4640
      %6036 = vmatpush.bf16.msra.mxu0 %v4639
      %6037 = vmatpush.bf16.msra.mxu0 %v4638
      %6038 = vmatpush.bf16.msra.mxu0 %v4637
      %6039 = vmatpush.bf16.msra.mxu0 %v4636
      %6040 = vmatpush.bf16.msra.mxu0 %v4635
      %6041 = vmatpush.bf16.msra.mxu0 %v4634
      %6042 = vmatmul.bf16.gmra.mxu0 %v546
      %v6043 = vpop.f32.mrf.mxu0
      %v6044 = vadd.f32 %v6031, %v6043
      %v6045 = vpop.f32.mrf.mxu0
      %6046 = vdwg.mxu0
      %6047 = vmatpush.bf16.msra.mxu0 %v4649
      %6048 = vmatpush.bf16.msra.mxu0 %v4648
      %6049 = vmatpush.bf16.msra.mxu0 %v4647
      %6050 = vmatpush.bf16.msra.mxu0 %v4646
      %6051 = vmatpush.bf16.msra.mxu0 %v4645
      %6052 = vmatpush.bf16.msra.mxu0 %v4644
      %6053 = vmatpush.bf16.msra.mxu0 %v4643
      %6054 = vmatpush.bf16.msra.mxu0 %v4642
      %6055 = vmatmul.bf16.gmra.mxu0 %v547
      %v6056 = vpop.f32.mrf.mxu0
      %v6057 = vadd.f32 %v6044, %v6056
      %v6058 = vpop.f32.mrf.mxu0
      %6059 = vdwg.mxu0
      %6060 = vmatpush.bf16.msra.mxu0 %v4657
      %6061 = vmatpush.bf16.msra.mxu0 %v4656
      %6062 = vmatpush.bf16.msra.mxu0 %v4655
      %6063 = vmatpush.bf16.msra.mxu0 %v4654
      %6064 = vmatpush.bf16.msra.mxu0 %v4653
      %6065 = vmatpush.bf16.msra.mxu0 %v4652
      %6066 = vmatpush.bf16.msra.mxu0 %v4651
      %6067 = vmatpush.bf16.msra.mxu0 %v4650
      %6068 = vmatmul.bf16.gmra.mxu0 %v548
      %v6069 = vpop.f32.mrf.mxu0
      %v6070 = vadd.f32 %v6057, %v6069
      %v6071 = vpop.f32.mrf.mxu0
      %6072 = vdwg.mxu0
      %6073 = vmatpush.bf16.msra.mxu0 %v4665
      %6074 = vmatpush.bf16.msra.mxu0 %v4664
      %6075 = vmatpush.bf16.msra.mxu0 %v4663
      %6076 = vmatpush.bf16.msra.mxu0 %v4662
      %6077 = vmatpush.bf16.msra.mxu0 %v4661
      %6078 = vmatpush.bf16.msra.mxu0 %v4660
      %6079 = vmatpush.bf16.msra.mxu0 %v4659
      %6080 = vmatpush.bf16.msra.mxu0 %v4658
      %6081 = vmatmul.bf16.gmra.mxu0 %v549
      %v6082 = vpop.f32.mrf.mxu0
      %v6083 = vadd.f32 %v6070, %v6082
      %v6084 = vpop.f32.mrf.mxu0
      %6085 = vdwg.mxu0
      %6086 = vmatpush.bf16.msra.mxu0 %v4673
      %6087 = vmatpush.bf16.msra.mxu0 %v4672
      %6088 = vmatpush.bf16.msra.mxu0 %v4671
      %6089 = vmatpush.bf16.msra.mxu0 %v4670
      %6090 = vmatpush.bf16.msra.mxu0 %v4669
      %6091 = vmatpush.bf16.msra.mxu0 %v4668
      %6092 = vmatpush.bf16.msra.mxu0 %v4667
      %6093 = vmatpush.bf16.msra.mxu0 %v4666
      %6094 = vmatmul.bf16.gmra.mxu0 %v550
      %v6095 = vpop.f32.mrf.mxu0
      %v6096 = vadd.f32 %v6083, %v6095
      %v6097 = vpop.f32.mrf.mxu0
      %6098 = vdwg.mxu0
      %6099 = vmatpush.bf16.msra.mxu0 %v4681
      %6100 = vmatpush.bf16.msra.mxu0 %v4680
      %6101 = vmatpush.bf16.msra.mxu0 %v4679
      %6102 = vmatpush.bf16.msra.mxu0 %v4678
      %6103 = vmatpush.bf16.msra.mxu0 %v4677
      %6104 = vmatpush.bf16.msra.mxu0 %v4676
      %6105 = vmatpush.bf16.msra.mxu0 %v4675
      %6106 = vmatpush.bf16.msra.mxu0 %v4674
      %6107 = vmatmul.bf16.gmra.mxu0 %v551
      %v6108 = vpop.f32.mrf.mxu0
      %v6109 = vadd.f32 %v6096, %v6108
      %v6110 = vpop.f32.mrf.mxu0
      %6111 = vdwg.mxu0
      %6112 = vmatpush.bf16.msra.mxu0 %v4689
      %6113 = vmatpush.bf16.msra.mxu0 %v4688
      %6114 = vmatpush.bf16.msra.mxu0 %v4687
      %6115 = vmatpush.bf16.msra.mxu0 %v4686
      %6116 = vmatpush.bf16.msra.mxu0 %v4685
      %6117 = vmatpush.bf16.msra.mxu0 %v4684
      %6118 = vmatpush.bf16.msra.mxu0 %v4683
      %6119 = vmatpush.bf16.msra.mxu0 %v4682
      %6120 = vmatmul.bf16.gmra.mxu0 %v552
      %v6121 = vpop.f32.mrf.mxu0
      %v6122 = vadd.f32 %v6109, %v6121
      %v6123 = vpop.f32.mrf.mxu0
      %6124 = vdwg.mxu0
      %6125 = vmatpush.bf16.msra.mxu0 %v4697
      %6126 = vmatpush.bf16.msra.mxu0 %v4696
      %6127 = vmatpush.bf16.msra.mxu0 %v4695
      %6128 = vmatpush.bf16.msra.mxu0 %v4694
      %6129 = vmatpush.bf16.msra.mxu0 %v4693
      %6130 = vmatpush.bf16.msra.mxu0 %v4692
      %6131 = vmatpush.bf16.msra.mxu0 %v4691
      %6132 = vmatpush.bf16.msra.mxu0 %v4690
      %6133 = vmatmul.bf16.gmra.mxu0 %v553
      %v6134 = vpop.f32.mrf.mxu0
      %v6135 = vadd.f32 %v6122, %v6134
      %v6136 = vpop.f32.mrf.mxu0
      %6137 = vdwg.mxu0
      %6138 = vmatpush.bf16.msra.mxu0 %v4705
      %6139 = vmatpush.bf16.msra.mxu0 %v4704
      %6140 = vmatpush.bf16.msra.mxu0 %v4703
      %6141 = vmatpush.bf16.msra.mxu0 %v4702
      %6142 = vmatpush.bf16.msra.mxu0 %v4701
      %6143 = vmatpush.bf16.msra.mxu0 %v4700
      %6144 = vmatpush.bf16.msra.mxu0 %v4699
      %6145 = vmatpush.bf16.msra.mxu0 %v4698
      %6146 = vmatmul.bf16.gmra.mxu0 %v554
      %v6147 = vpop.f32.mrf.mxu0
      %v6148 = vadd.f32 %v6135, %v6147
      %v6149 = vpop.f32.mrf.mxu0
      %6150 = vdwg.mxu0
      %6151 = vmatpush.bf16.msra.mxu0 %v4713
      %6152 = vmatpush.bf16.msra.mxu0 %v4712
      %6153 = vmatpush.bf16.msra.mxu0 %v4711
      %6154 = vmatpush.bf16.msra.mxu0 %v4710
      %6155 = vmatpush.bf16.msra.mxu0 %v4709
      %6156 = vmatpush.bf16.msra.mxu0 %v4708
      %6157 = vmatpush.bf16.msra.mxu0 %v4707
      %6158 = vmatpush.bf16.msra.mxu0 %v4706
      %6159 = vmatmul.bf16.gmra.mxu0 %v555
      %v6160 = vpop.f32.mrf.mxu0
      %v6161 = vadd.f32 %v6148, %v6160
      %v6162 = vpop.f32.mrf.mxu0
      %6163 = vdwg.mxu0
      %6164 = vmatpush.bf16.msra.mxu0 %v4721
      %6165 = vmatpush.bf16.msra.mxu0 %v4720
      %6166 = vmatpush.bf16.msra.mxu0 %v4719
      %6167 = vmatpush.bf16.msra.mxu0 %v4718
      %6168 = vmatpush.bf16.msra.mxu0 %v4717
      %6169 = vmatpush.bf16.msra.mxu0 %v4716
      %6170 = vmatpush.bf16.msra.mxu0 %v4715
      %6171 = vmatpush.bf16.msra.mxu0 %v4714
      %6172 = vmatmul.bf16.gmra.mxu0 %v556
      %v6173 = vpop.f32.mrf.mxu0
      %v6174 = vadd.f32 %v6161, %v6173
      %v6175 = vpop.f32.mrf.mxu0
      %6176 = vdwg.mxu0
      %6177 = vmatpush.bf16.msra.mxu0 %v4729
      %6178 = vmatpush.bf16.msra.mxu0 %v4728
      %6179 = vmatpush.bf16.msra.mxu0 %v4727
      %6180 = vmatpush.bf16.msra.mxu0 %v4726
      %6181 = vmatpush.bf16.msra.mxu0 %v4725
      %6182 = vmatpush.bf16.msra.mxu0 %v4724
      %6183 = vmatpush.bf16.msra.mxu0 %v4723
      %6184 = vmatpush.bf16.msra.mxu0 %v4722
      %6185 = vmatmul.bf16.gmra.mxu0 %v557
      %v6186 = vpop.f32.mrf.mxu0
      %v6187 = vadd.f32 %v6174, %v6186
      %v6188 = vpop.f32.mrf.mxu0
      %6189 = vdwg.mxu0
      %6190 = vmatpush.bf16.msra.mxu0 %v4737
      %6191 = vmatpush.bf16.msra.mxu0 %v4736
      %6192 = vmatpush.bf16.msra.mxu0 %v4735
      %6193 = vmatpush.bf16.msra.mxu0 %v4734
      %6194 = vmatpush.bf16.msra.mxu0 %v4733
      %6195 = vmatpush.bf16.msra.mxu0 %v4732
      %6196 = vmatpush.bf16.msra.mxu0 %v4731
      %6197 = vmatpush.bf16.msra.mxu0 %v4730
      %6198 = vmatmul.bf16.gmra.mxu0 %v558
      %v6199 = vpop.f32.mrf.mxu0
      %v6200 = vadd.f32 %v6187, %v6199
      %v6201 = vpop.f32.mrf.mxu0
      %6202 = vdwg.mxu0
      %6203 = vmatpush.bf16.msra.mxu0 %v4745
      %6204 = vmatpush.bf16.msra.mxu0 %v4744
      %6205 = vmatpush.bf16.msra.mxu0 %v4743
      %6206 = vmatpush.bf16.msra.mxu0 %v4742
      %6207 = vmatpush.bf16.msra.mxu0 %v4741
      %6208 = vmatpush.bf16.msra.mxu0 %v4740
      %6209 = vmatpush.bf16.msra.mxu0 %v4739
      %6210 = vmatpush.bf16.msra.mxu0 %v4738
      %6211 = vmatmul.bf16.gmra.mxu0 %v559
      %v6212 = vpop.f32.mrf.mxu0
      %v6213 = vadd.f32 %v6200, %v6212
      %v6214 = vpop.f32.mrf.mxu0
      %6215 = vdwg.mxu0
      %6216 = vmatpush.bf16.msra.mxu0 %v4753
      %6217 = vmatpush.bf16.msra.mxu0 %v4752
      %6218 = vmatpush.bf16.msra.mxu0 %v4751
      %6219 = vmatpush.bf16.msra.mxu0 %v4750
      %6220 = vmatpush.bf16.msra.mxu0 %v4749
      %6221 = vmatpush.bf16.msra.mxu0 %v4748
      %6222 = vmatpush.bf16.msra.mxu0 %v4747
      %6223 = vmatpush.bf16.msra.mxu0 %v4746
      %6224 = vmatmul.bf16.gmra.mxu0 %v560
      %v6225 = vpop.f32.mrf.mxu0
      %v6226 = vadd.f32 %v6213, %v6225
      %v6227 = vpop.f32.mrf.mxu0
      %6228 = vdwg.mxu0
      %6229 = vmatpush.bf16.msra.mxu0 %v4761
      %6230 = vmatpush.bf16.msra.mxu0 %v4760
      %6231 = vmatpush.bf16.msra.mxu0 %v4759
      %6232 = vmatpush.bf16.msra.mxu0 %v4758
      %6233 = vmatpush.bf16.msra.mxu0 %v4757
      %6234 = vmatpush.bf16.msra.mxu0 %v4756
      %6235 = vmatpush.bf16.msra.mxu0 %v4755
      %6236 = vmatpush.bf16.msra.mxu0 %v4754
      %6237 = vmatmul.bf16.gmra.mxu0 %v561
      %v6238 = vpop.f32.mrf.mxu0
      %v6239 = vadd.f32 %v6226, %v6238
      %v6240 = vpop.f32.mrf.mxu0
      %6241 = vdwg.mxu0
      %6242 = vmatpush.bf16.msra.mxu0 %v4769
      %6243 = vmatpush.bf16.msra.mxu0 %v4768
      %6244 = vmatpush.bf16.msra.mxu0 %v4767
      %6245 = vmatpush.bf16.msra.mxu0 %v4766
      %6246 = vmatpush.bf16.msra.mxu0 %v4765
      %6247 = vmatpush.bf16.msra.mxu0 %v4764
      %6248 = vmatpush.bf16.msra.mxu0 %v4763
      %6249 = vmatpush.bf16.msra.mxu0 %v4762
      %6250 = vmatmul.bf16.gmra.mxu0 %v562
      %v6251 = vpop.f32.mrf.mxu0
      %v6252 = vadd.f32 %v6239, %v6251
      %v6253 = vpop.f32.mrf.mxu0
      %6254 = vdwg.mxu0
      %6255 = vmatpush.bf16.msra.mxu0 %v4777
      %6256 = vmatpush.bf16.msra.mxu0 %v4776
      %6257 = vmatpush.bf16.msra.mxu0 %v4775
      %6258 = vmatpush.bf16.msra.mxu0 %v4774
      %6259 = vmatpush.bf16.msra.mxu0 %v4773
      %6260 = vmatpush.bf16.msra.mxu0 %v4772
      %6261 = vmatpush.bf16.msra.mxu0 %v4771
      %6262 = vmatpush.bf16.msra.mxu0 %v4770
      %6263 = vmatmul.bf16.gmra.mxu0 %v563
      %v6264 = vpop.f32.mrf.mxu0
      %v6265 = vadd.f32 %v6252, %v6264
      %v6266 = vpop.f32.mrf.mxu0
      %6267 = vdwg.mxu0
      %6268 = vmatpush.bf16.msra.mxu0 %v4785
      %6269 = vmatpush.bf16.msra.mxu0 %v4784
      %6270 = vmatpush.bf16.msra.mxu0 %v4783
      %6271 = vmatpush.bf16.msra.mxu0 %v4782
      %6272 = vmatpush.bf16.msra.mxu0 %v4781
      %6273 = vmatpush.bf16.msra.mxu0 %v4780
      %6274 = vmatpush.bf16.msra.mxu0 %v4779
      %6275 = vmatpush.bf16.msra.mxu0 %v4778
      %6276 = vmatmul.bf16.gmra.mxu0 %v564
      %v6277 = vpop.f32.mrf.mxu0
      %v6278 = vadd.f32 %v6265, %v6277
      %v6279 = vpop.f32.mrf.mxu0
      %6280 = vdwg.mxu0
      %6281 = vmatpush.bf16.msra.mxu0 %v4793
      %6282 = vmatpush.bf16.msra.mxu0 %v4792
      %6283 = vmatpush.bf16.msra.mxu0 %v4791
      %6284 = vmatpush.bf16.msra.mxu0 %v4790
      %6285 = vmatpush.bf16.msra.mxu0 %v4789
      %6286 = vmatpush.bf16.msra.mxu0 %v4788
      %6287 = vmatpush.bf16.msra.mxu0 %v4787
      %6288 = vmatpush.bf16.msra.mxu0 %v4786
      %6289 = vmatmul.bf16.gmra.mxu0 %v565
      %v6290 = vpop.f32.mrf.mxu0
      %v6291 = vadd.f32 %v6278, %v6290
      %v6292 = vpop.f32.mrf.mxu0
      %6293 = vdwg.mxu0
      %6294 = vmatpush.bf16.msra.mxu0 %v4801
      %6295 = vmatpush.bf16.msra.mxu0 %v4800
      %6296 = vmatpush.bf16.msra.mxu0 %v4799
      %6297 = vmatpush.bf16.msra.mxu0 %v4798
      %6298 = vmatpush.bf16.msra.mxu0 %v4797
      %6299 = vmatpush.bf16.msra.mxu0 %v4796
      %6300 = vmatpush.bf16.msra.mxu0 %v4795
      %6301 = vmatpush.bf16.msra.mxu0 %v4794
      %6302 = vmatmul.bf16.gmra.mxu0 %v566
      %v6303 = vpop.f32.mrf.mxu0
      %v6304 = vadd.f32 %v6291, %v6303
      %v6305 = vpop.f32.mrf.mxu0
      %6306 = vdwg.mxu0
      %6307 = vmatpush.bf16.msra.mxu0 %v4809
      %6308 = vmatpush.bf16.msra.mxu0 %v4808
      %6309 = vmatpush.bf16.msra.mxu0 %v4807
      %6310 = vmatpush.bf16.msra.mxu0 %v4806
      %6311 = vmatpush.bf16.msra.mxu0 %v4805
      %6312 = vmatpush.bf16.msra.mxu0 %v4804
      %6313 = vmatpush.bf16.msra.mxu0 %v4803
      %6314 = vmatpush.bf16.msra.mxu0 %v4802
      %6315 = vmatmul.bf16.gmra.mxu0 %v567
      %v6316 = vpop.f32.mrf.mxu0
      %v6317 = vadd.f32 %v6304, %v6316
      %v6318 = vpop.f32.mrf.mxu0
      %6319 = vdwg.mxu0
      %6320 = vmatpush.bf16.msra.mxu0 %v4817
      %6321 = vmatpush.bf16.msra.mxu0 %v4816
      %6322 = vmatpush.bf16.msra.mxu0 %v4815
      %6323 = vmatpush.bf16.msra.mxu0 %v4814
      %6324 = vmatpush.bf16.msra.mxu0 %v4813
      %6325 = vmatpush.bf16.msra.mxu0 %v4812
      %6326 = vmatpush.bf16.msra.mxu0 %v4811
      %6327 = vmatpush.bf16.msra.mxu0 %v4810
      %6328 = vmatmul.bf16.gmra.mxu0 %v568
      %v6329 = vpop.f32.mrf.mxu0
      %v6330 = vadd.f32 %v6317, %v6329
      %v6331 = vpop.f32.mrf.mxu0
      %6332 = vdwg.mxu0
      %6333 = vmatpush.bf16.msra.mxu0 %v4825
      %6334 = vmatpush.bf16.msra.mxu0 %v4824
      %6335 = vmatpush.bf16.msra.mxu0 %v4823
      %6336 = vmatpush.bf16.msra.mxu0 %v4822
      %6337 = vmatpush.bf16.msra.mxu0 %v4821
      %6338 = vmatpush.bf16.msra.mxu0 %v4820
      %6339 = vmatpush.bf16.msra.mxu0 %v4819
      %6340 = vmatpush.bf16.msra.mxu0 %v4818
      %6341 = vmatmul.bf16.gmra.mxu0 %v569
      %v6342 = vpop.f32.mrf.mxu0
      %v6343 = vadd.f32 %v6330, %v6342
      %v6344 = vpop.f32.mrf.mxu0
      %6345 = vdwg.mxu0
      %6346 = vmatpush.bf16.msra.mxu0 %v4833
      %6347 = vmatpush.bf16.msra.mxu0 %v4832
      %6348 = vmatpush.bf16.msra.mxu0 %v4831
      %6349 = vmatpush.bf16.msra.mxu0 %v4830
      %6350 = vmatpush.bf16.msra.mxu0 %v4829
      %6351 = vmatpush.bf16.msra.mxu0 %v4828
      %6352 = vmatpush.bf16.msra.mxu0 %v4827
      %6353 = vmatpush.bf16.msra.mxu0 %v4826
      %6354 = vmatmul.bf16.gmra.mxu0 %v570
      %v6355 = vpop.f32.mrf.mxu0
      %v6356 = vadd.f32 %v6343, %v6355
      %v6357 = vpop.f32.mrf.mxu0
      %6358 = vdwg.mxu0
      %6359 = vmatpush.bf16.msra.mxu0 %v4841
      %6360 = vmatpush.bf16.msra.mxu0 %v4840
      %6361 = vmatpush.bf16.msra.mxu0 %v4839
      %6362 = vmatpush.bf16.msra.mxu0 %v4838
      %6363 = vmatpush.bf16.msra.mxu0 %v4837
      %6364 = vmatpush.bf16.msra.mxu0 %v4836
      %6365 = vmatpush.bf16.msra.mxu0 %v4835
      %6366 = vmatpush.bf16.msra.mxu0 %v4834
      %6367 = vmatmul.bf16.gmra.mxu0 %v571
      %v6368 = vpop.f32.mrf.mxu0
      %v6369 = vadd.f32 %v6356, %v6368
      %v6370 = vpop.f32.mrf.mxu0
      %6371 = vdwg.mxu0
      %6372 = vmatpush.bf16.msra.mxu0 %v4849
      %6373 = vmatpush.bf16.msra.mxu0 %v4848
      %6374 = vmatpush.bf16.msra.mxu0 %v4847
      %6375 = vmatpush.bf16.msra.mxu0 %v4846
      %6376 = vmatpush.bf16.msra.mxu0 %v4845
      %6377 = vmatpush.bf16.msra.mxu0 %v4844
      %6378 = vmatpush.bf16.msra.mxu0 %v4843
      %6379 = vmatpush.bf16.msra.mxu0 %v4842
      %6380 = vmatmul.bf16.gmra.mxu0 %v572
      %v6381 = vpop.f32.mrf.mxu0
      %v6382 = vadd.f32 %v6369, %v6381
      %v6383 = vpop.f32.mrf.mxu0
      %6384 = vdwg.mxu0
      %6385 = vmatpush.bf16.msra.mxu0 %v4857
      %6386 = vmatpush.bf16.msra.mxu0 %v4856
      %6387 = vmatpush.bf16.msra.mxu0 %v4855
      %6388 = vmatpush.bf16.msra.mxu0 %v4854
      %6389 = vmatpush.bf16.msra.mxu0 %v4853
      %6390 = vmatpush.bf16.msra.mxu0 %v4852
      %6391 = vmatpush.bf16.msra.mxu0 %v4851
      %6392 = vmatpush.bf16.msra.mxu0 %v4850
      %6393 = vmatmul.bf16.gmra.mxu0 %v573
      %v6394 = vpop.f32.mrf.mxu0
      %v6395 = vadd.f32 %v6382, %v6394
      %v6396 = vpop.f32.mrf.mxu0
      %6397 = vdwg.mxu0
      %6398 = vmatpush.bf16.msra.mxu0 %v4865
      %6399 = vmatpush.bf16.msra.mxu0 %v4864
      %6400 = vmatpush.bf16.msra.mxu0 %v4863
      %6401 = vmatpush.bf16.msra.mxu0 %v4862
      %6402 = vmatpush.bf16.msra.mxu0 %v4861
      %6403 = vmatpush.bf16.msra.mxu0 %v4860
      %6404 = vmatpush.bf16.msra.mxu0 %v4859
      %6405 = vmatpush.bf16.msra.mxu0 %v4858
      %6406 = vmatmul.bf16.gmra.mxu0 %v574
      %v6407 = vpop.f32.mrf.mxu0
      %v6408 = vadd.f32 %v6395, %v6407
      %v6409 = vpop.f32.mrf.mxu0
      %6410 = vdwg.mxu0
      %6411 = vmatpush.bf16.msra.mxu0 %v4873
      %6412 = vmatpush.bf16.msra.mxu0 %v4872
      %6413 = vmatpush.bf16.msra.mxu0 %v4871
      %6414 = vmatpush.bf16.msra.mxu0 %v4870
      %6415 = vmatpush.bf16.msra.mxu0 %v4869
      %6416 = vmatpush.bf16.msra.mxu0 %v4868
      %6417 = vmatpush.bf16.msra.mxu0 %v4867
      %6418 = vmatpush.bf16.msra.mxu0 %v4866
      %6419 = vmatmul.bf16.gmra.mxu0 %v575
      %v6420 = vpop.f32.mrf.mxu0
      %v6421 = vadd.f32 %v6408, %v6420
      %v6422 = vpop.f32.mrf.mxu0
      %6423 = vdwg.mxu0
      %6424 = vmatpush.bf16.msra.mxu0 %v4881
      %6425 = vmatpush.bf16.msra.mxu0 %v4880
      %6426 = vmatpush.bf16.msra.mxu0 %v4879
      %6427 = vmatpush.bf16.msra.mxu0 %v4878
      %6428 = vmatpush.bf16.msra.mxu0 %v4877
      %6429 = vmatpush.bf16.msra.mxu0 %v4876
      %6430 = vmatpush.bf16.msra.mxu0 %v4875
      %6431 = vmatpush.bf16.msra.mxu0 %v4874
      %6432 = vmatmul.bf16.gmra.mxu0 %v576
      %v6433 = vpop.f32.mrf.mxu0
      %v6434 = vadd.f32 %v6421, %v6433
      %v6435 = vpop.f32.mrf.mxu0
      %6436 = vdwg.mxu0
      %6437 = vmatpush.bf16.msra.mxu0 %v4889
      %6438 = vmatpush.bf16.msra.mxu0 %v4888
      %6439 = vmatpush.bf16.msra.mxu0 %v4887
      %6440 = vmatpush.bf16.msra.mxu0 %v4886
      %6441 = vmatpush.bf16.msra.mxu0 %v4885
      %6442 = vmatpush.bf16.msra.mxu0 %v4884
      %6443 = vmatpush.bf16.msra.mxu0 %v4883
      %6444 = vmatpush.bf16.msra.mxu0 %v4882
      %6445 = vmatmul.bf16.gmra.mxu0 %v577
      %v6446 = vpop.f32.mrf.mxu0
      %v6447 = vadd.f32 %v6434, %v6446
      %v6448 = vpop.f32.mrf.mxu0
      %6449 = vdwg.mxu0
      %6450 = vmatpush.bf16.msra.mxu0 %v4897
      %6451 = vmatpush.bf16.msra.mxu0 %v4896
      %6452 = vmatpush.bf16.msra.mxu0 %v4895
      %6453 = vmatpush.bf16.msra.mxu0 %v4894
      %6454 = vmatpush.bf16.msra.mxu0 %v4893
      %6455 = vmatpush.bf16.msra.mxu0 %v4892
      %6456 = vmatpush.bf16.msra.mxu0 %v4891
      %6457 = vmatpush.bf16.msra.mxu0 %v4890
      %6458 = vmatmul.bf16.gmra.mxu0 %v578
      %v6459 = vpop.f32.mrf.mxu0
      %v6460 = vadd.f32 %v6447, %v6459
      %v6461 = vpop.f32.mrf.mxu0
      %6462 = vdwg.mxu0
      %6463 = vmatpush.bf16.msra.mxu0 %v4905
      %6464 = vmatpush.bf16.msra.mxu0 %v4904
      %6465 = vmatpush.bf16.msra.mxu0 %v4903
      %6466 = vmatpush.bf16.msra.mxu0 %v4902
      %6467 = vmatpush.bf16.msra.mxu0 %v4901
      %6468 = vmatpush.bf16.msra.mxu0 %v4900
      %6469 = vmatpush.bf16.msra.mxu0 %v4899
      %6470 = vmatpush.bf16.msra.mxu0 %v4898
      %6471 = vmatmul.bf16.gmra.mxu0 %v579
      %v6472 = vpop.f32.mrf.mxu0
      %v6473 = vadd.f32 %v6460, %v6472
      %v6474 = vpop.f32.mrf.mxu0
      %6475 = vdwg.mxu0
      %6476 = vmatpush.bf16.msra.mxu0 %v4913
      %6477 = vmatpush.bf16.msra.mxu0 %v4912
      %6478 = vmatpush.bf16.msra.mxu0 %v4911
      %6479 = vmatpush.bf16.msra.mxu0 %v4910
      %6480 = vmatpush.bf16.msra.mxu0 %v4909
      %6481 = vmatpush.bf16.msra.mxu0 %v4908
      %6482 = vmatpush.bf16.msra.mxu0 %v4907
      %6483 = vmatpush.bf16.msra.mxu0 %v4906
      %6484 = vmatmul.bf16.gmra.mxu0 %v580
      %v6485 = vpop.f32.mrf.mxu0
      %v6486 = vadd.f32 %v6473, %v6485
      %v6487 = vpop.f32.mrf.mxu0
      %6488 = vdwg.mxu0
      %6489 = vmatpush.bf16.msra.mxu0 %v4921
      %6490 = vmatpush.bf16.msra.mxu0 %v4920
      %6491 = vmatpush.bf16.msra.mxu0 %v4919
      %6492 = vmatpush.bf16.msra.mxu0 %v4918
      %6493 = vmatpush.bf16.msra.mxu0 %v4917
      %6494 = vmatpush.bf16.msra.mxu0 %v4916
      %6495 = vmatpush.bf16.msra.mxu0 %v4915
      %6496 = vmatpush.bf16.msra.mxu0 %v4914
      %6497 = vmatmul.bf16.gmra.mxu0 %v581
      %v6498 = vpop.f32.mrf.mxu0
      %v6499 = vadd.f32 %v6486, %v6498
      %v6500 = vpop.f32.mrf.mxu0
      %6501 = vdwg.mxu0
      %6502 = vmatpush.bf16.msra.mxu0 %v4929
      %6503 = vmatpush.bf16.msra.mxu0 %v4928
      %6504 = vmatpush.bf16.msra.mxu0 %v4927
      %6505 = vmatpush.bf16.msra.mxu0 %v4926
      %6506 = vmatpush.bf16.msra.mxu0 %v4925
      %6507 = vmatpush.bf16.msra.mxu0 %v4924
      %6508 = vmatpush.bf16.msra.mxu0 %v4923
      %6509 = vmatpush.bf16.msra.mxu0 %v4922
      %6510 = vmatmul.bf16.gmra.mxu0 %v582
      %v6511 = vpop.f32.mrf.mxu0
      %v6512 = vadd.f32 %v6499, %v6511
      %v6513 = vpop.f32.mrf.mxu0
      %6514 = vdwg.mxu0
      %6515 = vmatpush.bf16.msra.mxu0 %v4937
      %6516 = vmatpush.bf16.msra.mxu0 %v4936
      %6517 = vmatpush.bf16.msra.mxu0 %v4935
      %6518 = vmatpush.bf16.msra.mxu0 %v4934
      %6519 = vmatpush.bf16.msra.mxu0 %v4933
      %6520 = vmatpush.bf16.msra.mxu0 %v4932
      %6521 = vmatpush.bf16.msra.mxu0 %v4931
      %6522 = vmatpush.bf16.msra.mxu0 %v4930
      %6523 = vmatmul.bf16.gmra.mxu0 %v583
      %v6524 = vpop.f32.mrf.mxu0
      %v6525 = vadd.f32 %v6512, %v6524
      %v6526 = vpop.f32.mrf.mxu0
      %6527 = vdwg.mxu0
      %6528 = vmatpush.bf16.msra.mxu0 %v4945
      %6529 = vmatpush.bf16.msra.mxu0 %v4944
      %6530 = vmatpush.bf16.msra.mxu0 %v4943
      %6531 = vmatpush.bf16.msra.mxu0 %v4942
      %6532 = vmatpush.bf16.msra.mxu0 %v4941
      %6533 = vmatpush.bf16.msra.mxu0 %v4940
      %6534 = vmatpush.bf16.msra.mxu0 %v4939
      %6535 = vmatpush.bf16.msra.mxu0 %v4938
      %6536 = vmatmul.bf16.gmra.mxu0 %v584
      %v6537 = vpop.f32.mrf.mxu0
      %v6538 = vadd.f32 %v6525, %v6537
      %v6539 = vpop.f32.mrf.mxu0
      %6540 = vdwg.mxu0
      %6541 = vmatpush.bf16.msra.mxu0 %v4953
      %6542 = vmatpush.bf16.msra.mxu0 %v4952
      %6543 = vmatpush.bf16.msra.mxu0 %v4951
      %6544 = vmatpush.bf16.msra.mxu0 %v4950
      %6545 = vmatpush.bf16.msra.mxu0 %v4949
      %6546 = vmatpush.bf16.msra.mxu0 %v4948
      %6547 = vmatpush.bf16.msra.mxu0 %v4947
      %6548 = vmatpush.bf16.msra.mxu0 %v4946
      %6549 = vmatmul.bf16.gmra.mxu0 %v585
      %v6550 = vpop.f32.mrf.mxu0
      %v6551 = vadd.f32 %v6538, %v6550
      %v6552 = vpop.f32.mrf.mxu0
      %6553 = vdwg.mxu0
      %6554 = vmatpush.bf16.msra.mxu0 %v4961
      %6555 = vmatpush.bf16.msra.mxu0 %v4960
      %6556 = vmatpush.bf16.msra.mxu0 %v4959
      %6557 = vmatpush.bf16.msra.mxu0 %v4958
      %6558 = vmatpush.bf16.msra.mxu0 %v4957
      %6559 = vmatpush.bf16.msra.mxu0 %v4956
      %6560 = vmatpush.bf16.msra.mxu0 %v4955
      %6561 = vmatpush.bf16.msra.mxu0 %v4954
      %6562 = vmatmul.bf16.gmra.mxu0 %v586
      %v6563 = vpop.f32.mrf.mxu0
      %v6564 = vadd.f32 %v6551, %v6563
      %v6565 = vpop.f32.mrf.mxu0
      %6566 = vdwg.mxu0
      %6567 = vmatpush.bf16.msra.mxu0 %v4969
      %6568 = vmatpush.bf16.msra.mxu0 %v4968
      %6569 = vmatpush.bf16.msra.mxu0 %v4967
      %6570 = vmatpush.bf16.msra.mxu0 %v4966
      %6571 = vmatpush.bf16.msra.mxu0 %v4965
      %6572 = vmatpush.bf16.msra.mxu0 %v4964
      %6573 = vmatpush.bf16.msra.mxu0 %v4963
      %6574 = vmatpush.bf16.msra.mxu0 %v4962
      %6575 = vmatmul.bf16.gmra.mxu0 %v587
      %v6576 = vpop.f32.mrf.mxu0
      %v6577 = vadd.f32 %v6564, %v6576
      %v6578 = vpop.f32.mrf.mxu0
      %6579 = vdwg.mxu0
      %6580 = vmatpush.bf16.msra.mxu0 %v4977
      %6581 = vmatpush.bf16.msra.mxu0 %v4976
      %6582 = vmatpush.bf16.msra.mxu0 %v4975
      %6583 = vmatpush.bf16.msra.mxu0 %v4974
      %6584 = vmatpush.bf16.msra.mxu0 %v4973
      %6585 = vmatpush.bf16.msra.mxu0 %v4972
      %6586 = vmatpush.bf16.msra.mxu0 %v4971
      %6587 = vmatpush.bf16.msra.mxu0 %v4970
      %6588 = vmatmul.bf16.gmra.mxu0 %v588
      %v6589 = vpop.f32.mrf.mxu0
      %v6590 = vadd.f32 %v6577, %v6589
      %v6591 = vpop.f32.mrf.mxu0
      %6592 = vdwg.mxu0
      %6593 = vmatpush.bf16.msra.mxu0 %v4985
      %6594 = vmatpush.bf16.msra.mxu0 %v4984
      %6595 = vmatpush.bf16.msra.mxu0 %v4983
      %6596 = vmatpush.bf16.msra.mxu0 %v4982
      %6597 = vmatpush.bf16.msra.mxu0 %v4981
      %6598 = vmatpush.bf16.msra.mxu0 %v4980
      %6599 = vmatpush.bf16.msra.mxu0 %v4979
      %6600 = vmatpush.bf16.msra.mxu0 %v4978
      %6601 = vmatmul.bf16.gmra.mxu0 %v589
      %v6602 = vpop.f32.mrf.mxu0
      %v6603 = vadd.f32 %v6590, %v6602
      %v6604 = vpop.f32.mrf.mxu0
      %6605 = vdwg.mxu0
      %6606 = vmatpush.bf16.msra.mxu0 %v4993
      %6607 = vmatpush.bf16.msra.mxu0 %v4992
      %6608 = vmatpush.bf16.msra.mxu0 %v4991
      %6609 = vmatpush.bf16.msra.mxu0 %v4990
      %6610 = vmatpush.bf16.msra.mxu0 %v4989
      %6611 = vmatpush.bf16.msra.mxu0 %v4988
      %6612 = vmatpush.bf16.msra.mxu0 %v4987
      %6613 = vmatpush.bf16.msra.mxu0 %v4986
      %6614 = vmatmul.bf16.gmra.mxu0 %v590
      %v6615 = vpop.f32.mrf.mxu0
      %v6616 = vadd.f32 %v6603, %v6615
      %v6617 = vpop.f32.mrf.mxu0
      %6618 = vdwg.mxu0
      %6619 = vmatpush.bf16.msra.mxu0 %v5001
      %6620 = vmatpush.bf16.msra.mxu0 %v5000
      %6621 = vmatpush.bf16.msra.mxu0 %v4999
      %6622 = vmatpush.bf16.msra.mxu0 %v4998
      %6623 = vmatpush.bf16.msra.mxu0 %v4997
      %6624 = vmatpush.bf16.msra.mxu0 %v4996
      %6625 = vmatpush.bf16.msra.mxu0 %v4995
      %6626 = vmatpush.bf16.msra.mxu0 %v4994
      %6627 = vmatmul.bf16.gmra.mxu0 %v591
      %v6628 = vpop.f32.mrf.mxu0
      %v6629 = vadd.f32 %v6616, %v6628
      %v6630 = vpop.f32.mrf.mxu0
      %6631 = vdwg.mxu0
      %6632 = vmatpush.bf16.msra.mxu0 %v5009
      %6633 = vmatpush.bf16.msra.mxu0 %v5008
      %6634 = vmatpush.bf16.msra.mxu0 %v5007
      %6635 = vmatpush.bf16.msra.mxu0 %v5006
      %6636 = vmatpush.bf16.msra.mxu0 %v5005
      %6637 = vmatpush.bf16.msra.mxu0 %v5004
      %6638 = vmatpush.bf16.msra.mxu0 %v5003
      %6639 = vmatpush.bf16.msra.mxu0 %v5002
      %6640 = vmatmul.bf16.gmra.mxu0 %v592
      %v6641 = vpop.f32.mrf.mxu0
      %v6642 = vadd.f32 %v6629, %v6641
      %v6643 = vpop.f32.mrf.mxu0
      %6644 = vdwg.mxu0
      %6645 = vmatpush.bf16.msra.mxu0 %v5017
      %6646 = vmatpush.bf16.msra.mxu0 %v5016
      %6647 = vmatpush.bf16.msra.mxu0 %v5015
      %6648 = vmatpush.bf16.msra.mxu0 %v5014
      %6649 = vmatpush.bf16.msra.mxu0 %v5013
      %6650 = vmatpush.bf16.msra.mxu0 %v5012
      %6651 = vmatpush.bf16.msra.mxu0 %v5011
      %6652 = vmatpush.bf16.msra.mxu0 %v5010
      %6653 = vmatmul.bf16.gmra.mxu0 %v593
      %v6654 = vpop.f32.mrf.mxu0
      %v6655 = vadd.f32 %v6642, %v6654
      %v6656 = vpop.f32.mrf.mxu0
      %6657 = vdwg.mxu0
      %6658 = vmatpush.bf16.msra.mxu0 %v5025
      %6659 = vmatpush.bf16.msra.mxu0 %v5024
      %6660 = vmatpush.bf16.msra.mxu0 %v5023
      %6661 = vmatpush.bf16.msra.mxu0 %v5022
      %6662 = vmatpush.bf16.msra.mxu0 %v5021
      %6663 = vmatpush.bf16.msra.mxu0 %v5020
      %6664 = vmatpush.bf16.msra.mxu0 %v5019
      %6665 = vmatpush.bf16.msra.mxu0 %v5018
      %6666 = vmatmul.bf16.gmra.mxu0 %v594
      %v6667 = vpop.f32.mrf.mxu0
      %v6668 = vadd.f32 %v6655, %v6667
      %v6669 = vpop.f32.mrf.mxu0
      %6670 = vdwg.mxu0
      %6671 = vmatpush.bf16.msra.mxu0 %v5033
      %6672 = vmatpush.bf16.msra.mxu0 %v5032
      %6673 = vmatpush.bf16.msra.mxu0 %v5031
      %6674 = vmatpush.bf16.msra.mxu0 %v5030
      %6675 = vmatpush.bf16.msra.mxu0 %v5029
      %6676 = vmatpush.bf16.msra.mxu0 %v5028
      %6677 = vmatpush.bf16.msra.mxu0 %v5027
      %6678 = vmatpush.bf16.msra.mxu0 %v5026
      %6679 = vmatmul.bf16.gmra.mxu0 %v595
      %v6680 = vpop.f32.mrf.mxu0
      %v6681 = vadd.f32 %v6668, %v6680
      %v6682 = vpop.f32.mrf.mxu0
      %6683 = vdwg.mxu0
      %6684 = vmatpush.bf16.msra.mxu0 %v5041
      %6685 = vmatpush.bf16.msra.mxu0 %v5040
      %6686 = vmatpush.bf16.msra.mxu0 %v5039
      %6687 = vmatpush.bf16.msra.mxu0 %v5038
      %6688 = vmatpush.bf16.msra.mxu0 %v5037
      %6689 = vmatpush.bf16.msra.mxu0 %v5036
      %6690 = vmatpush.bf16.msra.mxu0 %v5035
      %6691 = vmatpush.bf16.msra.mxu0 %v5034
      %6692 = vmatmul.bf16.gmra.mxu0 %v596
      %v6693 = vpop.f32.mrf.mxu0
      %v6694 = vadd.f32 %v6681, %v6693
      %v6695 = vpop.f32.mrf.mxu0
      %6696 = vdwg.mxu0
      %6697 = vmatpush.bf16.msra.mxu0 %v5049
      %6698 = vmatpush.bf16.msra.mxu0 %v5048
      %6699 = vmatpush.bf16.msra.mxu0 %v5047
      %6700 = vmatpush.bf16.msra.mxu0 %v5046
      %6701 = vmatpush.bf16.msra.mxu0 %v5045
      %6702 = vmatpush.bf16.msra.mxu0 %v5044
      %6703 = vmatpush.bf16.msra.mxu0 %v5043
      %6704 = vmatpush.bf16.msra.mxu0 %v5042
      %6705 = vmatmul.bf16.gmra.mxu0 %v597
      %v6706 = vpop.f32.mrf.mxu0
      %v6707 = vadd.f32 %v6694, %v6706
      %v6708 = vpop.f32.mrf.mxu0
      %6709 = vdwg.mxu0
      %6710 = vmatpush.bf16.msra.mxu0 %v5057
      %6711 = vmatpush.bf16.msra.mxu0 %v5056
      %6712 = vmatpush.bf16.msra.mxu0 %v5055
      %6713 = vmatpush.bf16.msra.mxu0 %v5054
      %6714 = vmatpush.bf16.msra.mxu0 %v5053
      %6715 = vmatpush.bf16.msra.mxu0 %v5052
      %6716 = vmatpush.bf16.msra.mxu0 %v5051
      %6717 = vmatpush.bf16.msra.mxu0 %v5050
      %6718 = vmatmul.bf16.gmra.mxu0 %v598
      %v6719 = vpop.f32.mrf.mxu0
      %v6720 = vadd.f32 %v6707, %v6719
      %v6721 = vpop.f32.mrf.mxu0
      %6722 = vdwg.mxu0
      %6723 = vmatpush.bf16.msra.mxu0 %v5065
      %6724 = vmatpush.bf16.msra.mxu0 %v5064
      %6725 = vmatpush.bf16.msra.mxu0 %v5063
      %6726 = vmatpush.bf16.msra.mxu0 %v5062
      %6727 = vmatpush.bf16.msra.mxu0 %v5061
      %6728 = vmatpush.bf16.msra.mxu0 %v5060
      %6729 = vmatpush.bf16.msra.mxu0 %v5059
      %6730 = vmatpush.bf16.msra.mxu0 %v5058
      %6731 = vmatmul.bf16.gmra.mxu0 %v599
      %v6732 = vpop.f32.mrf.mxu0
      %v6733 = vadd.f32 %v6720, %v6732
      %v6734 = vpop.f32.mrf.mxu0
      %6735 = vdwg.mxu0
      %6736 = vmatpush.bf16.msra.mxu0 %v5073
      %6737 = vmatpush.bf16.msra.mxu0 %v5072
      %6738 = vmatpush.bf16.msra.mxu0 %v5071
      %6739 = vmatpush.bf16.msra.mxu0 %v5070
      %6740 = vmatpush.bf16.msra.mxu0 %v5069
      %6741 = vmatpush.bf16.msra.mxu0 %v5068
      %6742 = vmatpush.bf16.msra.mxu0 %v5067
      %6743 = vmatpush.bf16.msra.mxu0 %v5066
      %6744 = vmatmul.bf16.gmra.mxu0 %v600
      %v6745 = vpop.f32.mrf.mxu0
      %v6746 = vadd.f32 %v6733, %v6745
      %v6747 = vpop.f32.mrf.mxu0
      %6748 = vdwg.mxu0
      %6749 = vmatpush.bf16.msra.mxu0 %v5081
      %6750 = vmatpush.bf16.msra.mxu0 %v5080
      %6751 = vmatpush.bf16.msra.mxu0 %v5079
      %6752 = vmatpush.bf16.msra.mxu0 %v5078
      %6753 = vmatpush.bf16.msra.mxu0 %v5077
      %6754 = vmatpush.bf16.msra.mxu0 %v5076
      %6755 = vmatpush.bf16.msra.mxu0 %v5075
      %6756 = vmatpush.bf16.msra.mxu0 %v5074
      %6757 = vmatmul.bf16.gmra.mxu0 %v601
      %v6758 = vpop.f32.mrf.mxu0
      %v6759 = vadd.f32 %v6746, %v6758
      %v6760 = vpop.f32.mrf.mxu0
      %6761 = vdwg.mxu0
      %v6762 = vadd.f32 %v300, %v6759
      %vm6763 = vcmask 517120
      %6764 = vst.msk [vmem:[#allocation2] sm:$0x3] %vm6763, %v6762
      %p6765 = scmp.eq.s32.totalorder %s20, 1
      // Predicated region
      $region53: #{tpu_custom_call.1} parent=47 // pred_check
        %p6766 = pneg %p6765
      $region54: #{tpu_custom_call.1} parent=47 // pred_check_branch
        %6768 = sbr.rel (%p6766) target = $region56
      $region55: #{tpu_custom_call.1} parent=47 // pred_region
        %v6769 = vld [vmem:[#allocation2] sm:$0x3]
        %v6770 = vmax.f32 %v6769, 0.0
        %v6771 = vld [vmem:[%s3] sm:$0xff]
        %v6772 = vld [vmem:[%s3 + $0x8] sm:$0xff]
        %v6773 = vld [vmem:[%s3 + $0x10] sm:$0xff]
        %v6774 = vld [vmem:[%s3 + $0x18] sm:$0xff]
        %v6775 = vld [vmem:[%s3 + $0x20] sm:$0xff]
        %v6776 = vld [vmem:[%s3 + $0x28] sm:$0xff]
        %v6777 = vld [vmem:[%s3 + $0x30] sm:$0xff]
        %v6778 = vld [vmem:[%s3 + $0x38] sm:$0xff]
        %v6779 = vld [vmem:[%s4] sm:$0x1]
        %v6781 = vperm.slane %v6779, 0
        %vm6783 = vcmask 523264
        %v6785 = vsel %vm6783, %v6770, 0
        %6787 = vmatpush.msra.mxu0 0.0
        %6788 = vmatpush.msra.mxu0 0.0
        %6789 = vmatpush.msra.mxu0 0.0
        %6790 = vmatpush.msra.mxu0 0.0
        %6791 = vmatpush.msra.mxu0 0.0
        %6792 = vmatpush.msra.mxu0 0.0
        %6793 = vmatpush.msra.mxu0 0.0
        %6794 = vmatpush.msra.mxu0 0.0
        %6795 = vmatpush.msra.mxu0 %v6778
        %6796 = vmatpush.msra.mxu0 %v6777
        %6797 = vmatpush.msra.mxu0 %v6776
        %6798 = vmatpush.msra.mxu0 %v6775
        %6799 = vmatpush.msra.mxu0 %v6774
        %6800 = vmatpush.msra.mxu0 %v6773
        %6801 = vmatpush.msra.mxu0 %v6772
        %6802 = vmatpush.msra.mxu0 %v6771
        %6803 = vmatmul.f32.gmra.mxu0 %v6785
        %v6804 = vpop.f32.mrf.mxu0
        %v6805 = vadd.f32 %v6781, %v6804
        %6806 = vdwg.mxu0
        %v6807 = vmax.f32 %v6805, 0.0
        %v6808 = vld [vmem:[%s5] sm:$0xff]
        %v6809 = vld [vmem:[%s5 + $0x8] sm:$0xff]
        %v6810 = vld [vmem:[%s5 + $0x10] sm:$0xff]
        %v6811 = vld [vmem:[%s5 + $0x18] sm:$0xff]
        %v6812 = vld [vmem:[#allocation3] sm:$0x1]
        %v6814 = vperm.slane %v6812, 0
        %vm6816 = vcmask 261120
        %v6818 = vsel %vm6816, %v6807, 0
        %6820 = vmatpush.msra.mxu0 0.0
        %6821 = vmatpush.msra.mxu0 0.0
        %6822 = vmatpush.msra.mxu0 0.0
        %6823 = vmatpush.msra.mxu0 0.0
        %6824 = vmatpush.msra.mxu0 0.0
        %6825 = vmatpush.msra.mxu0 0.0
        %6826 = vmatpush.msra.mxu0 0.0
        %6827 = vmatpush.msra.mxu0 0.0
        %6828 = vmatpush.msra.mxu0 0.0
        %6829 = vmatpush.msra.mxu0 0.0
        %6830 = vmatpush.msra.mxu0 0.0
        %6831 = vmatpush.msra.mxu0 0.0
        %6832 = vmatpush.msra.mxu0 %v6811
        %6833 = vmatpush.msra.mxu0 %v6810
        %6834 = vmatpush.msra.mxu0 %v6809
        %6835 = vmatpush.msra.mxu0 %v6808
        %6836 = vmatmul.f32.gmra.mxu0 %v6818
        %v6837 = vpop.f32.mrf.mxu0
        %v6838 = vadd.f32 %v6814, %v6837
        %6839 = vdwg.mxu0
        %vm6840 = vcmask 1024
        %6841 = vst.msk [vmem:[%s7] sm:$0x3] %vm6840, %v6838
      $region56: #{tpu_custom_call.1} parent=47 // pred_fallthru
        _
      // Predicated region
      $region57: #{tpu_custom_call.1} parent=47 // pred_check
        %p6842 = pneg %p190
      $region58: #{tpu_custom_call.1} parent=47 // pred_check_branch
        %6844 = sbr.rel (%p6842) target = $region60
      $region59: #{tpu_custom_call.1} parent=47 // pred_region
        _
      $region60: #{tpu_custom_call.1} parent=47 // pred_fallthru
        _
      // Predicated region
      $region61: #{tpu_custom_call.1} parent=47 // pred_check
        %p6845 = pneg %p190
      $region62: #{tpu_custom_call.1} parent=47 // pred_check_branch
        %6847 = sbr.rel (%p6845) target = $region64
      $region63: #{tpu_custom_call.1} parent=47 // pred_region
        _
      $region64: #{tpu_custom_call.1} parent=47 // pred_fallthru
        _
    $region48: #{tpu_custom_call.1} parent=5 // pred_fallthru
      _
    %p6848 = scmp.le.s32.totalorder 2, %s15
    // Predicated region
    $region65: #{tpu_custom_call.1} parent=5 // pred_check
      %p6849 = pneg %p6848
    $region66: #{tpu_custom_call.1} parent=5 // pred_check_branch
      %6851 = sbr.rel (%p6849) target = $region68
    $region67: #{tpu_custom_call.1} parent=5 // pred_region
      %s6852 = ssub.s32 %s15, 2
    $region68: #{tpu_custom_call.1} parent=5 // pred_fallthru
      _
  $region6: #{tpu_custom_call.1} parent=0 // loop_footer
    %s19 = sadd.s32 1, %s15
  $region7: #{tpu_custom_call.1} parent=0 // loop_footer_branch
    %14 = sbr.rel target = $region3
  $region8: #{tpu_custom_call.1} parent=0 // loop_exit
    _

</llo_original>
